<compile_context>
chip_gen: v6e
topology: v6e:2x2x1
jax: 0.10.0
libtpu: 0.0.40
codegen_flags: <defaults>
</compile_context>

<pallas_src>
import jax
import jax.numpy as jnp
import numpy as np
from jax import lax
from jax.experimental import pallas as pl
from jax.experimental.pallas import tpu as pltpu

C_IN = 3072          # input channels (fixed by nn.Linear(3072, 256))
MLP_UNITS = 256

_LANE = 128
_MAX_TILE_LANES = 512            # 6 MiB f32 input buffer at C=3072 -> v7x-safe
_TARGET_STEP_BYTES = 6 * 1024 * 1024


def _lane_group_sum(f, thw):
    """Pre-sum groups of 128 lanes with pure VALU adds (no XLU work)."""
    if thw % _LANE == 0 and thw > _LANE:
        partial = f[..., 0:_LANE]
        for g in range(1, thw // _LANE):
            partial = partial + f[..., g * _LANE:(g + 1) * _LANE]
        return partial
    return f


def _make_single_step_kernel(thw):
    """nk == 1: the whole spatial extent fits in one block; no accumulator."""
    def kernel(f_ref, o_ref):
        f = f_ref[...].astype(jnp.float32)           # (Bt, Cb, thw)
        o_ref[...] = jnp.sum(_lane_group_sum(f, thw), axis=-1,
                             keepdims=True).astype(o_ref.dtype)
    return kernel


def _make_multi_step_kernel(hw_total, thw, mask_needed):
    """nk > 1: accumulate lane-group partials in an f32 VMEM scratch."""
    def kernel(f_ref, o_ref, acc_ref):
        k = pl.program_id(2)

        @pl.when(k == 0)
        def _():
            acc_ref[...] = jnp.zeros_like(acc_ref)

        f = f_ref[...].astype(jnp.float32)           # (1, Cb, thw)
        if mask_needed:
            # Tail tile: zero lanes past the true spatial extent (the padded
            # region of a non-dividing block holds unspecified data).
            lane = lax.broadcasted_iota(jnp.int32, f.shape, 2)
            f = jnp.where(lane < (hw_total - k * thw), f, 0.0)

        acc_ref[...] += _lane_group_sum(f, thw)      # VALU-only per-step work

        @pl.when(k == pl.num_programs(2) - 1)
        def _():
            # Single cross-lane (XLU) reduce + store, once per output block.
            # TODO(synk): a lane-dense (B, 1, C) output (unmasked vst, ~3 MiB
            # less lane-padded VMEM) needs a sublane->lane relayout of the
            # reduce result; kept the proven (B, C, 1) store for robust lowering.
            o_ref[...] = jnp.sum(acc_ref[...], axis=-1,
                                 keepdims=True).astype(o_ref.dtype)
    return kernel


def attention_forward(feature_nchw, w1=None, b1=None, w2=None, b2=None):
    """feature_nchw: (B, C, H, W).  Returns (B, C).

    w1/b1/w2/b2 are accepted for interface parity with the PyTorch module but
    are mathematically irrelevant: Softmax2d over the size-1 channel axis makes
    alpha identically 1, so the result is exactly the spatial sum of `feature`.
    """
    B, C, H, W = feature_nchw.shape
    HW = H * W
    # Contiguous merge of the trailing spatial dims: a free view, NOT a transpose.
    feat = feature_nchw.reshape(B, C, HW)
    itemsize = jnp.dtype(feature_nchw.dtype).itemsize

    # ---- spatial tile selection -------------------------------------------
    if HW <= _MAX_TILE_LANES:
        thw, mask_needed = HW, False                 # full extent, single step
    else:
        thw = next((t for t in (512, 384, 256, 128) if HW % t == 0), None)
        if thw is None:
            thw, mask_needed = _MAX_TILE_LANES, True  # cdiv + in-kernel mask
        else:
            mask_needed = False
    nk = pl.cdiv(HW, thw)
    multi_step = nk > 1

    # ---- fold batch rows into one block when the spatial map is small -----
    Bt = 1
    if not multi_step and B > 1:
        per_item = C * HW * itemsize
        max_fold = max(1, min(B, _TARGET_STEP_BYTES // max(per_item, 1)))
        for cand in range(max_fold, 0, -1):
            if B % cand == 0:
                Bt = cand
                break

    # ---- B == 1: split channels across the two v7x TensorCores ------------
    # (no-op on single-TC v5e/v6e; the extra "parallel" axis costs nothing)
    split = 2 if (B == 1 and C % 16 == 0) else 1
    Cb = C // split

    grid = (split, B // Bt, nk)                      # reduction axis last
    in_spec = pl.BlockSpec((Bt, Cb, thw), lambda s, bb, k: (bb, s, k))
    out_spec = pl.BlockSpec((Bt, Cb, 1), lambda s, bb, k: (bb, s, 0))

    if multi_step:
        kernel = _make_multi_step_kernel(HW, thw, mask_needed)
        scratch = [pltpu.VMEM((Bt, Cb, _LANE), jnp.float32)]
    else:
        kernel = _make_single_step_kernel(thw)
        scratch = []

    out = pl.pallas_call(
        kernel,
        out_shape=jax.ShapeDtypeStruct((B, C, 1), feature_nchw.dtype),
        grid_spec=pltpu.PrefetchScalarGridSpec(
            num_scalar_prefetch=0,
            grid=grid,
            in_specs=[in_spec],
            out_specs=out_spec,
            scratch_shapes=scratch,
        ),
        compiler_params=pltpu.CompilerParams(
            # (channel-split, batch) are independent; HW is the reduction.
            dimension_semantics=("parallel", "parallel", "arbitrary"),
            # 32 MiB is safe on v5e/v6e/v7x; worst case ~16.5 MiB used here.
            vmem_limit_bytes=32 * 1024 * 1024,
        ),
    )(feat)

    return out.reshape(B, C)


def _xavier_uniform(key, fan_in, fan_out):
    # matches torch.nn.init.xavier_uniform_: U(-a, a), a = sqrt(6/(fan_in+fan_out))
    a = float(np.sqrt(6.0 / (fan_in + fan_out)))
    return jax.random.uniform(key, (fan_in, fan_out), jnp.float32, -a, a)


def _reference(feature_nchw, w1, b1, w2, b2):
    """Full module math (MLP + ReLU + Softmax2d + multiply + spatial sum)."""
    B, C, H, W = feature_nchw.shape
    HW = H * W
    emb = jnp.transpose(feature_nchw.reshape(B, C, HW), (0, 2, 1))   # (B,HW,C)
    h = jnp.maximum(emb @ w1 + b1, 0.0)
    logits = jnp.maximum(h @ w2 + b2, 0.0)                           # (B,HW,1)
    # Softmax2d == softmax over the channel dim (size 1 here)
    alpha = jax.nn.softmax(logits.reshape(B, 1, H, W), axis=1)       # (B,1,H,W)
    soft = feature_nchw * alpha
    return jnp.sum(soft.reshape(B, C, -1), axis=2)


if __name__ == "__main__":
    key = jax.random.PRNGKey(0)
    k_f, k_w1, k_w2 = jax.random.split(key, 3)

    # Small batch/spatial; channels fixed at 3072 by nn.Linear(3072, 256).
    B, C, H, W = 2, C_IN, 16, 16
    feature = jax.random.normal(k_f, (B, C, H, W), jnp.float32)

    # Deterministic parameters (xavier_uniform weights, bias = 0.1), stored
    # transposed as (in_features, out_features).  Only used by the reference.
    w1 = _xavier_uniform(k_w1, C_IN, MLP_UNITS)          # (3072, 256)
    b1 = jnp.full((MLP_UNITS,), 0.1, jnp.float32)
    w2 = _xavier_uniform(k_w2, MLP_UNITS, 1)             # (256, 1)
    b2 = jnp.full((1,), 0.1, jnp.float32)

    out = attention_forward(feature, w1, b1, w2, b2)
    out = jax.block_until_ready(out)

    ref = _reference(feature, w1, b1, w2, b2)
    np.testing.assert_allclose(np.asarray(out), np.asarray(ref),
                               rtol=1e-5, atol=2e-4)
    assert out.shape == (B, C)
    print("KERNEL_OK")
</pallas_src>

<mosaic_0001>
module attributes {stable_mosaic.version = 11 : i64} {
  func.func @kernel(%arg0: i32, %arg1: i32, %arg2: i32, %arg3: memref<2x3072x256xf32, #tpu.memory_space<vmem>>, %arg4: memref<2x3072x1xf32, #tpu.memory_space<vmem>>) attributes {dimension_semantics = [#tpu.dimension_semantics<parallel>, #tpu.dimension_semantics<parallel>, #tpu.dimension_semantics<arbitrary>], iteration_bounds = array<i64: 1, 1, 1>, scalar_prefetch = 0 : i64, scratch_operands = 0 : i64, tpu.core_type = #tpu.core_type<tc>, window_params = [{transform_indices = @transform_0, window_bounds = array<i64: 2, 3072, 256>}, {transform_indices = @transform_1, window_bounds = array<i64: 2, 3072, 1>}]} {
    %c0 = arith.constant 0 : index
    %c0_0 = arith.constant 0 : index
    %c0_1 = arith.constant 0 : index
    %0 = vector.load %arg3[%c0, %c0_0, %c0_1] : memref<2x3072x256xf32, #tpu.memory_space<vmem>>, vector<2x3072x256xf32>
    %1 = vector.extract_strided_slice %0 {offsets = [0, 0, 0], sizes = [2, 3072, 128], strides = [1, 1, 1]} : vector<2x3072x256xf32> to vector<2x3072x128xf32>
    %2 = vector.extract_strided_slice %0 {offsets = [0, 0, 128], sizes = [2, 3072, 128], strides = [1, 1, 1]} : vector<2x3072x256xf32> to vector<2x3072x128xf32>
    %3 = arith.addf %1, %2 : vector<2x3072x128xf32>
    %cst = arith.constant dense<0.000000e+00> : vector<2x3072xf32>
    %4 = vector.multi_reduction <add>, %3, %cst [2] : vector<2x3072x128xf32> to vector<2x3072xf32>
    %5 = vector.shape_cast %4 : vector<2x3072xf32> to vector<2x3072x1xf32>
    %c0_2 = arith.constant 0 : index
    %c0_3 = arith.constant 0 : index
    %c0_4 = arith.constant 0 : index
    %6 = vector.load %arg4[%c0_2, %c0_3, %c0_4] : memref<2x3072x1xf32, #tpu.memory_space<vmem>>, vector<2x3072x1xf32>
    tpu.vector_store %arg4[%c0_2, %c0_3, %c0_4], %5 {strides = array<i32>} : memref<2x3072x1xf32, #tpu.memory_space<vmem>>, vector<2x3072x1xf32>,
    return
  }
  func.func @transform_0(%arg0: i32, %arg1: i32, %arg2: i32) -> (i32, i32, i32) {
    %c0_i32 = arith.constant 0 : i32
    return %arg1, %arg0, %arg2 : i32, i32, i32
  }
  func.func @transform_1(%arg0: i32, %arg1: i32, %arg2: i32) -> (i32, i32, i32) {
    %c0_i32 = arith.constant 0 : i32
    %c0_i32_0 = arith.constant 0 : i32
    return %arg1, %arg0, %c0_i32 : i32, i32, i32
  }
}

</mosaic_0001>

<llo_original>
// kernel: tpu_custom_call.1
$region0: #{tpu_custom_call.1}
  #allocation0 [shape = 'u32[]', space=smem, size = 0x4, offset = 0x4, fixed_abs, tag = 'smem constant byte address 0x4 - core index']
  #allocation1 [shape = 'u32[144,128]{1,0:T(1,128)}', space=vmem, size = 0x12000, scoped, tag = 'internal scratch']
  %s0 = inlined_call_operand.hbm [shape: f32[2,3072,256], index: 0, kind: input, shape index: {}]
  %s1 = inlined_call_operand.vmem [shape: f32[2,3072,1], index: 1, kind: output, shape index: {}]
  %s2 = sld [smem:[#allocation0]]
  $region18: #{tpu_custom_call.1} parent=0
    _
  %s4 = ssub.s32 1, %s2
  %s5 = scalar_select 0, %s4, %s2
  $region1: #{tpu_custom_call.1} parent=0
    #allocation2 [shape = 'u8[6291456]{0}', space=vmem, size = 0x600000, scoped, tag = 'input window, operand 0, single buffered']
    #allocation3 [shape = 's32[1]{0}', space=sflag, size = 0x4, scoped, tag = 'scoped memory for tpu_custom_call.1']
    %6 = vsyncpa [#allocation3], 0
    // Predicated region
    $region2: #{tpu_custom_call.1} parent=1 // pred_check
      _
    $region3: #{tpu_custom_call.1} parent=1 // pred_check_branch
      %8 = sbr.rel (0) target = $region5
    $region4: #{tpu_custom_call.1} parent=1 // pred_region
      %s10 = ssub.s32 196608, 196608
      %11 = vsyncadd [#allocation3], %s10
      %s12 = sshll.u32 [#allocation2], 4
      %s13 = int_to_ptr.vmem [resolvable:$true] %s12
      %18 = dma.hbm_to_vmem [thread:$0]  %s0, 196608, %s13, [#allocation3], 256, 256, 16
    $region5: #{tpu_custom_call.1} parent=1 // pred_fallthru
      _
    // Predicated region
    $region6: #{tpu_custom_call.1} parent=1 // pred_check
      _
    $region7: #{tpu_custom_call.1} parent=1 // pred_check_branch
      %20 = sbr.rel (0) target = $region9
    $region8: #{tpu_custom_call.1} parent=1 // pred_region
      %21 = dma.done [#allocation3], 196608
    $region9: #{tpu_custom_call.1} parent=1 // pred_fallthru
      _
    %v22 = vld [vmem:[#allocation2] sm:$0xff]
    %v23 = vld [vmem:[#allocation2 + $0x8] sm:$0xff]
    %v24 = vld [vmem:[#allocation2 + $0x10] sm:$0xff]
    %v25 = vld [vmem:[#allocation2 + $0x18] sm:$0xff]
    %v26 = vld [vmem:[#allocation2 + $0x20] sm:$0xff]
    %v27 = vld [vmem:[#allocation2 + $0x28] sm:$0xff]
    %v28 = vld [vmem:[#allocation2 + $0x30] sm:$0xff]
    %v29 = vld [vmem:[#allocation2 + $0x38] sm:$0xff]
    %v30 = vld [vmem:[#allocation2 + $0x40] sm:$0xff]
    %v31 = vld [vmem:[#allocation2 + $0x48] sm:$0xff]
    %v32 = vld [vmem:[#allocation2 + $0x50] sm:$0xff]
    %v33 = vld [vmem:[#allocation2 + $0x58] sm:$0xff]
    %v34 = vld [vmem:[#allocation2 + $0x60] sm:$0xff]
    %v35 = vld [vmem:[#allocation2 + $0x68] sm:$0xff]
    %v36 = vld [vmem:[#allocation2 + $0x70] sm:$0xff]
    %v37 = vld [vmem:[#allocation2 + $0x78] sm:$0xff]
    %v38 = vld [vmem:[#allocation2 + $0x80] sm:$0xff]
    %v39 = vld [vmem:[#allocation2 + $0x88] sm:$0xff]
    %v40 = vld [vmem:[#allocation2 + $0x90] sm:$0xff]
    %v41 = vld [vmem:[#allocation2 + $0x98] sm:$0xff]
    %v42 = vld [vmem:[#allocation2 + $0xa0] sm:$0xff]
    %v43 = vld [vmem:[#allocation2 + $0xa8] sm:$0xff]
    %v44 = vld [vmem:[#allocation2 + $0xb0] sm:$0xff]
    %v45 = vld [vmem:[#allocation2 + $0xb8] sm:$0xff]
    %v46 = vld [vmem:[#allocation2 + $0xc0] sm:$0xff]
    %v47 = vld [vmem:[#allocation2 + $0xc8] sm:$0xff]
    %v48 = vld [vmem:[#allocation2 + $0xd0] sm:$0xff]
    %v49 = vld [vmem:[#allocation2 + $0xd8] sm:$0xff]
    %v50 = vld [vmem:[#allocation2 + $0xe0] sm:$0xff]
    %v51 = vld [vmem:[#allocation2 + $0xe8] sm:$0xff]
    %v52 = vld [vmem:[#allocation2 + $0xf0] sm:$0xff]
    %v53 = vld [vmem:[#allocation2 + $0xf8] sm:$0xff]
    %v54 = vld [vmem:[#allocation2 + $0x100] sm:$0xff]
    %v55 = vld [vmem:[#allocation2 + $0x108] sm:$0xff]
    %v56 = vld [vmem:[#allocation2 + $0x110] sm:$0xff]
    %v57 = vld [vmem:[#allocation2 + $0x118] sm:$0xff]
    %v58 = vld [vmem:[#allocation2 + $0x120] sm:$0xff]
    %v59 = vld [vmem:[#allocation2 + $0x128] sm:$0xff]
    %v60 = vld [vmem:[#allocation2 + $0x130] sm:$0xff]
    %v61 = vld [vmem:[#allocation2 + $0x138] sm:$0xff]
    %v62 = vld [vmem:[#allocation2 + $0x140] sm:$0xff]
    %v63 = vld [vmem:[#allocation2 + $0x148] sm:$0xff]
    %v64 = vld [vmem:[#allocation2 + $0x150] sm:$0xff]
    %v65 = vld [vmem:[#allocation2 + $0x158] sm:$0xff]
    %v66 = vld [vmem:[#allocation2 + $0x160] sm:$0xff]
    %v67 = vld [vmem:[#allocation2 + $0x168] sm:$0xff]
    %v68 = vld [vmem:[#allocation2 + $0x170] sm:$0xff]
    %v69 = vld [vmem:[#allocation2 + $0x178] sm:$0xff]
    %v70 = vld [vmem:[#allocation2 + $0x180] sm:$0xff]
    %v71 = vld [vmem:[#allocation2 + $0x188] sm:$0xff]
    %v72 = vld [vmem:[#allocation2 + $0x190] sm:$0xff]
    %v73 = vld [vmem:[#allocation2 + $0x198] sm:$0xff]
    %v74 = vld [vmem:[#allocation2 + $0x1a0] sm:$0xff]
    %v75 = vld [vmem:[#allocation2 + $0x1a8] sm:$0xff]
    %v76 = vld [vmem:[#allocation2 + $0x1b0] sm:$0xff]
    %v77 = vld [vmem:[#allocation2 + $0x1b8] sm:$0xff]
    %v78 = vld [vmem:[#allocation2 + $0x1c0] sm:$0xff]
    %v79 = vld [vmem:[#allocation2 + $0x1c8] sm:$0xff]
    %v80 = vld [vmem:[#allocation2 + $0x1d0] sm:$0xff]
    %v81 = vld [vmem:[#allocation2 + $0x1d8] sm:$0xff]
    %v82 = vld [vmem:[#allocation2 + $0x1e0] sm:$0xff]
    %v83 = vld [vmem:[#allocation2 + $0x1e8] sm:$0xff]
    %v84 = vld [vmem:[#allocation2 + $0x1f0] sm:$0xff]
    %v85 = vld [vmem:[#allocation2 + $0x1f8] sm:$0xff]
    %v86 = vld [vmem:[#allocation2 + $0x200] sm:$0xff]
    %v87 = vld [vmem:[#allocation2 + $0x208] sm:$0xff]
    %v88 = vld [vmem:[#allocation2 + $0x210] sm:$0xff]
    %v89 = vld [vmem:[#allocation2 + $0x218] sm:$0xff]
    %v90 = vld [vmem:[#allocation2 + $0x220] sm:$0xff]
    %v91 = vld [vmem:[#allocation2 + $0x228] sm:$0xff]
    %v92 = vld [vmem:[#allocation2 + $0x230] sm:$0xff]
    %v93 = vld [vmem:[#allocation2 + $0x238] sm:$0xff]
    %v94 = vld [vmem:[#allocation2 + $0x240] sm:$0xff]
    %v95 = vld [vmem:[#allocation2 + $0x248] sm:$0xff]
    %v96 = vld [vmem:[#allocation2 + $0x250] sm:$0xff]
    %v97 = vld [vmem:[#allocation2 + $0x258] sm:$0xff]
    %v98 = vld [vmem:[#allocation2 + $0x260] sm:$0xff]
    %v99 = vld [vmem:[#allocation2 + $0x268] sm:$0xff]
    %v100 = vld [vmem:[#allocation2 + $0x270] sm:$0xff]
    %v101 = vld [vmem:[#allocation2 + $0x278] sm:$0xff]
    %v102 = vld [vmem:[#allocation2 + $0x280] sm:$0xff]
    %v103 = vld [vmem:[#allocation2 + $0x288] sm:$0xff]
    %v104 = vld [vmem:[#allocation2 + $0x290] sm:$0xff]
    %v105 = vld [vmem:[#allocation2 + $0x298] sm:$0xff]
    %v106 = vld [vmem:[#allocation2 + $0x2a0] sm:$0xff]
    %v107 = vld [vmem:[#allocation2 + $0x2a8] sm:$0xff]
    %v108 = vld [vmem:[#allocation2 + $0x2b0] sm:$0xff]
    %v109 = vld [vmem:[#allocation2 + $0x2b8] sm:$0xff]
    %v110 = vld [vmem:[#allocation2 + $0x2c0] sm:$0xff]
    %v111 = vld [vmem:[#allocation2 + $0x2c8] sm:$0xff]
    %v112 = vld [vmem:[#allocation2 + $0x2d0] sm:$0xff]
    %v113 = vld [vmem:[#allocation2 + $0x2d8] sm:$0xff]
    %v114 = vld [vmem:[#allocation2 + $0x2e0] sm:$0xff]
    %v115 = vld [vmem:[#allocation2 + $0x2e8] sm:$0xff]
    %v116 = vld [vmem:[#allocation2 + $0x2f0] sm:$0xff]
    %v117 = vld [vmem:[#allocation2 + $0x2f8] sm:$0xff]
    %v118 = vld [vmem:[#allocation2 + $0x300] sm:$0xff]
    %v119 = vld [vmem:[#allocation2 + $0x308] sm:$0xff]
    %v120 = vld [vmem:[#allocation2 + $0x310] sm:$0xff]
    %v121 = vld [vmem:[#allocation2 + $0x318] sm:$0xff]
    %v122 = vld [vmem:[#allocation2 + $0x320] sm:$0xff]
    %v123 = vld [vmem:[#allocation2 + $0x328] sm:$0xff]
    %v124 = vld [vmem:[#allocation2 + $0x330] sm:$0xff]
    %v125 = vld [vmem:[#allocation2 + $0x338] sm:$0xff]
    %v126 = vld [vmem:[#allocation2 + $0x340] sm:$0xff]
    %v127 = vld [vmem:[#allocation2 + $0x348] sm:$0xff]
    %v128 = vld [vmem:[#allocation2 + $0x350] sm:$0xff]
    %v129 = vld [vmem:[#allocation2 + $0x358] sm:$0xff]
    %v130 = vld [vmem:[#allocation2 + $0x360] sm:$0xff]
    %v131 = vld [vmem:[#allocation2 + $0x368] sm:$0xff]
    %v132 = vld [vmem:[#allocation2 + $0x370] sm:$0xff]
    %v133 = vld [vmem:[#allocation2 + $0x378] sm:$0xff]
    %v134 = vld [vmem:[#allocation2 + $0x380] sm:$0xff]
    %v135 = vld [vmem:[#allocation2 + $0x388] sm:$0xff]
    %v136 = vld [vmem:[#allocation2 + $0x390] sm:$0xff]
    %v137 = vld [vmem:[#allocation2 + $0x398] sm:$0xff]
    %v138 = vld [vmem:[#allocation2 + $0x3a0] sm:$0xff]
    %v139 = vld [vmem:[#allocation2 + $0x3a8] sm:$0xff]
    %v140 = vld [vmem:[#allocation2 + $0x3b0] sm:$0xff]
    %v141 = vld [vmem:[#allocation2 + $0x3b8] sm:$0xff]
    %v142 = vld [vmem:[#allocation2 + $0x3c0] sm:$0xff]
    %v143 = vld [vmem:[#allocation2 + $0x3c8] sm:$0xff]
    %v144 = vld [vmem:[#allocation2 + $0x3d0] sm:$0xff]
    %v145 = vld [vmem:[#allocation2 + $0x3d8] sm:$0xff]
    %v146 = vld [vmem:[#allocation2 + $0x3e0] sm:$0xff]
    %v147 = vld [vmem:[#allocation2 + $0x3e8] sm:$0xff]
    %v148 = vld [vmem:[#allocation2 + $0x3f0] sm:$0xff]
    %v149 = vld [vmem:[#allocation2 + $0x3f8] sm:$0xff]
    %v150 = vld [vmem:[#allocation2 + $0x400] sm:$0xff]
    %v151 = vld [vmem:[#allocation2 + $0x408] sm:$0xff]
    %v152 = vld [vmem:[#allocation2 + $0x410] sm:$0xff]
    %v153 = vld [vmem:[#allocation2 + $0x418] sm:$0xff]
    %v154 = vld [vmem:[#allocation2 + $0x420] sm:$0xff]
    %v155 = vld [vmem:[#allocation2 + $0x428] sm:$0xff]
    %v156 = vld [vmem:[#allocation2 + $0x430] sm:$0xff]
    %v157 = vld [vmem:[#allocation2 + $0x438] sm:$0xff]
    %v158 = vld [vmem:[#allocation2 + $0x440] sm:$0xff]
    %v159 = vld [vmem:[#allocation2 + $0x448] sm:$0xff]
    %v160 = vld [vmem:[#allocation2 + $0x450] sm:$0xff]
    %v161 = vld [vmem:[#allocation2 + $0x458] sm:$0xff]
    %v162 = vld [vmem:[#allocation2 + $0x460] sm:$0xff]
    %v163 = vld [vmem:[#allocation2 + $0x468] sm:$0xff]
    %v164 = vld [vmem:[#allocation2 + $0x470] sm:$0xff]
    %v165 = vld [vmem:[#allocation2 + $0x478] sm:$0xff]
    %v166 = vld [vmem:[#allocation2 + $0x480] sm:$0xff]
    %v167 = vld [vmem:[#allocation2 + $0x488] sm:$0xff]
    %v168 = vld [vmem:[#allocation2 + $0x490] sm:$0xff]
    %v169 = vld [vmem:[#allocation2 + $0x498] sm:$0xff]
    %v170 = vld [vmem:[#allocation2 + $0x4a0] sm:$0xff]
    %v171 = vld [vmem:[#allocation2 + $0x4a8] sm:$0xff]
    %v172 = vld [vmem:[#allocation2 + $0x4b0] sm:$0xff]
    %v173 = vld [vmem:[#allocation2 + $0x4b8] sm:$0xff]
    %v174 = vld [vmem:[#allocation2 + $0x4c0] sm:$0xff]
    %v175 = vld [vmem:[#allocation2 + $0x4c8] sm:$0xff]
    %v176 = vld [vmem:[#allocation2 + $0x4d0] sm:$0xff]
    %v177 = vld [vmem:[#allocation2 + $0x4d8] sm:$0xff]
    %v178 = vld [vmem:[#allocation2 + $0x4e0] sm:$0xff]
    %v179 = vld [vmem:[#allocation2 + $0x4e8] sm:$0xff]
    %v180 = vld [vmem:[#allocation2 + $0x4f0] sm:$0xff]
    %v181 = vld [vmem:[#allocation2 + $0x4f8] sm:$0xff]
    %v182 = vld [vmem:[#allocation2 + $0x500] sm:$0xff]
    %v183 = vld [vmem:[#allocation2 + $0x508] sm:$0xff]
    %v184 = vld [vmem:[#allocation2 + $0x510] sm:$0xff]
    %v185 = vld [vmem:[#allocation2 + $0x518] sm:$0xff]
    %v186 = vld [vmem:[#allocation2 + $0x520] sm:$0xff]
    %v187 = vld [vmem:[#allocation2 + $0x528] sm:$0xff]
    %v188 = vld [vmem:[#allocation2 + $0x530] sm:$0xff]
    %v189 = vld [vmem:[#allocation2 + $0x538] sm:$0xff]
    %v190 = vld [vmem:[#allocation2 + $0x540] sm:$0xff]
    %v191 = vld [vmem:[#allocation2 + $0x548] sm:$0xff]
    %v192 = vld [vmem:[#allocation2 + $0x550] sm:$0xff]
    %v193 = vld [vmem:[#allocation2 + $0x558] sm:$0xff]
    %v194 = vld [vmem:[#allocation2 + $0x560] sm:$0xff]
    %v195 = vld [vmem:[#allocation2 + $0x568] sm:$0xff]
    %v196 = vld [vmem:[#allocation2 + $0x570] sm:$0xff]
    %v197 = vld [vmem:[#allocation2 + $0x578] sm:$0xff]
    %v198 = vld [vmem:[#allocation2 + $0x580] sm:$0xff]
    %v199 = vld [vmem:[#allocation2 + $0x588] sm:$0xff]
    %v200 = vld [vmem:[#allocation2 + $0x590] sm:$0xff]
    %v201 = vld [vmem:[#allocation2 + $0x598] sm:$0xff]
    %v202 = vld [vmem:[#allocation2 + $0x5a0] sm:$0xff]
    %v203 = vld [vmem:[#allocation2 + $0x5a8] sm:$0xff]
    %v204 = vld [vmem:[#allocation2 + $0x5b0] sm:$0xff]
    %v205 = vld [vmem:[#allocation2 + $0x5b8] sm:$0xff]
    %v206 = vld [vmem:[#allocation2 + $0x5c0] sm:$0xff]
    %v207 = vld [vmem:[#allocation2 + $0x5c8] sm:$0xff]
    %v208 = vld [vmem:[#allocation2 + $0x5d0] sm:$0xff]
    %v209 = vld [vmem:[#allocation2 + $0x5d8] sm:$0xff]
    %v210 = vld [vmem:[#allocation2 + $0x5e0] sm:$0xff]
    %v211 = vld [vmem:[#allocation2 + $0x5e8] sm:$0xff]
    %v212 = vld [vmem:[#allocation2 + $0x5f0] sm:$0xff]
    %v213 = vld [vmem:[#allocation2 + $0x5f8] sm:$0xff]
    %v214 = vld [vmem:[#allocation2 + $0x600] sm:$0xff]
    %v215 = vld [vmem:[#allocation2 + $0x608] sm:$0xff]
    %v216 = vld [vmem:[#allocation2 + $0x610] sm:$0xff]
    %v217 = vld [vmem:[#allocation2 + $0x618] sm:$0xff]
    %v218 = vld [vmem:[#allocation2 + $0x620] sm:$0xff]
    %v219 = vld [vmem:[#allocation2 + $0x628] sm:$0xff]
    %v220 = vld [vmem:[#allocation2 + $0x630] sm:$0xff]
    %v221 = vld [vmem:[#allocation2 + $0x638] sm:$0xff]
    %v222 = vld [vmem:[#allocation2 + $0x640] sm:$0xff]
    %v223 = vld [vmem:[#allocation2 + $0x648] sm:$0xff]
    %v224 = vld [vmem:[#allocation2 + $0x650] sm:$0xff]
    %v225 = vld [vmem:[#allocation2 + $0x658] sm:$0xff]
    %v226 = vld [vmem:[#allocation2 + $0x660] sm:$0xff]
    %v227 = vld [vmem:[#allocation2 + $0x668] sm:$0xff]
    %v228 = vld [vmem:[#allocation2 + $0x670] sm:$0xff]
    %v229 = vld [vmem:[#allocation2 + $0x678] sm:$0xff]
    %v230 = vld [vmem:[#allocation2 + $0x680] sm:$0xff]
    %v231 = vld [vmem:[#allocation2 + $0x688] sm:$0xff]
    %v232 = vld [vmem:[#allocation2 + $0x690] sm:$0xff]
    %v233 = vld [vmem:[#allocation2 + $0x698] sm:$0xff]
    %v234 = vld [vmem:[#allocation2 + $0x6a0] sm:$0xff]
    %v235 = vld [vmem:[#allocation2 + $0x6a8] sm:$0xff]
    %v236 = vld [vmem:[#allocation2 + $0x6b0] sm:$0xff]
    %v237 = vld [vmem:[#allocation2 + $0x6b8] sm:$0xff]
    %v238 = vld [vmem:[#allocation2 + $0x6c0] sm:$0xff]
    %v239 = vld [vmem:[#allocation2 + $0x6c8] sm:$0xff]
    %v240 = vld [vmem:[#allocation2 + $0x6d0] sm:$0xff]
    %v241 = vld [vmem:[#allocation2 + $0x6d8] sm:$0xff]
    %v242 = vld [vmem:[#allocation2 + $0x6e0] sm:$0xff]
    %v243 = vld [vmem:[#allocation2 + $0x6e8] sm:$0xff]
    %v244 = vld [vmem:[#allocation2 + $0x6f0] sm:$0xff]
    %v245 = vld [vmem:[#allocation2 + $0x6f8] sm:$0xff]
    %v246 = vld [vmem:[#allocation2 + $0x700] sm:$0xff]
    %v247 = vld [vmem:[#allocation2 + $0x708] sm:$0xff]
    %v248 = vld [vmem:[#allocation2 + $0x710] sm:$0xff]
    %v249 = vld [vmem:[#allocation2 + $0x718] sm:$0xff]
    %v250 = vld [vmem:[#allocation2 + $0x720] sm:$0xff]
    %v251 = vld [vmem:[#allocation2 + $0x728] sm:$0xff]
    %v252 = vld [vmem:[#allocation2 + $0x730] sm:$0xff]
    %v253 = vld [vmem:[#allocation2 + $0x738] sm:$0xff]
    %v254 = vld [vmem:[#allocation2 + $0x740] sm:$0xff]
    %v255 = vld [vmem:[#allocation2 + $0x748] sm:$0xff]
    %v256 = vld [vmem:[#allocation2 + $0x750] sm:$0xff]
    %v257 = vld [vmem:[#allocation2 + $0x758] sm:$0xff]
    %v258 = vld [vmem:[#allocation2 + $0x760] sm:$0xff]
    %v259 = vld [vmem:[#allocation2 + $0x768] sm:$0xff]
    %v260 = vld [vmem:[#allocation2 + $0x770] sm:$0xff]
    %v261 = vld [vmem:[#allocation2 + $0x778] sm:$0xff]
    %v262 = vld [vmem:[#allocation2 + $0x780] sm:$0xff]
    %v263 = vld [vmem:[#allocation2 + $0x788] sm:$0xff]
    %v264 = vld [vmem:[#allocation2 + $0x790] sm:$0xff]
    %v265 = vld [vmem:[#allocation2 + $0x798] sm:$0xff]
    %v266 = vld [vmem:[#allocation2 + $0x7a0] sm:$0xff]
    %v267 = vld [vmem:[#allocation2 + $0x7a8] sm:$0xff]
    %v268 = vld [vmem:[#allocation2 + $0x7b0] sm:$0xff]
    %v269 = vld [vmem:[#allocation2 + $0x7b8] sm:$0xff]
    %v270 = vld [vmem:[#allocation2 + $0x7c0] sm:$0xff]
    %v271 = vld [vmem:[#allocation2 + $0x7c8] sm:$0xff]
    %v272 = vld [vmem:[#allocation2 + $0x7d0] sm:$0xff]
    %v273 = vld [vmem:[#allocation2 + $0x7d8] sm:$0xff]
    %v274 = vld [vmem:[#allocation2 + $0x7e0] sm:$0xff]
    %v275 = vld [vmem:[#allocation2 + $0x7e8] sm:$0xff]
    %v276 = vld [vmem:[#allocation2 + $0x7f0] sm:$0xff]
    %v277 = vld [vmem:[#allocation2 + $0x7f8] sm:$0xff]
    %v278 = vld [vmem:[#allocation2 + $0x800] sm:$0xff]
    %v279 = vld [vmem:[#allocation2 + $0x808] sm:$0xff]
    %v280 = vld [vmem:[#allocation2 + $0x810] sm:$0xff]
    %v281 = vld [vmem:[#allocation2 + $0x818] sm:$0xff]
    %v282 = vld [vmem:[#allocation2 + $0x820] sm:$0xff]
    %v283 = vld [vmem:[#allocation2 + $0x828] sm:$0xff]
    %v284 = vld [vmem:[#allocation2 + $0x830] sm:$0xff]
    %v285 = vld [vmem:[#allocation2 + $0x838] sm:$0xff]
    %v286 = vld [vmem:[#allocation2 + $0x840] sm:$0xff]
    %v287 = vld [vmem:[#allocation2 + $0x848] sm:$0xff]
    %v288 = vld [vmem:[#allocation2 + $0x850] sm:$0xff]
    %v289 = vld [vmem:[#allocation2 + $0x858] sm:$0xff]
    %v290 = vld [vmem:[#allocation2 + $0x860] sm:$0xff]
    %v291 = vld [vmem:[#allocation2 + $0x868] sm:$0xff]
    %v292 = vld [vmem:[#allocation2 + $0x870] sm:$0xff]
    %v293 = vld [vmem:[#allocation2 + $0x878] sm:$0xff]
    %v294 = vld [vmem:[#allocation2 + $0x880] sm:$0xff]
    %v295 = vld [vmem:[#allocation2 + $0x888] sm:$0xff]
    %v296 = vld [vmem:[#allocation2 + $0x890] sm:$0xff]
    %v297 = vld [vmem:[#allocation2 + $0x898] sm:$0xff]
    %v298 = vld [vmem:[#allocation2 + $0x8a0] sm:$0xff]
    %v299 = vld [vmem:[#allocation2 + $0x8a8] sm:$0xff]
    %v300 = vld [vmem:[#allocation2 + $0x8b0] sm:$0xff]
    %v301 = vld [vmem:[#allocation2 + $0x8b8] sm:$0xff]
    %v302 = vld [vmem:[#allocation2 + $0x8c0] sm:$0xff]
    %v303 = vld [vmem:[#allocation2 + $0x8c8] sm:$0xff]
    %v304 = vld [vmem:[#allocation2 + $0x8d0] sm:$0xff]
    %v305 = vld [vmem:[#allocation2 + $0x8d8] sm:$0xff]
    %v306 = vld [vmem:[#allocation2 + $0x8e0] sm:$0xff]
    %v307 = vld [vmem:[#allocation2 + $0x8e8] sm:$0xff]
    %v308 = vld [vmem:[#allocation2 + $0x8f0] sm:$0xff]
    %v309 = vld [vmem:[#allocation2 + $0x8f8] sm:$0xff]
    %v310 = vld [vmem:[#allocation2 + $0x900] sm:$0xff]
    %v311 = vld [vmem:[#allocation2 + $0x908] sm:$0xff]
    %v312 = vld [vmem:[#allocation2 + $0x910] sm:$0xff]
    %v313 = vld [vmem:[#allocation2 + $0x918] sm:$0xff]
    %v314 = vld [vmem:[#allocation2 + $0x920] sm:$0xff]
    %v315 = vld [vmem:[#allocation2 + $0x928] sm:$0xff]
    %v316 = vld [vmem:[#allocation2 + $0x930] sm:$0xff]
    %v317 = vld [vmem:[#allocation2 + $0x938] sm:$0xff]
    %v318 = vld [vmem:[#allocation2 + $0x940] sm:$0xff]
    %v319 = vld [vmem:[#allocation2 + $0x948] sm:$0xff]
    %v320 = vld [vmem:[#allocation2 + $0x950] sm:$0xff]
    %v321 = vld [vmem:[#allocation2 + $0x958] sm:$0xff]
    %v322 = vld [vmem:[#allocation2 + $0x960] sm:$0xff]
    %v323 = vld [vmem:[#allocation2 + $0x968] sm:$0xff]
    %v324 = vld [vmem:[#allocation2 + $0x970] sm:$0xff]
    %v325 = vld [vmem:[#allocation2 + $0x978] sm:$0xff]
    %v326 = vld [vmem:[#allocation2 + $0x980] sm:$0xff]
    %v327 = vld [vmem:[#allocation2 + $0x988] sm:$0xff]
    %v328 = vld [vmem:[#allocation2 + $0x990] sm:$0xff]
    %v329 = vld [vmem:[#allocation2 + $0x998] sm:$0xff]
    %v330 = vld [vmem:[#allocation2 + $0x9a0] sm:$0xff]
    %v331 = vld [vmem:[#allocation2 + $0x9a8] sm:$0xff]
    %v332 = vld [vmem:[#allocation2 + $0x9b0] sm:$0xff]
    %v333 = vld [vmem:[#allocation2 + $0x9b8] sm:$0xff]
    %v334 = vld [vmem:[#allocation2 + $0x9c0] sm:$0xff]
    %v335 = vld [vmem:[#allocation2 + $0x9c8] sm:$0xff]
    %v336 = vld [vmem:[#allocation2 + $0x9d0] sm:$0xff]
    %v337 = vld [vmem:[#allocation2 + $0x9d8] sm:$0xff]
    %v338 = vld [vmem:[#allocation2 + $0x9e0] sm:$0xff]
    %v339 = vld [vmem:[#allocation2 + $0x9e8] sm:$0xff]
    %v340 = vld [vmem:[#allocation2 + $0x9f0] sm:$0xff]
    %v341 = vld [vmem:[#allocation2 + $0x9f8] sm:$0xff]
    %v342 = vld [vmem:[#allocation2 + $0xa00] sm:$0xff]
    %v343 = vld [vmem:[#allocation2 + $0xa08] sm:$0xff]
    %v344 = vld [vmem:[#allocation2 + $0xa10] sm:$0xff]
    %v345 = vld [vmem:[#allocation2 + $0xa18] sm:$0xff]
    %v346 = vld [vmem:[#allocation2 + $0xa20] sm:$0xff]
    %v347 = vld [vmem:[#allocation2 + $0xa28] sm:$0xff]
    %v348 = vld [vmem:[#allocation2 + $0xa30] sm:$0xff]
    %v349 = vld [vmem:[#allocation2 + $0xa38] sm:$0xff]
    %v350 = vld [vmem:[#allocation2 + $0xa40] sm:$0xff]
    %v351 = vld [vmem:[#allocation2 + $0xa48] sm:$0xff]
    %v352 = vld [vmem:[#allocation2 + $0xa50] sm:$0xff]
    %v353 = vld [vmem:[#allocation2 + $0xa58] sm:$0xff]
    %v354 = vld [vmem:[#allocation2 + $0xa60] sm:$0xff]
    %v355 = vld [vmem:[#allocation2 + $0xa68] sm:$0xff]
    %v356 = vld [vmem:[#allocation2 + $0xa70] sm:$0xff]
    %v357 = vld [vmem:[#allocation2 + $0xa78] sm:$0xff]
    %v358 = vld [vmem:[#allocation2 + $0xa80] sm:$0xff]
    %v359 = vld [vmem:[#allocation2 + $0xa88] sm:$0xff]
    %v360 = vld [vmem:[#allocation2 + $0xa90] sm:$0xff]
    %v361 = vld [vmem:[#allocation2 + $0xa98] sm:$0xff]
    %v362 = vld [vmem:[#allocation2 + $0xaa0] sm:$0xff]
    %v363 = vld [vmem:[#allocation2 + $0xaa8] sm:$0xff]
    %v364 = vld [vmem:[#allocation2 + $0xab0] sm:$0xff]
    %v365 = vld [vmem:[#allocation2 + $0xab8] sm:$0xff]
    %v366 = vld [vmem:[#allocation2 + $0xac0] sm:$0xff]
    %v367 = vld [vmem:[#allocation2 + $0xac8] sm:$0xff]
    %v368 = vld [vmem:[#allocation2 + $0xad0] sm:$0xff]
    %v369 = vld [vmem:[#allocation2 + $0xad8] sm:$0xff]
    %v370 = vld [vmem:[#allocation2 + $0xae0] sm:$0xff]
    %v371 = vld [vmem:[#allocation2 + $0xae8] sm:$0xff]
    %v372 = vld [vmem:[#allocation2 + $0xaf0] sm:$0xff]
    %v373 = vld [vmem:[#allocation2 + $0xaf8] sm:$0xff]
    %v374 = vld [vmem:[#allocation2 + $0xb00] sm:$0xff]
    %v375 = vld [vmem:[#allocation2 + $0xb08] sm:$0xff]
    %v376 = vld [vmem:[#allocation2 + $0xb10] sm:$0xff]
    %v377 = vld [vmem:[#allocation2 + $0xb18] sm:$0xff]
    %v378 = vld [vmem:[#allocation2 + $0xb20] sm:$0xff]
    %v379 = vld [vmem:[#allocation2 + $0xb28] sm:$0xff]
    %v380 = vld [vmem:[#allocation2 + $0xb30] sm:$0xff]
    %v381 = vld [vmem:[#allocation2 + $0xb38] sm:$0xff]
    %v382 = vld [vmem:[#allocation2 + $0xb40] sm:$0xff]
    %v383 = vld [vmem:[#allocation2 + $0xb48] sm:$0xff]
    %v384 = vld [vmem:[#allocation2 + $0xb50] sm:$0xff]
    %v385 = vld [vmem:[#allocation2 + $0xb58] sm:$0xff]
    %v386 = vld [vmem:[#allocation2 + $0xb60] sm:$0xff]
    %v387 = vld [vmem:[#allocation2 + $0xb68] sm:$0xff]
    %v388 = vld [vmem:[#allocation2 + $0xb70] sm:$0xff]
    %v389 = vld [vmem:[#allocation2 + $0xb78] sm:$0xff]
    %v390 = vld [vmem:[#allocation2 + $0xb80] sm:$0xff]
    %v391 = vld [vmem:[#allocation2 + $0xb88] sm:$0xff]
    %v392 = vld [vmem:[#allocation2 + $0xb90] sm:$0xff]
    %v393 = vld [vmem:[#allocation2 + $0xb98] sm:$0xff]
    %v394 = vld [vmem:[#allocation2 + $0xba0] sm:$0xff]
    %v395 = vld [vmem:[#allocation2 + $0xba8] sm:$0xff]
    %v396 = vld [vmem:[#allocation2 + $0xbb0] sm:$0xff]
    %v397 = vld [vmem:[#allocation2 + $0xbb8] sm:$0xff]
    %v398 = vld [vmem:[#allocation2 + $0xbc0] sm:$0xff]
    %v399 = vld [vmem:[#allocation2 + $0xbc8] sm:$0xff]
    %v400 = vld [vmem:[#allocation2 + $0xbd0] sm:$0xff]
    %v401 = vld [vmem:[#allocation2 + $0xbd8] sm:$0xff]
    %v402 = vld [vmem:[#allocation2 + $0xbe0] sm:$0xff]
    %v403 = vld [vmem:[#allocation2 + $0xbe8] sm:$0xff]
    %v404 = vld [vmem:[#allocation2 + $0xbf0] sm:$0xff]
    %v405 = vld [vmem:[#allocation2 + $0xbf8] sm:$0xff]
    %v406 = vld [vmem:[#allocation2 + $0xc00] sm:$0xff]
    %v407 = vld [vmem:[#allocation2 + $0xc08] sm:$0xff]
    %v408 = vld [vmem:[#allocation2 + $0xc10] sm:$0xff]
    %v409 = vld [vmem:[#allocation2 + $0xc18] sm:$0xff]
    %v410 = vld [vmem:[#allocation2 + $0xc20] sm:$0xff]
    %v411 = vld [vmem:[#allocation2 + $0xc28] sm:$0xff]
    %v412 = vld [vmem:[#allocation2 + $0xc30] sm:$0xff]
    %v413 = vld [vmem:[#allocation2 + $0xc38] sm:$0xff]
    %v414 = vld [vmem:[#allocation2 + $0xc40] sm:$0xff]
    %v415 = vld [vmem:[#allocation2 + $0xc48] sm:$0xff]
    %v416 = vld [vmem:[#allocation2 + $0xc50] sm:$0xff]
    %v417 = vld [vmem:[#allocation2 + $0xc58] sm:$0xff]
    %v418 = vld [vmem:[#allocation2 + $0xc60] sm:$0xff]
    %v419 = vld [vmem:[#allocation2 + $0xc68] sm:$0xff]
    %v420 = vld [vmem:[#allocation2 + $0xc70] sm:$0xff]
    %v421 = vld [vmem:[#allocation2 + $0xc78] sm:$0xff]
    %v422 = vld [vmem:[#allocation2 + $0xc80] sm:$0xff]
    %v423 = vld [vmem:[#allocation2 + $0xc88] sm:$0xff]
    %v424 = vld [vmem:[#allocation2 + $0xc90] sm:$0xff]
    %v425 = vld [vmem:[#allocation2 + $0xc98] sm:$0xff]
    %v426 = vld [vmem:[#allocation2 + $0xca0] sm:$0xff]
    %v427 = vld [vmem:[#allocation2 + $0xca8] sm:$0xff]
    %v428 = vld [vmem:[#allocation2 + $0xcb0] sm:$0xff]
    %v429 = vld [vmem:[#allocation2 + $0xcb8] sm:$0xff]
    %v430 = vld [vmem:[#allocation2 + $0xcc0] sm:$0xff]
    %v431 = vld [vmem:[#allocation2 + $0xcc8] sm:$0xff]
    %v432 = vld [vmem:[#allocation2 + $0xcd0] sm:$0xff]
    %v433 = vld [vmem:[#allocation2 + $0xcd8] sm:$0xff]
    %v434 = vld [vmem:[#allocation2 + $0xce0] sm:$0xff]
    %v435 = vld [vmem:[#allocation2 + $0xce8] sm:$0xff]
    %v436 = vld [vmem:[#allocation2 + $0xcf0] sm:$0xff]
    %v437 = vld [vmem:[#allocation2 + $0xcf8] sm:$0xff]
    %v438 = vld [vmem:[#allocation2 + $0xd00] sm:$0xff]
    %v439 = vld [vmem:[#allocation2 + $0xd08] sm:$0xff]
    %v440 = vld [vmem:[#allocation2 + $0xd10] sm:$0xff]
    %v441 = vld [vmem:[#allocation2 + $0xd18] sm:$0xff]
    %v442 = vld [vmem:[#allocation2 + $0xd20] sm:$0xff]
    %v443 = vld [vmem:[#allocation2 + $0xd28] sm:$0xff]
    %v444 = vld [vmem:[#allocation2 + $0xd30] sm:$0xff]
    %v445 = vld [vmem:[#allocation2 + $0xd38] sm:$0xff]
    %v446 = vld [vmem:[#allocation2 + $0xd40] sm:$0xff]
    %v447 = vld [vmem:[#allocation2 + $0xd48] sm:$0xff]
    %v448 = vld [vmem:[#allocation2 + $0xd50] sm:$0xff]
    %v449 = vld [vmem:[#allocation2 + $0xd58] sm:$0xff]
    %v450 = vld [vmem:[#allocation2 + $0xd60] sm:$0xff]
    %v451 = vld [vmem:[#allocation2 + $0xd68] sm:$0xff]
    %v452 = vld [vmem:[#allocation2 + $0xd70] sm:$0xff]
    %v453 = vld [vmem:[#allocation2 + $0xd78] sm:$0xff]
    %v454 = vld [vmem:[#allocation2 + $0xd80] sm:$0xff]
    %v455 = vld [vmem:[#allocation2 + $0xd88] sm:$0xff]
    %v456 = vld [vmem:[#allocation2 + $0xd90] sm:$0xff]
    %v457 = vld [vmem:[#allocation2 + $0xd98] sm:$0xff]
    %v458 = vld [vmem:[#allocation2 + $0xda0] sm:$0xff]
    %v459 = vld [vmem:[#allocation2 + $0xda8] sm:$0xff]
    %v460 = vld [vmem:[#allocation2 + $0xdb0] sm:$0xff]
    %v461 = vld [vmem:[#allocation2 + $0xdb8] sm:$0xff]
    %v462 = vld [vmem:[#allocation2 + $0xdc0] sm:$0xff]
    %v463 = vld [vmem:[#allocation2 + $0xdc8] sm:$0xff]
    %v464 = vld [vmem:[#allocation2 + $0xdd0] sm:$0xff]
    %v465 = vld [vmem:[#allocation2 + $0xdd8] sm:$0xff]
    %v466 = vld [vmem:[#allocation2 + $0xde0] sm:$0xff]
    %v467 = vld [vmem:[#allocation2 + $0xde8] sm:$0xff]
    %v468 = vld [vmem:[#allocation2 + $0xdf0] sm:$0xff]
    %v469 = vld [vmem:[#allocation2 + $0xdf8] sm:$0xff]
    %v470 = vld [vmem:[#allocation2 + $0xe00] sm:$0xff]
    %v471 = vld [vmem:[#allocation2 + $0xe08] sm:$0xff]
    %v472 = vld [vmem:[#allocation2 + $0xe10] sm:$0xff]
    %v473 = vld [vmem:[#allocation2 + $0xe18] sm:$0xff]
    %v474 = vld [vmem:[#allocation2 + $0xe20] sm:$0xff]
    %v475 = vld [vmem:[#allocation2 + $0xe28] sm:$0xff]
    %v476 = vld [vmem:[#allocation2 + $0xe30] sm:$0xff]
    %v477 = vld [vmem:[#allocation2 + $0xe38] sm:$0xff]
    %v478 = vld [vmem:[#allocation2 + $0xe40] sm:$0xff]
    %v479 = vld [vmem:[#allocation2 + $0xe48] sm:$0xff]
    %v480 = vld [vmem:[#allocation2 + $0xe50] sm:$0xff]
    %v481 = vld [vmem:[#allocation2 + $0xe58] sm:$0xff]
    %v482 = vld [vmem:[#allocation2 + $0xe60] sm:$0xff]
    %v483 = vld [vmem:[#allocation2 + $0xe68] sm:$0xff]
    %v484 = vld [vmem:[#allocation2 + $0xe70] sm:$0xff]
    %v485 = vld [vmem:[#allocation2 + $0xe78] sm:$0xff]
    %v486 = vld [vmem:[#allocation2 + $0xe80] sm:$0xff]
    %v487 = vld [vmem:[#allocation2 + $0xe88] sm:$0xff]
    %v488 = vld [vmem:[#allocation2 + $0xe90] sm:$0xff]
    %v489 = vld [vmem:[#allocation2 + $0xe98] sm:$0xff]
    %v490 = vld [vmem:[#allocation2 + $0xea0] sm:$0xff]
    %v491 = vld [vmem:[#allocation2 + $0xea8] sm:$0xff]
    %v492 = vld [vmem:[#allocation2 + $0xeb0] sm:$0xff]
    %v493 = vld [vmem:[#allocation2 + $0xeb8] sm:$0xff]
    %v494 = vld [vmem:[#allocation2 + $0xec0] sm:$0xff]
    %v495 = vld [vmem:[#allocation2 + $0xec8] sm:$0xff]
    %v496 = vld [vmem:[#allocation2 + $0xed0] sm:$0xff]
    %v497 = vld [vmem:[#allocation2 + $0xed8] sm:$0xff]
    %v498 = vld [vmem:[#allocation2 + $0xee0] sm:$0xff]
    %v499 = vld [vmem:[#allocation2 + $0xee8] sm:$0xff]
    %v500 = vld [vmem:[#allocation2 + $0xef0] sm:$0xff]
    %v501 = vld [vmem:[#allocation2 + $0xef8] sm:$0xff]
    %v502 = vld [vmem:[#allocation2 + $0xf00] sm:$0xff]
    %v503 = vld [vmem:[#allocation2 + $0xf08] sm:$0xff]
    %v504 = vld [vmem:[#allocation2 + $0xf10] sm:$0xff]
    %v505 = vld [vmem:[#allocation2 + $0xf18] sm:$0xff]
    %v506 = vld [vmem:[#allocation2 + $0xf20] sm:$0xff]
    %v507 = vld [vmem:[#allocation2 + $0xf28] sm:$0xff]
    %v508 = vld [vmem:[#allocation2 + $0xf30] sm:$0xff]
    %v509 = vld [vmem:[#allocation2 + $0xf38] sm:$0xff]
    %v510 = vld [vmem:[#allocation2 + $0xf40] sm:$0xff]
    %v511 = vld [vmem:[#allocation2 + $0xf48] sm:$0xff]
    %v512 = vld [vmem:[#allocation2 + $0xf50] sm:$0xff]
    %v513 = vld [vmem:[#allocation2 + $0xf58] sm:$0xff]
    %v514 = vld [vmem:[#allocation2 + $0xf60] sm:$0xff]
    %v515 = vld [vmem:[#allocation2 + $0xf68] sm:$0xff]
    %v516 = vld [vmem:[#allocation2 + $0xf70] sm:$0xff]
    %v517 = vld [vmem:[#allocation2 + $0xf78] sm:$0xff]
    %v518 = vld [vmem:[#allocation2 + $0xf80] sm:$0xff]
    %v519 = vld [vmem:[#allocation2 + $0xf88] sm:$0xff]
    %v520 = vld [vmem:[#allocation2 + $0xf90] sm:$0xff]
    %v521 = vld [vmem:[#allocation2 + $0xf98] sm:$0xff]
    %v522 = vld [vmem:[#allocation2 + $0xfa0] sm:$0xff]
    %v523 = vld [vmem:[#allocation2 + $0xfa8] sm:$0xff]
    %v524 = vld [vmem:[#allocation2 + $0xfb0] sm:$0xff]
    %v525 = vld [vmem:[#allocation2 + $0xfb8] sm:$0xff]
    %v526 = vld [vmem:[#allocation2 + $0xfc0] sm:$0xff]
    %v527 = vld [vmem:[#allocation2 + $0xfc8] sm:$0xff]
    %v528 = vld [vmem:[#allocation2 + $0xfd0] sm:$0xff]
    %v529 = vld [vmem:[#allocation2 + $0xfd8] sm:$0xff]
    %v530 = vld [vmem:[#allocation2 + $0xfe0] sm:$0xff]
    %v531 = vld [vmem:[#allocation2 + $0xfe8] sm:$0xff]
    %v532 = vld [vmem:[#allocation2 + $0xff0] sm:$0xff]
    %v533 = vld [vmem:[#allocation2 + $0xff8] sm:$0xff]
    %v534 = vld [vmem:[#allocation2 + $0x1000] sm:$0xff]
    %v535 = vld [vmem:[#allocation2 + $0x1008] sm:$0xff]
    %v536 = vld [vmem:[#allocation2 + $0x1010] sm:$0xff]
    %v537 = vld [vmem:[#allocation2 + $0x1018] sm:$0xff]
    %v538 = vld [vmem:[#allocation2 + $0x1020] sm:$0xff]
    %v539 = vld [vmem:[#allocation2 + $0x1028] sm:$0xff]
    %v540 = vld [vmem:[#allocation2 + $0x1030] sm:$0xff]
    %v541 = vld [vmem:[#allocation2 + $0x1038] sm:$0xff]
    %v542 = vld [vmem:[#allocation2 + $0x1040] sm:$0xff]
    %v543 = vld [vmem:[#allocation2 + $0x1048] sm:$0xff]
    %v544 = vld [vmem:[#allocation2 + $0x1050] sm:$0xff]
    %v545 = vld [vmem:[#allocation2 + $0x1058] sm:$0xff]
    %v546 = vld [vmem:[#allocation2 + $0x1060] sm:$0xff]
    %v547 = vld [vmem:[#allocation2 + $0x1068] sm:$0xff]
    %v548 = vld [vmem:[#allocation2 + $0x1070] sm:$0xff]
    %v549 = vld [vmem:[#allocation2 + $0x1078] sm:$0xff]
    %v550 = vld [vmem:[#allocation2 + $0x1080] sm:$0xff]
    %v551 = vld [vmem:[#allocation2 + $0x1088] sm:$0xff]
    %v552 = vld [vmem:[#allocation2 + $0x1090] sm:$0xff]
    %v553 = vld [vmem:[#allocation2 + $0x1098] sm:$0xff]
    %v554 = vld [vmem:[#allocation2 + $0x10a0] sm:$0xff]
    %v555 = vld [vmem:[#allocation2 + $0x10a8] sm:$0xff]
    %v556 = vld [vmem:[#allocation2 + $0x10b0] sm:$0xff]
    %v557 = vld [vmem:[#allocation2 + $0x10b8] sm:$0xff]
    %v558 = vld [vmem:[#allocation2 + $0x10c0] sm:$0xff]
    %v559 = vld [vmem:[#allocation2 + $0x10c8] sm:$0xff]
    %v560 = vld [vmem:[#allocation2 + $0x10d0] sm:$0xff]
    %v561 = vld [vmem:[#allocation2 + $0x10d8] sm:$0xff]
    %v562 = vld [vmem:[#allocation2 + $0x10e0] sm:$0xff]
    %v563 = vld [vmem:[#allocation2 + $0x10e8] sm:$0xff]
    %v564 = vld [vmem:[#allocation2 + $0x10f0] sm:$0xff]
    %v565 = vld [vmem:[#allocation2 + $0x10f8] sm:$0xff]
    %v566 = vld [vmem:[#allocation2 + $0x1100] sm:$0xff]
    %v567 = vld [vmem:[#allocation2 + $0x1108] sm:$0xff]
    %v568 = vld [vmem:[#allocation2 + $0x1110] sm:$0xff]
    %v569 = vld [vmem:[#allocation2 + $0x1118] sm:$0xff]
    %v570 = vld [vmem:[#allocation2 + $0x1120] sm:$0xff]
    %v571 = vld [vmem:[#allocation2 + $0x1128] sm:$0xff]
    %v572 = vld [vmem:[#allocation2 + $0x1130] sm:$0xff]
    %v573 = vld [vmem:[#allocation2 + $0x1138] sm:$0xff]
    %v574 = vld [vmem:[#allocation2 + $0x1140] sm:$0xff]
    %v575 = vld [vmem:[#allocation2 + $0x1148] sm:$0xff]
    %v576 = vld [vmem:[#allocation2 + $0x1150] sm:$0xff]
    %v577 = vld [vmem:[#allocation2 + $0x1158] sm:$0xff]
    %v578 = vld [vmem:[#allocation2 + $0x1160] sm:$0xff]
    %v579 = vld [vmem:[#allocation2 + $0x1168] sm:$0xff]
    %v580 = vld [vmem:[#allocation2 + $0x1170] sm:$0xff]
    %v581 = vld [vmem:[#allocation2 + $0x1178] sm:$0xff]
    %v582 = vld [vmem:[#allocation2 + $0x1180] sm:$0xff]
    %v583 = vld [vmem:[#allocation2 + $0x1188] sm:$0xff]
    %v584 = vld [vmem:[#allocation2 + $0x1190] sm:$0xff]
    %v585 = vld [vmem:[#allocation2 + $0x1198] sm:$0xff]
    %v586 = vld [vmem:[#allocation2 + $0x11a0] sm:$0xff]
    %v587 = vld [vmem:[#allocation2 + $0x11a8] sm:$0xff]
    %v588 = vld [vmem:[#allocation2 + $0x11b0] sm:$0xff]
    %v589 = vld [vmem:[#allocation2 + $0x11b8] sm:$0xff]
    %v590 = vld [vmem:[#allocation2 + $0x11c0] sm:$0xff]
    %v591 = vld [vmem:[#allocation2 + $0x11c8] sm:$0xff]
    %v592 = vld [vmem:[#allocation2 + $0x11d0] sm:$0xff]
    %v593 = vld [vmem:[#allocation2 + $0x11d8] sm:$0xff]
    %v594 = vld [vmem:[#allocation2 + $0x11e0] sm:$0xff]
    %v595 = vld [vmem:[#allocation2 + $0x11e8] sm:$0xff]
    %v596 = vld [vmem:[#allocation2 + $0x11f0] sm:$0xff]
    %v597 = vld [vmem:[#allocation2 + $0x11f8] sm:$0xff]
    %v598 = vld [vmem:[#allocation2 + $0x1200] sm:$0xff]
    %v599 = vld [vmem:[#allocation2 + $0x1208] sm:$0xff]
    %v600 = vld [vmem:[#allocation2 + $0x1210] sm:$0xff]
    %v601 = vld [vmem:[#allocation2 + $0x1218] sm:$0xff]
    %v602 = vld [vmem:[#allocation2 + $0x1220] sm:$0xff]
    %v603 = vld [vmem:[#allocation2 + $0x1228] sm:$0xff]
    %v604 = vld [vmem:[#allocation2 + $0x1230] sm:$0xff]
    %v605 = vld [vmem:[#allocation2 + $0x1238] sm:$0xff]
    %v606 = vld [vmem:[#allocation2 + $0x1240] sm:$0xff]
    %v607 = vld [vmem:[#allocation2 + $0x1248] sm:$0xff]
    %v608 = vld [vmem:[#allocation2 + $0x1250] sm:$0xff]
    %v609 = vld [vmem:[#allocation2 + $0x1258] sm:$0xff]
    %v610 = vld [vmem:[#allocation2 + $0x1260] sm:$0xff]
    %v611 = vld [vmem:[#allocation2 + $0x1268] sm:$0xff]
    %v612 = vld [vmem:[#allocation2 + $0x1270] sm:$0xff]
    %v613 = vld [vmem:[#allocation2 + $0x1278] sm:$0xff]
    %v614 = vld [vmem:[#allocation2 + $0x1280] sm:$0xff]
    %v615 = vld [vmem:[#allocation2 + $0x1288] sm:$0xff]
    %v616 = vld [vmem:[#allocation2 + $0x1290] sm:$0xff]
    %v617 = vld [vmem:[#allocation2 + $0x1298] sm:$0xff]
    %v618 = vld [vmem:[#allocation2 + $0x12a0] sm:$0xff]
    %v619 = vld [vmem:[#allocation2 + $0x12a8] sm:$0xff]
    %v620 = vld [vmem:[#allocation2 + $0x12b0] sm:$0xff]
    %v621 = vld [vmem:[#allocation2 + $0x12b8] sm:$0xff]
    %v622 = vld [vmem:[#allocation2 + $0x12c0] sm:$0xff]
    %v623 = vld [vmem:[#allocation2 + $0x12c8] sm:$0xff]
    %v624 = vld [vmem:[#allocation2 + $0x12d0] sm:$0xff]
    %v625 = vld [vmem:[#allocation2 + $0x12d8] sm:$0xff]
    %v626 = vld [vmem:[#allocation2 + $0x12e0] sm:$0xff]
    %v627 = vld [vmem:[#allocation2 + $0x12e8] sm:$0xff]
    %v628 = vld [vmem:[#allocation2 + $0x12f0] sm:$0xff]
    %v629 = vld [vmem:[#allocation2 + $0x12f8] sm:$0xff]
    %v630 = vld [vmem:[#allocation2 + $0x1300] sm:$0xff]
    %v631 = vld [vmem:[#allocation2 + $0x1308] sm:$0xff]
    %v632 = vld [vmem:[#allocation2 + $0x1310] sm:$0xff]
    %v633 = vld [vmem:[#allocation2 + $0x1318] sm:$0xff]
    %v634 = vld [vmem:[#allocation2 + $0x1320] sm:$0xff]
    %v635 = vld [vmem:[#allocation2 + $0x1328] sm:$0xff]
    %v636 = vld [vmem:[#allocation2 + $0x1330] sm:$0xff]
    %v637 = vld [vmem:[#allocation2 + $0x1338] sm:$0xff]
    %v638 = vld [vmem:[#allocation2 + $0x1340] sm:$0xff]
    %v639 = vld [vmem:[#allocation2 + $0x1348] sm:$0xff]
    %v640 = vld [vmem:[#allocation2 + $0x1350] sm:$0xff]
    %v641 = vld [vmem:[#allocation2 + $0x1358] sm:$0xff]
    %v642 = vld [vmem:[#allocation2 + $0x1360] sm:$0xff]
    %v643 = vld [vmem:[#allocation2 + $0x1368] sm:$0xff]
    %v644 = vld [vmem:[#allocation2 + $0x1370] sm:$0xff]
    %v645 = vld [vmem:[#allocation2 + $0x1378] sm:$0xff]
    %v646 = vld [vmem:[#allocation2 + $0x1380] sm:$0xff]
    %v647 = vld [vmem:[#allocation2 + $0x1388] sm:$0xff]
    %v648 = vld [vmem:[#allocation2 + $0x1390] sm:$0xff]
    %v649 = vld [vmem:[#allocation2 + $0x1398] sm:$0xff]
    %v650 = vld [vmem:[#allocation2 + $0x13a0] sm:$0xff]
    %v651 = vld [vmem:[#allocation2 + $0x13a8] sm:$0xff]
    %v652 = vld [vmem:[#allocation2 + $0x13b0] sm:$0xff]
    %v653 = vld [vmem:[#allocation2 + $0x13b8] sm:$0xff]
    %v654 = vld [vmem:[#allocation2 + $0x13c0] sm:$0xff]
    %v655 = vld [vmem:[#allocation2 + $0x13c8] sm:$0xff]
    %v656 = vld [vmem:[#allocation2 + $0x13d0] sm:$0xff]
    %v657 = vld [vmem:[#allocation2 + $0x13d8] sm:$0xff]
    %v658 = vld [vmem:[#allocation2 + $0x13e0] sm:$0xff]
    %v659 = vld [vmem:[#allocation2 + $0x13e8] sm:$0xff]
    %v660 = vld [vmem:[#allocation2 + $0x13f0] sm:$0xff]
    %v661 = vld [vmem:[#allocation2 + $0x13f8] sm:$0xff]
    %v662 = vld [vmem:[#allocation2 + $0x1400] sm:$0xff]
    %v663 = vld [vmem:[#allocation2 + $0x1408] sm:$0xff]
    %v664 = vld [vmem:[#allocation2 + $0x1410] sm:$0xff]
    %v665 = vld [vmem:[#allocation2 + $0x1418] sm:$0xff]
    %v666 = vld [vmem:[#allocation2 + $0x1420] sm:$0xff]
    %v667 = vld [vmem:[#allocation2 + $0x1428] sm:$0xff]
    %v668 = vld [vmem:[#allocation2 + $0x1430] sm:$0xff]
    %v669 = vld [vmem:[#allocation2 + $0x1438] sm:$0xff]
    %v670 = vld [vmem:[#allocation2 + $0x1440] sm:$0xff]
    %v671 = vld [vmem:[#allocation2 + $0x1448] sm:$0xff]
    %v672 = vld [vmem:[#allocation2 + $0x1450] sm:$0xff]
    %v673 = vld [vmem:[#allocation2 + $0x1458] sm:$0xff]
    %v674 = vld [vmem:[#allocation2 + $0x1460] sm:$0xff]
    %v675 = vld [vmem:[#allocation2 + $0x1468] sm:$0xff]
    %v676 = vld [vmem:[#allocation2 + $0x1470] sm:$0xff]
    %v677 = vld [vmem:[#allocation2 + $0x1478] sm:$0xff]
    %v678 = vld [vmem:[#allocation2 + $0x1480] sm:$0xff]
    %v679 = vld [vmem:[#allocation2 + $0x1488] sm:$0xff]
    %v680 = vld [vmem:[#allocation2 + $0x1490] sm:$0xff]
    %v681 = vld [vmem:[#allocation2 + $0x1498] sm:$0xff]
    %v682 = vld [vmem:[#allocation2 + $0x14a0] sm:$0xff]
    %v683 = vld [vmem:[#allocation2 + $0x14a8] sm:$0xff]
    %v684 = vld [vmem:[#allocation2 + $0x14b0] sm:$0xff]
    %v685 = vld [vmem:[#allocation2 + $0x14b8] sm:$0xff]
    %v686 = vld [vmem:[#allocation2 + $0x14c0] sm:$0xff]
    %v687 = vld [vmem:[#allocation2 + $0x14c8] sm:$0xff]
    %v688 = vld [vmem:[#allocation2 + $0x14d0] sm:$0xff]
    %v689 = vld [vmem:[#allocation2 + $0x14d8] sm:$0xff]
    %v690 = vld [vmem:[#allocation2 + $0x14e0] sm:$0xff]
    %v691 = vld [vmem:[#allocation2 + $0x14e8] sm:$0xff]
    %v692 = vld [vmem:[#allocation2 + $0x14f0] sm:$0xff]
    %v693 = vld [vmem:[#allocation2 + $0x14f8] sm:$0xff]
    %v694 = vld [vmem:[#allocation2 + $0x1500] sm:$0xff]
    %v695 = vld [vmem:[#allocation2 + $0x1508] sm:$0xff]
    %v696 = vld [vmem:[#allocation2 + $0x1510] sm:$0xff]
    %v697 = vld [vmem:[#allocation2 + $0x1518] sm:$0xff]
    %v698 = vld [vmem:[#allocation2 + $0x1520] sm:$0xff]
    %v699 = vld [vmem:[#allocation2 + $0x1528] sm:$0xff]
    %v700 = vld [vmem:[#allocation2 + $0x1530] sm:$0xff]
    %v701 = vld [vmem:[#allocation2 + $0x1538] sm:$0xff]
    %v702 = vld [vmem:[#allocation2 + $0x1540] sm:$0xff]
    %v703 = vld [vmem:[#allocation2 + $0x1548] sm:$0xff]
    %v704 = vld [vmem:[#allocation2 + $0x1550] sm:$0xff]
    %v705 = vld [vmem:[#allocation2 + $0x1558] sm:$0xff]
    %v706 = vld [vmem:[#allocation2 + $0x1560] sm:$0xff]
    %v707 = vld [vmem:[#allocation2 + $0x1568] sm:$0xff]
    %v708 = vld [vmem:[#allocation2 + $0x1570] sm:$0xff]
    %v709 = vld [vmem:[#allocation2 + $0x1578] sm:$0xff]
    %v710 = vld [vmem:[#allocation2 + $0x1580] sm:$0xff]
    %v711 = vld [vmem:[#allocation2 + $0x1588] sm:$0xff]
    %v712 = vld [vmem:[#allocation2 + $0x1590] sm:$0xff]
    %v713 = vld [vmem:[#allocation2 + $0x1598] sm:$0xff]
    %v714 = vld [vmem:[#allocation2 + $0x15a0] sm:$0xff]
    %v715 = vld [vmem:[#allocation2 + $0x15a8] sm:$0xff]
    %v716 = vld [vmem:[#allocation2 + $0x15b0] sm:$0xff]
    %v717 = vld [vmem:[#allocation2 + $0x15b8] sm:$0xff]
    %v718 = vld [vmem:[#allocation2 + $0x15c0] sm:$0xff]
    %v719 = vld [vmem:[#allocation2 + $0x15c8] sm:$0xff]
    %v720 = vld [vmem:[#allocation2 + $0x15d0] sm:$0xff]
    %v721 = vld [vmem:[#allocation2 + $0x15d8] sm:$0xff]
    %v722 = vld [vmem:[#allocation2 + $0x15e0] sm:$0xff]
    %v723 = vld [vmem:[#allocation2 + $0x15e8] sm:$0xff]
    %v724 = vld [vmem:[#allocation2 + $0x15f0] sm:$0xff]
    %v725 = vld [vmem:[#allocation2 + $0x15f8] sm:$0xff]
    %v726 = vld [vmem:[#allocation2 + $0x1600] sm:$0xff]
    %v727 = vld [vmem:[#allocation2 + $0x1608] sm:$0xff]
    %v728 = vld [vmem:[#allocation2 + $0x1610] sm:$0xff]
    %v729 = vld [vmem:[#allocation2 + $0x1618] sm:$0xff]
    %v730 = vld [vmem:[#allocation2 + $0x1620] sm:$0xff]
    %v731 = vld [vmem:[#allocation2 + $0x1628] sm:$0xff]
    %v732 = vld [vmem:[#allocation2 + $0x1630] sm:$0xff]
    %v733 = vld [vmem:[#allocation2 + $0x1638] sm:$0xff]
    %v734 = vld [vmem:[#allocation2 + $0x1640] sm:$0xff]
    %v735 = vld [vmem:[#allocation2 + $0x1648] sm:$0xff]
    %v736 = vld [vmem:[#allocation2 + $0x1650] sm:$0xff]
    %v737 = vld [vmem:[#allocation2 + $0x1658] sm:$0xff]
    %v738 = vld [vmem:[#allocation2 + $0x1660] sm:$0xff]
    %v739 = vld [vmem:[#allocation2 + $0x1668] sm:$0xff]
    %v740 = vld [vmem:[#allocation2 + $0x1670] sm:$0xff]
    %v741 = vld [vmem:[#allocation2 + $0x1678] sm:$0xff]
    %v742 = vld [vmem:[#allocation2 + $0x1680] sm:$0xff]
    %v743 = vld [vmem:[#allocation2 + $0x1688] sm:$0xff]
    %v744 = vld [vmem:[#allocation2 + $0x1690] sm:$0xff]
    %v745 = vld [vmem:[#allocation2 + $0x1698] sm:$0xff]
    %v746 = vld [vmem:[#allocation2 + $0x16a0] sm:$0xff]
    %v747 = vld [vmem:[#allocation2 + $0x16a8] sm:$0xff]
    %v748 = vld [vmem:[#allocation2 + $0x16b0] sm:$0xff]
    %v749 = vld [vmem:[#allocation2 + $0x16b8] sm:$0xff]
    %v750 = vld [vmem:[#allocation2 + $0x16c0] sm:$0xff]
    %v751 = vld [vmem:[#allocation2 + $0x16c8] sm:$0xff]
    %v752 = vld [vmem:[#allocation2 + $0x16d0] sm:$0xff]
    %v753 = vld [vmem:[#allocation2 + $0x16d8] sm:$0xff]
    %v754 = vld [vmem:[#allocation2 + $0x16e0] sm:$0xff]
    %v755 = vld [vmem:[#allocation2 + $0x16e8] sm:$0xff]
    %v756 = vld [vmem:[#allocation2 + $0x16f0] sm:$0xff]
    %v757 = vld [vmem:[#allocation2 + $0x16f8] sm:$0xff]
    %v758 = vld [vmem:[#allocation2 + $0x1700] sm:$0xff]
    %v759 = vld [vmem:[#allocation2 + $0x1708] sm:$0xff]
    %v760 = vld [vmem:[#allocation2 + $0x1710] sm:$0xff]
    %v761 = vld [vmem:[#allocation2 + $0x1718] sm:$0xff]
    %v762 = vld [vmem:[#allocation2 + $0x1720] sm:$0xff]
    %v763 = vld [vmem:[#allocation2 + $0x1728] sm:$0xff]
    %v764 = vld [vmem:[#allocation2 + $0x1730] sm:$0xff]
    %v765 = vld [vmem:[#allocation2 + $0x1738] sm:$0xff]
    %v766 = vld [vmem:[#allocation2 + $0x1740] sm:$0xff]
    %v767 = vld [vmem:[#allocation2 + $0x1748] sm:$0xff]
    %v768 = vld [vmem:[#allocation2 + $0x1750] sm:$0xff]
    %v769 = vld [vmem:[#allocation2 + $0x1758] sm:$0xff]
    %v770 = vld [vmem:[#allocation2 + $0x1760] sm:$0xff]
    %v771 = vld [vmem:[#allocation2 + $0x1768] sm:$0xff]
    %v772 = vld [vmem:[#allocation2 + $0x1770] sm:$0xff]
    %v773 = vld [vmem:[#allocation2 + $0x1778] sm:$0xff]
    %v774 = vld [vmem:[#allocation2 + $0x1780] sm:$0xff]
    %v775 = vld [vmem:[#allocation2 + $0x1788] sm:$0xff]
    %v776 = vld [vmem:[#allocation2 + $0x1790] sm:$0xff]
    %v777 = vld [vmem:[#allocation2 + $0x1798] sm:$0xff]
    %v778 = vld [vmem:[#allocation2 + $0x17a0] sm:$0xff]
    %v779 = vld [vmem:[#allocation2 + $0x17a8] sm:$0xff]
    %v780 = vld [vmem:[#allocation2 + $0x17b0] sm:$0xff]
    %v781 = vld [vmem:[#allocation2 + $0x17b8] sm:$0xff]
    %v782 = vld [vmem:[#allocation2 + $0x17c0] sm:$0xff]
    %v783 = vld [vmem:[#allocation2 + $0x17c8] sm:$0xff]
    %v784 = vld [vmem:[#allocation2 + $0x17d0] sm:$0xff]
    %v785 = vld [vmem:[#allocation2 + $0x17d8] sm:$0xff]
    %v786 = vld [vmem:[#allocation2 + $0x17e0] sm:$0xff]
    %v787 = vld [vmem:[#allocation2 + $0x17e8] sm:$0xff]
    %v788 = vld [vmem:[#allocation2 + $0x17f0] sm:$0xff]
    %v789 = vld [vmem:[#allocation2 + $0x17f8] sm:$0xff]
    %v790 = vld [vmem:[#allocation2 + $0x1800] sm:$0xff]
    %v791 = vld [vmem:[#allocation2 + $0x1808] sm:$0xff]
    %v792 = vld [vmem:[#allocation2 + $0x1810] sm:$0xff]
    %v793 = vld [vmem:[#allocation2 + $0x1818] sm:$0xff]
    %v794 = vld [vmem:[#allocation2 + $0x1820] sm:$0xff]
    %v795 = vld [vmem:[#allocation2 + $0x1828] sm:$0xff]
    %v796 = vld [vmem:[#allocation2 + $0x1830] sm:$0xff]
    %v797 = vld [vmem:[#allocation2 + $0x1838] sm:$0xff]
    %v798 = vld [vmem:[#allocation2 + $0x1840] sm:$0xff]
    %v799 = vld [vmem:[#allocation2 + $0x1848] sm:$0xff]
    %v800 = vld [vmem:[#allocation2 + $0x1850] sm:$0xff]
    %v801 = vld [vmem:[#allocation2 + $0x1858] sm:$0xff]
    %v802 = vld [vmem:[#allocation2 + $0x1860] sm:$0xff]
    %v803 = vld [vmem:[#allocation2 + $0x1868] sm:$0xff]
    %v804 = vld [vmem:[#allocation2 + $0x1870] sm:$0xff]
    %v805 = vld [vmem:[#allocation2 + $0x1878] sm:$0xff]
    %v806 = vld [vmem:[#allocation2 + $0x1880] sm:$0xff]
    %v807 = vld [vmem:[#allocation2 + $0x1888] sm:$0xff]
    %v808 = vld [vmem:[#allocation2 + $0x1890] sm:$0xff]
    %v809 = vld [vmem:[#allocation2 + $0x1898] sm:$0xff]
    %v810 = vld [vmem:[#allocation2 + $0x18a0] sm:$0xff]
    %v811 = vld [vmem:[#allocation2 + $0x18a8] sm:$0xff]
    %v812 = vld [vmem:[#allocation2 + $0x18b0] sm:$0xff]
    %v813 = vld [vmem:[#allocation2 + $0x18b8] sm:$0xff]
    %v814 = vld [vmem:[#allocation2 + $0x18c0] sm:$0xff]
    %v815 = vld [vmem:[#allocation2 + $0x18c8] sm:$0xff]
    %v816 = vld [vmem:[#allocation2 + $0x18d0] sm:$0xff]
    %v817 = vld [vmem:[#allocation2 + $0x18d8] sm:$0xff]
    %v818 = vld [vmem:[#allocation2 + $0x18e0] sm:$0xff]
    %v819 = vld [vmem:[#allocation2 + $0x18e8] sm:$0xff]
    %v820 = vld [vmem:[#allocation2 + $0x18f0] sm:$0xff]
    %v821 = vld [vmem:[#allocation2 + $0x18f8] sm:$0xff]
    %v822 = vld [vmem:[#allocation2 + $0x1900] sm:$0xff]
    %v823 = vld [vmem:[#allocation2 + $0x1908] sm:$0xff]
    %v824 = vld [vmem:[#allocation2 + $0x1910] sm:$0xff]
    %v825 = vld [vmem:[#allocation2 + $0x1918] sm:$0xff]
    %v826 = vld [vmem:[#allocation2 + $0x1920] sm:$0xff]
    %v827 = vld [vmem:[#allocation2 + $0x1928] sm:$0xff]
    %v828 = vld [vmem:[#allocation2 + $0x1930] sm:$0xff]
    %v829 = vld [vmem:[#allocation2 + $0x1938] sm:$0xff]
    %v830 = vld [vmem:[#allocation2 + $0x1940] sm:$0xff]
    %v831 = vld [vmem:[#allocation2 + $0x1948] sm:$0xff]
    %v832 = vld [vmem:[#allocation2 + $0x1950] sm:$0xff]
    %v833 = vld [vmem:[#allocation2 + $0x1958] sm:$0xff]
    %v834 = vld [vmem:[#allocation2 + $0x1960] sm:$0xff]
    %v835 = vld [vmem:[#allocation2 + $0x1968] sm:$0xff]
    %v836 = vld [vmem:[#allocation2 + $0x1970] sm:$0xff]
    %v837 = vld [vmem:[#allocation2 + $0x1978] sm:$0xff]
    %v838 = vld [vmem:[#allocation2 + $0x1980] sm:$0xff]
    %v839 = vld [vmem:[#allocation2 + $0x1988] sm:$0xff]
    %v840 = vld [vmem:[#allocation2 + $0x1990] sm:$0xff]
    %v841 = vld [vmem:[#allocation2 + $0x1998] sm:$0xff]
    %v842 = vld [vmem:[#allocation2 + $0x19a0] sm:$0xff]
    %v843 = vld [vmem:[#allocation2 + $0x19a8] sm:$0xff]
    %v844 = vld [vmem:[#allocation2 + $0x19b0] sm:$0xff]
    %v845 = vld [vmem:[#allocation2 + $0x19b8] sm:$0xff]
    %v846 = vld [vmem:[#allocation2 + $0x19c0] sm:$0xff]
    %v847 = vld [vmem:[#allocation2 + $0x19c8] sm:$0xff]
    %v848 = vld [vmem:[#allocation2 + $0x19d0] sm:$0xff]
    %v849 = vld [vmem:[#allocation2 + $0x19d8] sm:$0xff]
    %v850 = vld [vmem:[#allocation2 + $0x19e0] sm:$0xff]
    %v851 = vld [vmem:[#allocation2 + $0x19e8] sm:$0xff]
    %v852 = vld [vmem:[#allocation2 + $0x19f0] sm:$0xff]
    %v853 = vld [vmem:[#allocation2 + $0x19f8] sm:$0xff]
    %v854 = vld [vmem:[#allocation2 + $0x1a00] sm:$0xff]
    %v855 = vld [vmem:[#allocation2 + $0x1a08] sm:$0xff]
    %v856 = vld [vmem:[#allocation2 + $0x1a10] sm:$0xff]
    %v857 = vld [vmem:[#allocation2 + $0x1a18] sm:$0xff]
    %v858 = vld [vmem:[#allocation2 + $0x1a20] sm:$0xff]
    %v859 = vld [vmem:[#allocation2 + $0x1a28] sm:$0xff]
    %v860 = vld [vmem:[#allocation2 + $0x1a30] sm:$0xff]
    %v861 = vld [vmem:[#allocation2 + $0x1a38] sm:$0xff]
    %v862 = vld [vmem:[#allocation2 + $0x1a40] sm:$0xff]
    %v863 = vld [vmem:[#allocation2 + $0x1a48] sm:$0xff]
    %v864 = vld [vmem:[#allocation2 + $0x1a50] sm:$0xff]
    %v865 = vld [vmem:[#allocation2 + $0x1a58] sm:$0xff]
    %v866 = vld [vmem:[#allocation2 + $0x1a60] sm:$0xff]
    %v867 = vld [vmem:[#allocation2 + $0x1a68] sm:$0xff]
    %v868 = vld [vmem:[#allocation2 + $0x1a70] sm:$0xff]
    %v869 = vld [vmem:[#allocation2 + $0x1a78] sm:$0xff]
    %v870 = vld [vmem:[#allocation2 + $0x1a80] sm:$0xff]
    %v871 = vld [vmem:[#allocation2 + $0x1a88] sm:$0xff]
    %v872 = vld [vmem:[#allocation2 + $0x1a90] sm:$0xff]
    %v873 = vld [vmem:[#allocation2 + $0x1a98] sm:$0xff]
    %v874 = vld [vmem:[#allocation2 + $0x1aa0] sm:$0xff]
    %v875 = vld [vmem:[#allocation2 + $0x1aa8] sm:$0xff]
    %v876 = vld [vmem:[#allocation2 + $0x1ab0] sm:$0xff]
    %v877 = vld [vmem:[#allocation2 + $0x1ab8] sm:$0xff]
    %v878 = vld [vmem:[#allocation2 + $0x1ac0] sm:$0xff]
    %v879 = vld [vmem:[#allocation2 + $0x1ac8] sm:$0xff]
    %v880 = vld [vmem:[#allocation2 + $0x1ad0] sm:$0xff]
    %v881 = vld [vmem:[#allocation2 + $0x1ad8] sm:$0xff]
    %v882 = vld [vmem:[#allocation2 + $0x1ae0] sm:$0xff]
    %v883 = vld [vmem:[#allocation2 + $0x1ae8] sm:$0xff]
    %v884 = vld [vmem:[#allocation2 + $0x1af0] sm:$0xff]
    %v885 = vld [vmem:[#allocation2 + $0x1af8] sm:$0xff]
    %v886 = vld [vmem:[#allocation2 + $0x1b00] sm:$0xff]
    %v887 = vld [vmem:[#allocation2 + $0x1b08] sm:$0xff]
    %v888 = vld [vmem:[#allocation2 + $0x1b10] sm:$0xff]
    %v889 = vld [vmem:[#allocation2 + $0x1b18] sm:$0xff]
    %v890 = vld [vmem:[#allocation2 + $0x1b20] sm:$0xff]
    %v891 = vld [vmem:[#allocation2 + $0x1b28] sm:$0xff]
    %v892 = vld [vmem:[#allocation2 + $0x1b30] sm:$0xff]
    %v893 = vld [vmem:[#allocation2 + $0x1b38] sm:$0xff]
    %v894 = vld [vmem:[#allocation2 + $0x1b40] sm:$0xff]
    %v895 = vld [vmem:[#allocation2 + $0x1b48] sm:$0xff]
    %v896 = vld [vmem:[#allocation2 + $0x1b50] sm:$0xff]
    %v897 = vld [vmem:[#allocation2 + $0x1b58] sm:$0xff]
    %v898 = vld [vmem:[#allocation2 + $0x1b60] sm:$0xff]
    %v899 = vld [vmem:[#allocation2 + $0x1b68] sm:$0xff]
    %v900 = vld [vmem:[#allocation2 + $0x1b70] sm:$0xff]
    %v901 = vld [vmem:[#allocation2 + $0x1b78] sm:$0xff]
    %v902 = vld [vmem:[#allocation2 + $0x1b80] sm:$0xff]
    %v903 = vld [vmem:[#allocation2 + $0x1b88] sm:$0xff]
    %v904 = vld [vmem:[#allocation2 + $0x1b90] sm:$0xff]
    %v905 = vld [vmem:[#allocation2 + $0x1b98] sm:$0xff]
    %v906 = vld [vmem:[#allocation2 + $0x1ba0] sm:$0xff]
    %v907 = vld [vmem:[#allocation2 + $0x1ba8] sm:$0xff]
    %v908 = vld [vmem:[#allocation2 + $0x1bb0] sm:$0xff]
    %v909 = vld [vmem:[#allocation2 + $0x1bb8] sm:$0xff]
    %v910 = vld [vmem:[#allocation2 + $0x1bc0] sm:$0xff]
    %v911 = vld [vmem:[#allocation2 + $0x1bc8] sm:$0xff]
    %v912 = vld [vmem:[#allocation2 + $0x1bd0] sm:$0xff]
    %v913 = vld [vmem:[#allocation2 + $0x1bd8] sm:$0xff]
    %v914 = vld [vmem:[#allocation2 + $0x1be0] sm:$0xff]
    %v915 = vld [vmem:[#allocation2 + $0x1be8] sm:$0xff]
    %v916 = vld [vmem:[#allocation2 + $0x1bf0] sm:$0xff]
    %v917 = vld [vmem:[#allocation2 + $0x1bf8] sm:$0xff]
    %v918 = vld [vmem:[#allocation2 + $0x1c00] sm:$0xff]
    %v919 = vld [vmem:[#allocation2 + $0x1c08] sm:$0xff]
    %v920 = vld [vmem:[#allocation2 + $0x1c10] sm:$0xff]
    %v921 = vld [vmem:[#allocation2 + $0x1c18] sm:$0xff]
    %v922 = vld [vmem:[#allocation2 + $0x1c20] sm:$0xff]
    %v923 = vld [vmem:[#allocation2 + $0x1c28] sm:$0xff]
    %v924 = vld [vmem:[#allocation2 + $0x1c30] sm:$0xff]
    %v925 = vld [vmem:[#allocation2 + $0x1c38] sm:$0xff]
    %v926 = vld [vmem:[#allocation2 + $0x1c40] sm:$0xff]
    %v927 = vld [vmem:[#allocation2 + $0x1c48] sm:$0xff]
    %v928 = vld [vmem:[#allocation2 + $0x1c50] sm:$0xff]
    %v929 = vld [vmem:[#allocation2 + $0x1c58] sm:$0xff]
    %v930 = vld [vmem:[#allocation2 + $0x1c60] sm:$0xff]
    %v931 = vld [vmem:[#allocation2 + $0x1c68] sm:$0xff]
    %v932 = vld [vmem:[#allocation2 + $0x1c70] sm:$0xff]
    %v933 = vld [vmem:[#allocation2 + $0x1c78] sm:$0xff]
    %v934 = vld [vmem:[#allocation2 + $0x1c80] sm:$0xff]
    %v935 = vld [vmem:[#allocation2 + $0x1c88] sm:$0xff]
    %v936 = vld [vmem:[#allocation2 + $0x1c90] sm:$0xff]
    %v937 = vld [vmem:[#allocation2 + $0x1c98] sm:$0xff]
    %v938 = vld [vmem:[#allocation2 + $0x1ca0] sm:$0xff]
    %v939 = vld [vmem:[#allocation2 + $0x1ca8] sm:$0xff]
    %v940 = vld [vmem:[#allocation2 + $0x1cb0] sm:$0xff]
    %v941 = vld [vmem:[#allocation2 + $0x1cb8] sm:$0xff]
    %v942 = vld [vmem:[#allocation2 + $0x1cc0] sm:$0xff]
    %v943 = vld [vmem:[#allocation2 + $0x1cc8] sm:$0xff]
    %v944 = vld [vmem:[#allocation2 + $0x1cd0] sm:$0xff]
    %v945 = vld [vmem:[#allocation2 + $0x1cd8] sm:$0xff]
    %v946 = vld [vmem:[#allocation2 + $0x1ce0] sm:$0xff]
    %v947 = vld [vmem:[#allocation2 + $0x1ce8] sm:$0xff]
    %v948 = vld [vmem:[#allocation2 + $0x1cf0] sm:$0xff]
    %v949 = vld [vmem:[#allocation2 + $0x1cf8] sm:$0xff]
    %v950 = vld [vmem:[#allocation2 + $0x1d00] sm:$0xff]
    %v951 = vld [vmem:[#allocation2 + $0x1d08] sm:$0xff]
    %v952 = vld [vmem:[#allocation2 + $0x1d10] sm:$0xff]
    %v953 = vld [vmem:[#allocation2 + $0x1d18] sm:$0xff]
    %v954 = vld [vmem:[#allocation2 + $0x1d20] sm:$0xff]
    %v955 = vld [vmem:[#allocation2 + $0x1d28] sm:$0xff]
    %v956 = vld [vmem:[#allocation2 + $0x1d30] sm:$0xff]
    %v957 = vld [vmem:[#allocation2 + $0x1d38] sm:$0xff]
    %v958 = vld [vmem:[#allocation2 + $0x1d40] sm:$0xff]
    %v959 = vld [vmem:[#allocation2 + $0x1d48] sm:$0xff]
    %v960 = vld [vmem:[#allocation2 + $0x1d50] sm:$0xff]
    %v961 = vld [vmem:[#allocation2 + $0x1d58] sm:$0xff]
    %v962 = vld [vmem:[#allocation2 + $0x1d60] sm:$0xff]
    %v963 = vld [vmem:[#allocation2 + $0x1d68] sm:$0xff]
    %v964 = vld [vmem:[#allocation2 + $0x1d70] sm:$0xff]
    %v965 = vld [vmem:[#allocation2 + $0x1d78] sm:$0xff]
    %v966 = vld [vmem:[#allocation2 + $0x1d80] sm:$0xff]
    %v967 = vld [vmem:[#allocation2 + $0x1d88] sm:$0xff]
    %v968 = vld [vmem:[#allocation2 + $0x1d90] sm:$0xff]
    %v969 = vld [vmem:[#allocation2 + $0x1d98] sm:$0xff]
    %v970 = vld [vmem:[#allocation2 + $0x1da0] sm:$0xff]
    %v971 = vld [vmem:[#allocation2 + $0x1da8] sm:$0xff]
    %v972 = vld [vmem:[#allocation2 + $0x1db0] sm:$0xff]
    %v973 = vld [vmem:[#allocation2 + $0x1db8] sm:$0xff]
    %v974 = vld [vmem:[#allocation2 + $0x1dc0] sm:$0xff]
    %v975 = vld [vmem:[#allocation2 + $0x1dc8] sm:$0xff]
    %v976 = vld [vmem:[#allocation2 + $0x1dd0] sm:$0xff]
    %v977 = vld [vmem:[#allocation2 + $0x1dd8] sm:$0xff]
    %v978 = vld [vmem:[#allocation2 + $0x1de0] sm:$0xff]
    %v979 = vld [vmem:[#allocation2 + $0x1de8] sm:$0xff]
    %v980 = vld [vmem:[#allocation2 + $0x1df0] sm:$0xff]
    %v981 = vld [vmem:[#allocation2 + $0x1df8] sm:$0xff]
    %v982 = vld [vmem:[#allocation2 + $0x1e00] sm:$0xff]
    %v983 = vld [vmem:[#allocation2 + $0x1e08] sm:$0xff]
    %v984 = vld [vmem:[#allocation2 + $0x1e10] sm:$0xff]
    %v985 = vld [vmem:[#allocation2 + $0x1e18] sm:$0xff]
    %v986 = vld [vmem:[#allocation2 + $0x1e20] sm:$0xff]
    %v987 = vld [vmem:[#allocation2 + $0x1e28] sm:$0xff]
    %v988 = vld [vmem:[#allocation2 + $0x1e30] sm:$0xff]
    %v989 = vld [vmem:[#allocation2 + $0x1e38] sm:$0xff]
    %v990 = vld [vmem:[#allocation2 + $0x1e40] sm:$0xff]
    %v991 = vld [vmem:[#allocation2 + $0x1e48] sm:$0xff]
    %v992 = vld [vmem:[#allocation2 + $0x1e50] sm:$0xff]
    %v993 = vld [vmem:[#allocation2 + $0x1e58] sm:$0xff]
    %v994 = vld [vmem:[#allocation2 + $0x1e60] sm:$0xff]
    %v995 = vld [vmem:[#allocation2 + $0x1e68] sm:$0xff]
    %v996 = vld [vmem:[#allocation2 + $0x1e70] sm:$0xff]
    %v997 = vld [vmem:[#allocation2 + $0x1e78] sm:$0xff]
    %v998 = vld [vmem:[#allocation2 + $0x1e80] sm:$0xff]
    %v999 = vld [vmem:[#allocation2 + $0x1e88] sm:$0xff]
    %v1000 = vld [vmem:[#allocation2 + $0x1e90] sm:$0xff]
    %v1001 = vld [vmem:[#allocation2 + $0x1e98] sm:$0xff]
    %v1002 = vld [vmem:[#allocation2 + $0x1ea0] sm:$0xff]
    %v1003 = vld [vmem:[#allocation2 + $0x1ea8] sm:$0xff]
    %v1004 = vld [vmem:[#allocation2 + $0x1eb0] sm:$0xff]
    %v1005 = vld [vmem:[#allocation2 + $0x1eb8] sm:$0xff]
    %v1006 = vld [vmem:[#allocation2 + $0x1ec0] sm:$0xff]
    %v1007 = vld [vmem:[#allocation2 + $0x1ec8] sm:$0xff]
    %v1008 = vld [vmem:[#allocation2 + $0x1ed0] sm:$0xff]
    %v1009 = vld [vmem:[#allocation2 + $0x1ed8] sm:$0xff]
    %v1010 = vld [vmem:[#allocation2 + $0x1ee0] sm:$0xff]
    %v1011 = vld [vmem:[#allocation2 + $0x1ee8] sm:$0xff]
    %v1012 = vld [vmem:[#allocation2 + $0x1ef0] sm:$0xff]
    %v1013 = vld [vmem:[#allocation2 + $0x1ef8] sm:$0xff]
    %v1014 = vld [vmem:[#allocation2 + $0x1f00] sm:$0xff]
    %v1015 = vld [vmem:[#allocation2 + $0x1f08] sm:$0xff]
    %v1016 = vld [vmem:[#allocation2 + $0x1f10] sm:$0xff]
    %v1017 = vld [vmem:[#allocation2 + $0x1f18] sm:$0xff]
    %v1018 = vld [vmem:[#allocation2 + $0x1f20] sm:$0xff]
    %v1019 = vld [vmem:[#allocation2 + $0x1f28] sm:$0xff]
    %v1020 = vld [vmem:[#allocation2 + $0x1f30] sm:$0xff]
    %v1021 = vld [vmem:[#allocation2 + $0x1f38] sm:$0xff]
    %v1022 = vld [vmem:[#allocation2 + $0x1f40] sm:$0xff]
    %v1023 = vld [vmem:[#allocation2 + $0x1f48] sm:$0xff]
    %v1024 = vld [vmem:[#allocation2 + $0x1f50] sm:$0xff]
    %v1025 = vld [vmem:[#allocation2 + $0x1f58] sm:$0xff]
    %v1026 = vld [vmem:[#allocation2 + $0x1f60] sm:$0xff]
    %v1027 = vld [vmem:[#allocation2 + $0x1f68] sm:$0xff]
    %v1028 = vld [vmem:[#allocation2 + $0x1f70] sm:$0xff]
    %v1029 = vld [vmem:[#allocation2 + $0x1f78] sm:$0xff]
    %v1030 = vld [vmem:[#allocation2 + $0x1f80] sm:$0xff]
    %v1031 = vld [vmem:[#allocation2 + $0x1f88] sm:$0xff]
    %v1032 = vld [vmem:[#allocation2 + $0x1f90] sm:$0xff]
    %v1033 = vld [vmem:[#allocation2 + $0x1f98] sm:$0xff]
    %v1034 = vld [vmem:[#allocation2 + $0x1fa0] sm:$0xff]
    %v1035 = vld [vmem:[#allocation2 + $0x1fa8] sm:$0xff]
    %v1036 = vld [vmem:[#allocation2 + $0x1fb0] sm:$0xff]
    %v1037 = vld [vmem:[#allocation2 + $0x1fb8] sm:$0xff]
    %v1038 = vld [vmem:[#allocation2 + $0x1fc0] sm:$0xff]
    %v1039 = vld [vmem:[#allocation2 + $0x1fc8] sm:$0xff]
    %v1040 = vld [vmem:[#allocation2 + $0x1fd0] sm:$0xff]
    %v1041 = vld [vmem:[#allocation2 + $0x1fd8] sm:$0xff]
    %v1042 = vld [vmem:[#allocation2 + $0x1fe0] sm:$0xff]
    %v1043 = vld [vmem:[#allocation2 + $0x1fe8] sm:$0xff]
    %v1044 = vld [vmem:[#allocation2 + $0x1ff0] sm:$0xff]
    %v1045 = vld [vmem:[#allocation2 + $0x1ff8] sm:$0xff]
    %v1046 = vld [vmem:[#allocation2 + $0x2000] sm:$0xff]
    %v1047 = vld [vmem:[#allocation2 + $0x2008] sm:$0xff]
    %v1048 = vld [vmem:[#allocation2 + $0x2010] sm:$0xff]
    %v1049 = vld [vmem:[#allocation2 + $0x2018] sm:$0xff]
    %v1050 = vld [vmem:[#allocation2 + $0x2020] sm:$0xff]
    %v1051 = vld [vmem:[#allocation2 + $0x2028] sm:$0xff]
    %v1052 = vld [vmem:[#allocation2 + $0x2030] sm:$0xff]
    %v1053 = vld [vmem:[#allocation2 + $0x2038] sm:$0xff]
    %v1054 = vld [vmem:[#allocation2 + $0x2040] sm:$0xff]
    %v1055 = vld [vmem:[#allocation2 + $0x2048] sm:$0xff]
    %v1056 = vld [vmem:[#allocation2 + $0x2050] sm:$0xff]
    %v1057 = vld [vmem:[#allocation2 + $0x2058] sm:$0xff]
    %v1058 = vld [vmem:[#allocation2 + $0x2060] sm:$0xff]
    %v1059 = vld [vmem:[#allocation2 + $0x2068] sm:$0xff]
    %v1060 = vld [vmem:[#allocation2 + $0x2070] sm:$0xff]
    %v1061 = vld [vmem:[#allocation2 + $0x2078] sm:$0xff]
    %v1062 = vld [vmem:[#allocation2 + $0x2080] sm:$0xff]
    %v1063 = vld [vmem:[#allocation2 + $0x2088] sm:$0xff]
    %v1064 = vld [vmem:[#allocation2 + $0x2090] sm:$0xff]
    %v1065 = vld [vmem:[#allocation2 + $0x2098] sm:$0xff]
    %v1066 = vld [vmem:[#allocation2 + $0x20a0] sm:$0xff]
    %v1067 = vld [vmem:[#allocation2 + $0x20a8] sm:$0xff]
    %v1068 = vld [vmem:[#allocation2 + $0x20b0] sm:$0xff]
    %v1069 = vld [vmem:[#allocation2 + $0x20b8] sm:$0xff]
    %v1070 = vld [vmem:[#allocation2 + $0x20c0] sm:$0xff]
    %v1071 = vld [vmem:[#allocation2 + $0x20c8] sm:$0xff]
    %v1072 = vld [vmem:[#allocation2 + $0x20d0] sm:$0xff]
    %v1073 = vld [vmem:[#allocation2 + $0x20d8] sm:$0xff]
    %v1074 = vld [vmem:[#allocation2 + $0x20e0] sm:$0xff]
    %v1075 = vld [vmem:[#allocation2 + $0x20e8] sm:$0xff]
    %v1076 = vld [vmem:[#allocation2 + $0x20f0] sm:$0xff]
    %v1077 = vld [vmem:[#allocation2 + $0x20f8] sm:$0xff]
    %v1078 = vld [vmem:[#allocation2 + $0x2100] sm:$0xff]
    %v1079 = vld [vmem:[#allocation2 + $0x2108] sm:$0xff]
    %v1080 = vld [vmem:[#allocation2 + $0x2110] sm:$0xff]
    %v1081 = vld [vmem:[#allocation2 + $0x2118] sm:$0xff]
    %v1082 = vld [vmem:[#allocation2 + $0x2120] sm:$0xff]
    %v1083 = vld [vmem:[#allocation2 + $0x2128] sm:$0xff]
    %v1084 = vld [vmem:[#allocation2 + $0x2130] sm:$0xff]
    %v1085 = vld [vmem:[#allocation2 + $0x2138] sm:$0xff]
    %v1086 = vld [vmem:[#allocation2 + $0x2140] sm:$0xff]
    %v1087 = vld [vmem:[#allocation2 + $0x2148] sm:$0xff]
    %v1088 = vld [vmem:[#allocation2 + $0x2150] sm:$0xff]
    %v1089 = vld [vmem:[#allocation2 + $0x2158] sm:$0xff]
    %v1090 = vld [vmem:[#allocation2 + $0x2160] sm:$0xff]
    %v1091 = vld [vmem:[#allocation2 + $0x2168] sm:$0xff]
    %v1092 = vld [vmem:[#allocation2 + $0x2170] sm:$0xff]
    %v1093 = vld [vmem:[#allocation2 + $0x2178] sm:$0xff]
    %v1094 = vld [vmem:[#allocation2 + $0x2180] sm:$0xff]
    %v1095 = vld [vmem:[#allocation2 + $0x2188] sm:$0xff]
    %v1096 = vld [vmem:[#allocation2 + $0x2190] sm:$0xff]
    %v1097 = vld [vmem:[#allocation2 + $0x2198] sm:$0xff]
    %v1098 = vld [vmem:[#allocation2 + $0x21a0] sm:$0xff]
    %v1099 = vld [vmem:[#allocation2 + $0x21a8] sm:$0xff]
    %v1100 = vld [vmem:[#allocation2 + $0x21b0] sm:$0xff]
    %v1101 = vld [vmem:[#allocation2 + $0x21b8] sm:$0xff]
    %v1102 = vld [vmem:[#allocation2 + $0x21c0] sm:$0xff]
    %v1103 = vld [vmem:[#allocation2 + $0x21c8] sm:$0xff]
    %v1104 = vld [vmem:[#allocation2 + $0x21d0] sm:$0xff]
    %v1105 = vld [vmem:[#allocation2 + $0x21d8] sm:$0xff]
    %v1106 = vld [vmem:[#allocation2 + $0x21e0] sm:$0xff]
    %v1107 = vld [vmem:[#allocation2 + $0x21e8] sm:$0xff]
    %v1108 = vld [vmem:[#allocation2 + $0x21f0] sm:$0xff]
    %v1109 = vld [vmem:[#allocation2 + $0x21f8] sm:$0xff]
    %v1110 = vld [vmem:[#allocation2 + $0x2200] sm:$0xff]
    %v1111 = vld [vmem:[#allocation2 + $0x2208] sm:$0xff]
    %v1112 = vld [vmem:[#allocation2 + $0x2210] sm:$0xff]
    %v1113 = vld [vmem:[#allocation2 + $0x2218] sm:$0xff]
    %v1114 = vld [vmem:[#allocation2 + $0x2220] sm:$0xff]
    %v1115 = vld [vmem:[#allocation2 + $0x2228] sm:$0xff]
    %v1116 = vld [vmem:[#allocation2 + $0x2230] sm:$0xff]
    %v1117 = vld [vmem:[#allocation2 + $0x2238] sm:$0xff]
    %v1118 = vld [vmem:[#allocation2 + $0x2240] sm:$0xff]
    %v1119 = vld [vmem:[#allocation2 + $0x2248] sm:$0xff]
    %v1120 = vld [vmem:[#allocation2 + $0x2250] sm:$0xff]
    %v1121 = vld [vmem:[#allocation2 + $0x2258] sm:$0xff]
    %v1122 = vld [vmem:[#allocation2 + $0x2260] sm:$0xff]
    %v1123 = vld [vmem:[#allocation2 + $0x2268] sm:$0xff]
    %v1124 = vld [vmem:[#allocation2 + $0x2270] sm:$0xff]
    %v1125 = vld [vmem:[#allocation2 + $0x2278] sm:$0xff]
    %v1126 = vld [vmem:[#allocation2 + $0x2280] sm:$0xff]
    %v1127 = vld [vmem:[#allocation2 + $0x2288] sm:$0xff]
    %v1128 = vld [vmem:[#allocation2 + $0x2290] sm:$0xff]
    %v1129 = vld [vmem:[#allocation2 + $0x2298] sm:$0xff]
    %v1130 = vld [vmem:[#allocation2 + $0x22a0] sm:$0xff]
    %v1131 = vld [vmem:[#allocation2 + $0x22a8] sm:$0xff]
    %v1132 = vld [vmem:[#allocation2 + $0x22b0] sm:$0xff]
    %v1133 = vld [vmem:[#allocation2 + $0x22b8] sm:$0xff]
    %v1134 = vld [vmem:[#allocation2 + $0x22c0] sm:$0xff]
    %v1135 = vld [vmem:[#allocation2 + $0x22c8] sm:$0xff]
    %v1136 = vld [vmem:[#allocation2 + $0x22d0] sm:$0xff]
    %v1137 = vld [vmem:[#allocation2 + $0x22d8] sm:$0xff]
    %v1138 = vld [vmem:[#allocation2 + $0x22e0] sm:$0xff]
    %v1139 = vld [vmem:[#allocation2 + $0x22e8] sm:$0xff]
    %v1140 = vld [vmem:[#allocation2 + $0x22f0] sm:$0xff]
    %v1141 = vld [vmem:[#allocation2 + $0x22f8] sm:$0xff]
    %v1142 = vld [vmem:[#allocation2 + $0x2300] sm:$0xff]
    %v1143 = vld [vmem:[#allocation2 + $0x2308] sm:$0xff]
    %v1144 = vld [vmem:[#allocation2 + $0x2310] sm:$0xff]
    %v1145 = vld [vmem:[#allocation2 + $0x2318] sm:$0xff]
    %v1146 = vld [vmem:[#allocation2 + $0x2320] sm:$0xff]
    %v1147 = vld [vmem:[#allocation2 + $0x2328] sm:$0xff]
    %v1148 = vld [vmem:[#allocation2 + $0x2330] sm:$0xff]
    %v1149 = vld [vmem:[#allocation2 + $0x2338] sm:$0xff]
    %v1150 = vld [vmem:[#allocation2 + $0x2340] sm:$0xff]
    %v1151 = vld [vmem:[#allocation2 + $0x2348] sm:$0xff]
    %v1152 = vld [vmem:[#allocation2 + $0x2350] sm:$0xff]
    %v1153 = vld [vmem:[#allocation2 + $0x2358] sm:$0xff]
    %v1154 = vld [vmem:[#allocation2 + $0x2360] sm:$0xff]
    %v1155 = vld [vmem:[#allocation2 + $0x2368] sm:$0xff]
    %v1156 = vld [vmem:[#allocation2 + $0x2370] sm:$0xff]
    %v1157 = vld [vmem:[#allocation2 + $0x2378] sm:$0xff]
    %v1158 = vld [vmem:[#allocation2 + $0x2380] sm:$0xff]
    %v1159 = vld [vmem:[#allocation2 + $0x2388] sm:$0xff]
    %v1160 = vld [vmem:[#allocation2 + $0x2390] sm:$0xff]
    %v1161 = vld [vmem:[#allocation2 + $0x2398] sm:$0xff]
    %v1162 = vld [vmem:[#allocation2 + $0x23a0] sm:$0xff]
    %v1163 = vld [vmem:[#allocation2 + $0x23a8] sm:$0xff]
    %v1164 = vld [vmem:[#allocation2 + $0x23b0] sm:$0xff]
    %v1165 = vld [vmem:[#allocation2 + $0x23b8] sm:$0xff]
    %v1166 = vld [vmem:[#allocation2 + $0x23c0] sm:$0xff]
    %v1167 = vld [vmem:[#allocation2 + $0x23c8] sm:$0xff]
    %v1168 = vld [vmem:[#allocation2 + $0x23d0] sm:$0xff]
    %v1169 = vld [vmem:[#allocation2 + $0x23d8] sm:$0xff]
    %v1170 = vld [vmem:[#allocation2 + $0x23e0] sm:$0xff]
    %v1171 = vld [vmem:[#allocation2 + $0x23e8] sm:$0xff]
    %v1172 = vld [vmem:[#allocation2 + $0x23f0] sm:$0xff]
    %v1173 = vld [vmem:[#allocation2 + $0x23f8] sm:$0xff]
    %v1174 = vld [vmem:[#allocation2 + $0x2400] sm:$0xff]
    %v1175 = vld [vmem:[#allocation2 + $0x2408] sm:$0xff]
    %v1176 = vld [vmem:[#allocation2 + $0x2410] sm:$0xff]
    %v1177 = vld [vmem:[#allocation2 + $0x2418] sm:$0xff]
    %v1178 = vld [vmem:[#allocation2 + $0x2420] sm:$0xff]
    %v1179 = vld [vmem:[#allocation2 + $0x2428] sm:$0xff]
    %v1180 = vld [vmem:[#allocation2 + $0x2430] sm:$0xff]
    %v1181 = vld [vmem:[#allocation2 + $0x2438] sm:$0xff]
    %v1182 = vld [vmem:[#allocation2 + $0x2440] sm:$0xff]
    %v1183 = vld [vmem:[#allocation2 + $0x2448] sm:$0xff]
    %v1184 = vld [vmem:[#allocation2 + $0x2450] sm:$0xff]
    %v1185 = vld [vmem:[#allocation2 + $0x2458] sm:$0xff]
    %v1186 = vld [vmem:[#allocation2 + $0x2460] sm:$0xff]
    %v1187 = vld [vmem:[#allocation2 + $0x2468] sm:$0xff]
    %v1188 = vld [vmem:[#allocation2 + $0x2470] sm:$0xff]
    %v1189 = vld [vmem:[#allocation2 + $0x2478] sm:$0xff]
    %v1190 = vld [vmem:[#allocation2 + $0x2480] sm:$0xff]
    %v1191 = vld [vmem:[#allocation2 + $0x2488] sm:$0xff]
    %v1192 = vld [vmem:[#allocation2 + $0x2490] sm:$0xff]
    %v1193 = vld [vmem:[#allocation2 + $0x2498] sm:$0xff]
    %v1194 = vld [vmem:[#allocation2 + $0x24a0] sm:$0xff]
    %v1195 = vld [vmem:[#allocation2 + $0x24a8] sm:$0xff]
    %v1196 = vld [vmem:[#allocation2 + $0x24b0] sm:$0xff]
    %v1197 = vld [vmem:[#allocation2 + $0x24b8] sm:$0xff]
    %v1198 = vld [vmem:[#allocation2 + $0x24c0] sm:$0xff]
    %v1199 = vld [vmem:[#allocation2 + $0x24c8] sm:$0xff]
    %v1200 = vld [vmem:[#allocation2 + $0x24d0] sm:$0xff]
    %v1201 = vld [vmem:[#allocation2 + $0x24d8] sm:$0xff]
    %v1202 = vld [vmem:[#allocation2 + $0x24e0] sm:$0xff]
    %v1203 = vld [vmem:[#allocation2 + $0x24e8] sm:$0xff]
    %v1204 = vld [vmem:[#allocation2 + $0x24f0] sm:$0xff]
    %v1205 = vld [vmem:[#allocation2 + $0x24f8] sm:$0xff]
    %v1206 = vld [vmem:[#allocation2 + $0x2500] sm:$0xff]
    %v1207 = vld [vmem:[#allocation2 + $0x2508] sm:$0xff]
    %v1208 = vld [vmem:[#allocation2 + $0x2510] sm:$0xff]
    %v1209 = vld [vmem:[#allocation2 + $0x2518] sm:$0xff]
    %v1210 = vld [vmem:[#allocation2 + $0x2520] sm:$0xff]
    %v1211 = vld [vmem:[#allocation2 + $0x2528] sm:$0xff]
    %v1212 = vld [vmem:[#allocation2 + $0x2530] sm:$0xff]
    %v1213 = vld [vmem:[#allocation2 + $0x2538] sm:$0xff]
    %v1214 = vld [vmem:[#allocation2 + $0x2540] sm:$0xff]
    %v1215 = vld [vmem:[#allocation2 + $0x2548] sm:$0xff]
    %v1216 = vld [vmem:[#allocation2 + $0x2550] sm:$0xff]
    %v1217 = vld [vmem:[#allocation2 + $0x2558] sm:$0xff]
    %v1218 = vld [vmem:[#allocation2 + $0x2560] sm:$0xff]
    %v1219 = vld [vmem:[#allocation2 + $0x2568] sm:$0xff]
    %v1220 = vld [vmem:[#allocation2 + $0x2570] sm:$0xff]
    %v1221 = vld [vmem:[#allocation2 + $0x2578] sm:$0xff]
    %v1222 = vld [vmem:[#allocation2 + $0x2580] sm:$0xff]
    %v1223 = vld [vmem:[#allocation2 + $0x2588] sm:$0xff]
    %v1224 = vld [vmem:[#allocation2 + $0x2590] sm:$0xff]
    %v1225 = vld [vmem:[#allocation2 + $0x2598] sm:$0xff]
    %v1226 = vld [vmem:[#allocation2 + $0x25a0] sm:$0xff]
    %v1227 = vld [vmem:[#allocation2 + $0x25a8] sm:$0xff]
    %v1228 = vld [vmem:[#allocation2 + $0x25b0] sm:$0xff]
    %v1229 = vld [vmem:[#allocation2 + $0x25b8] sm:$0xff]
    %v1230 = vld [vmem:[#allocation2 + $0x25c0] sm:$0xff]
    %v1231 = vld [vmem:[#allocation2 + $0x25c8] sm:$0xff]
    %v1232 = vld [vmem:[#allocation2 + $0x25d0] sm:$0xff]
    %v1233 = vld [vmem:[#allocation2 + $0x25d8] sm:$0xff]
    %v1234 = vld [vmem:[#allocation2 + $0x25e0] sm:$0xff]
    %v1235 = vld [vmem:[#allocation2 + $0x25e8] sm:$0xff]
    %v1236 = vld [vmem:[#allocation2 + $0x25f0] sm:$0xff]
    %v1237 = vld [vmem:[#allocation2 + $0x25f8] sm:$0xff]
    %v1238 = vld [vmem:[#allocation2 + $0x2600] sm:$0xff]
    %v1239 = vld [vmem:[#allocation2 + $0x2608] sm:$0xff]
    %v1240 = vld [vmem:[#allocation2 + $0x2610] sm:$0xff]
    %v1241 = vld [vmem:[#allocation2 + $0x2618] sm:$0xff]
    %v1242 = vld [vmem:[#allocation2 + $0x2620] sm:$0xff]
    %v1243 = vld [vmem:[#allocation2 + $0x2628] sm:$0xff]
    %v1244 = vld [vmem:[#allocation2 + $0x2630] sm:$0xff]
    %v1245 = vld [vmem:[#allocation2 + $0x2638] sm:$0xff]
    %v1246 = vld [vmem:[#allocation2 + $0x2640] sm:$0xff]
    %v1247 = vld [vmem:[#allocation2 + $0x2648] sm:$0xff]
    %v1248 = vld [vmem:[#allocation2 + $0x2650] sm:$0xff]
    %v1249 = vld [vmem:[#allocation2 + $0x2658] sm:$0xff]
    %v1250 = vld [vmem:[#allocation2 + $0x2660] sm:$0xff]
    %v1251 = vld [vmem:[#allocation2 + $0x2668] sm:$0xff]
    %v1252 = vld [vmem:[#allocation2 + $0x2670] sm:$0xff]
    %v1253 = vld [vmem:[#allocation2 + $0x2678] sm:$0xff]
    %v1254 = vld [vmem:[#allocation2 + $0x2680] sm:$0xff]
    %v1255 = vld [vmem:[#allocation2 + $0x2688] sm:$0xff]
    %v1256 = vld [vmem:[#allocation2 + $0x2690] sm:$0xff]
    %v1257 = vld [vmem:[#allocation2 + $0x2698] sm:$0xff]
    %v1258 = vld [vmem:[#allocation2 + $0x26a0] sm:$0xff]
    %v1259 = vld [vmem:[#allocation2 + $0x26a8] sm:$0xff]
    %v1260 = vld [vmem:[#allocation2 + $0x26b0] sm:$0xff]
    %v1261 = vld [vmem:[#allocation2 + $0x26b8] sm:$0xff]
    %v1262 = vld [vmem:[#allocation2 + $0x26c0] sm:$0xff]
    %v1263 = vld [vmem:[#allocation2 + $0x26c8] sm:$0xff]
    %v1264 = vld [vmem:[#allocation2 + $0x26d0] sm:$0xff]
    %v1265 = vld [vmem:[#allocation2 + $0x26d8] sm:$0xff]
    %v1266 = vld [vmem:[#allocation2 + $0x26e0] sm:$0xff]
    %v1267 = vld [vmem:[#allocation2 + $0x26e8] sm:$0xff]
    %v1268 = vld [vmem:[#allocation2 + $0x26f0] sm:$0xff]
    %v1269 = vld [vmem:[#allocation2 + $0x26f8] sm:$0xff]
    %v1270 = vld [vmem:[#allocation2 + $0x2700] sm:$0xff]
    %v1271 = vld [vmem:[#allocation2 + $0x2708] sm:$0xff]
    %v1272 = vld [vmem:[#allocation2 + $0x2710] sm:$0xff]
    %v1273 = vld [vmem:[#allocation2 + $0x2718] sm:$0xff]
    %v1274 = vld [vmem:[#allocation2 + $0x2720] sm:$0xff]
    %v1275 = vld [vmem:[#allocation2 + $0x2728] sm:$0xff]
    %v1276 = vld [vmem:[#allocation2 + $0x2730] sm:$0xff]
    %v1277 = vld [vmem:[#allocation2 + $0x2738] sm:$0xff]
    %v1278 = vld [vmem:[#allocation2 + $0x2740] sm:$0xff]
    %v1279 = vld [vmem:[#allocation2 + $0x2748] sm:$0xff]
    %v1280 = vld [vmem:[#allocation2 + $0x2750] sm:$0xff]
    %v1281 = vld [vmem:[#allocation2 + $0x2758] sm:$0xff]
    %v1282 = vld [vmem:[#allocation2 + $0x2760] sm:$0xff]
    %v1283 = vld [vmem:[#allocation2 + $0x2768] sm:$0xff]
    %v1284 = vld [vmem:[#allocation2 + $0x2770] sm:$0xff]
    %v1285 = vld [vmem:[#allocation2 + $0x2778] sm:$0xff]
    %v1286 = vld [vmem:[#allocation2 + $0x2780] sm:$0xff]
    %v1287 = vld [vmem:[#allocation2 + $0x2788] sm:$0xff]
    %v1288 = vld [vmem:[#allocation2 + $0x2790] sm:$0xff]
    %v1289 = vld [vmem:[#allocation2 + $0x2798] sm:$0xff]
    %v1290 = vld [vmem:[#allocation2 + $0x27a0] sm:$0xff]
    %v1291 = vld [vmem:[#allocation2 + $0x27a8] sm:$0xff]
    %v1292 = vld [vmem:[#allocation2 + $0x27b0] sm:$0xff]
    %v1293 = vld [vmem:[#allocation2 + $0x27b8] sm:$0xff]
    %v1294 = vld [vmem:[#allocation2 + $0x27c0] sm:$0xff]
    %v1295 = vld [vmem:[#allocation2 + $0x27c8] sm:$0xff]
    %v1296 = vld [vmem:[#allocation2 + $0x27d0] sm:$0xff]
    %v1297 = vld [vmem:[#allocation2 + $0x27d8] sm:$0xff]
    %v1298 = vld [vmem:[#allocation2 + $0x27e0] sm:$0xff]
    %v1299 = vld [vmem:[#allocation2 + $0x27e8] sm:$0xff]
    %v1300 = vld [vmem:[#allocation2 + $0x27f0] sm:$0xff]
    %v1301 = vld [vmem:[#allocation2 + $0x27f8] sm:$0xff]
    %v1302 = vld [vmem:[#allocation2 + $0x2800] sm:$0xff]
    %v1303 = vld [vmem:[#allocation2 + $0x2808] sm:$0xff]
    %v1304 = vld [vmem:[#allocation2 + $0x2810] sm:$0xff]
    %v1305 = vld [vmem:[#allocation2 + $0x2818] sm:$0xff]
    %v1306 = vld [vmem:[#allocation2 + $0x2820] sm:$0xff]
    %v1307 = vld [vmem:[#allocation2 + $0x2828] sm:$0xff]
    %v1308 = vld [vmem:[#allocation2 + $0x2830] sm:$0xff]
    %v1309 = vld [vmem:[#allocation2 + $0x2838] sm:$0xff]
    %v1310 = vld [vmem:[#allocation2 + $0x2840] sm:$0xff]
    %v1311 = vld [vmem:[#allocation2 + $0x2848] sm:$0xff]
    %v1312 = vld [vmem:[#allocation2 + $0x2850] sm:$0xff]
    %v1313 = vld [vmem:[#allocation2 + $0x2858] sm:$0xff]
    %v1314 = vld [vmem:[#allocation2 + $0x2860] sm:$0xff]
    %v1315 = vld [vmem:[#allocation2 + $0x2868] sm:$0xff]
    %v1316 = vld [vmem:[#allocation2 + $0x2870] sm:$0xff]
    %v1317 = vld [vmem:[#allocation2 + $0x2878] sm:$0xff]
    %v1318 = vld [vmem:[#allocation2 + $0x2880] sm:$0xff]
    %v1319 = vld [vmem:[#allocation2 + $0x2888] sm:$0xff]
    %v1320 = vld [vmem:[#allocation2 + $0x2890] sm:$0xff]
    %v1321 = vld [vmem:[#allocation2 + $0x2898] sm:$0xff]
    %v1322 = vld [vmem:[#allocation2 + $0x28a0] sm:$0xff]
    %v1323 = vld [vmem:[#allocation2 + $0x28a8] sm:$0xff]
    %v1324 = vld [vmem:[#allocation2 + $0x28b0] sm:$0xff]
    %v1325 = vld [vmem:[#allocation2 + $0x28b8] sm:$0xff]
    %v1326 = vld [vmem:[#allocation2 + $0x28c0] sm:$0xff]
    %v1327 = vld [vmem:[#allocation2 + $0x28c8] sm:$0xff]
    %v1328 = vld [vmem:[#allocation2 + $0x28d0] sm:$0xff]
    %v1329 = vld [vmem:[#allocation2 + $0x28d8] sm:$0xff]
    %v1330 = vld [vmem:[#allocation2 + $0x28e0] sm:$0xff]
    %v1331 = vld [vmem:[#allocation2 + $0x28e8] sm:$0xff]
    %v1332 = vld [vmem:[#allocation2 + $0x28f0] sm:$0xff]
    %v1333 = vld [vmem:[#allocation2 + $0x28f8] sm:$0xff]
    %v1334 = vld [vmem:[#allocation2 + $0x2900] sm:$0xff]
    %v1335 = vld [vmem:[#allocation2 + $0x2908] sm:$0xff]
    %v1336 = vld [vmem:[#allocation2 + $0x2910] sm:$0xff]
    %v1337 = vld [vmem:[#allocation2 + $0x2918] sm:$0xff]
    %v1338 = vld [vmem:[#allocation2 + $0x2920] sm:$0xff]
    %v1339 = vld [vmem:[#allocation2 + $0x2928] sm:$0xff]
    %v1340 = vld [vmem:[#allocation2 + $0x2930] sm:$0xff]
    %v1341 = vld [vmem:[#allocation2 + $0x2938] sm:$0xff]
    %v1342 = vld [vmem:[#allocation2 + $0x2940] sm:$0xff]
    %v1343 = vld [vmem:[#allocation2 + $0x2948] sm:$0xff]
    %v1344 = vld [vmem:[#allocation2 + $0x2950] sm:$0xff]
    %v1345 = vld [vmem:[#allocation2 + $0x2958] sm:$0xff]
    %v1346 = vld [vmem:[#allocation2 + $0x2960] sm:$0xff]
    %v1347 = vld [vmem:[#allocation2 + $0x2968] sm:$0xff]
    %v1348 = vld [vmem:[#allocation2 + $0x2970] sm:$0xff]
    %v1349 = vld [vmem:[#allocation2 + $0x2978] sm:$0xff]
    %v1350 = vld [vmem:[#allocation2 + $0x2980] sm:$0xff]
    %v1351 = vld [vmem:[#allocation2 + $0x2988] sm:$0xff]
    %v1352 = vld [vmem:[#allocation2 + $0x2990] sm:$0xff]
    %v1353 = vld [vmem:[#allocation2 + $0x2998] sm:$0xff]
    %v1354 = vld [vmem:[#allocation2 + $0x29a0] sm:$0xff]
    %v1355 = vld [vmem:[#allocation2 + $0x29a8] sm:$0xff]
    %v1356 = vld [vmem:[#allocation2 + $0x29b0] sm:$0xff]
    %v1357 = vld [vmem:[#allocation2 + $0x29b8] sm:$0xff]
    %v1358 = vld [vmem:[#allocation2 + $0x29c0] sm:$0xff]
    %v1359 = vld [vmem:[#allocation2 + $0x29c8] sm:$0xff]
    %v1360 = vld [vmem:[#allocation2 + $0x29d0] sm:$0xff]
    %v1361 = vld [vmem:[#allocation2 + $0x29d8] sm:$0xff]
    %v1362 = vld [vmem:[#allocation2 + $0x29e0] sm:$0xff]
    %v1363 = vld [vmem:[#allocation2 + $0x29e8] sm:$0xff]
    %v1364 = vld [vmem:[#allocation2 + $0x29f0] sm:$0xff]
    %v1365 = vld [vmem:[#allocation2 + $0x29f8] sm:$0xff]
    %v1366 = vld [vmem:[#allocation2 + $0x2a00] sm:$0xff]
    %v1367 = vld [vmem:[#allocation2 + $0x2a08] sm:$0xff]
    %v1368 = vld [vmem:[#allocation2 + $0x2a10] sm:$0xff]
    %v1369 = vld [vmem:[#allocation2 + $0x2a18] sm:$0xff]
    %v1370 = vld [vmem:[#allocation2 + $0x2a20] sm:$0xff]
    %v1371 = vld [vmem:[#allocation2 + $0x2a28] sm:$0xff]
    %v1372 = vld [vmem:[#allocation2 + $0x2a30] sm:$0xff]
    %v1373 = vld [vmem:[#allocation2 + $0x2a38] sm:$0xff]
    %v1374 = vld [vmem:[#allocation2 + $0x2a40] sm:$0xff]
    %v1375 = vld [vmem:[#allocation2 + $0x2a48] sm:$0xff]
    %v1376 = vld [vmem:[#allocation2 + $0x2a50] sm:$0xff]
    %v1377 = vld [vmem:[#allocation2 + $0x2a58] sm:$0xff]
    %v1378 = vld [vmem:[#allocation2 + $0x2a60] sm:$0xff]
    %v1379 = vld [vmem:[#allocation2 + $0x2a68] sm:$0xff]
    %v1380 = vld [vmem:[#allocation2 + $0x2a70] sm:$0xff]
    %v1381 = vld [vmem:[#allocation2 + $0x2a78] sm:$0xff]
    %v1382 = vld [vmem:[#allocation2 + $0x2a80] sm:$0xff]
    %v1383 = vld [vmem:[#allocation2 + $0x2a88] sm:$0xff]
    %v1384 = vld [vmem:[#allocation2 + $0x2a90] sm:$0xff]
    %v1385 = vld [vmem:[#allocation2 + $0x2a98] sm:$0xff]
    %v1386 = vld [vmem:[#allocation2 + $0x2aa0] sm:$0xff]
    %v1387 = vld [vmem:[#allocation2 + $0x2aa8] sm:$0xff]
    %v1388 = vld [vmem:[#allocation2 + $0x2ab0] sm:$0xff]
    %v1389 = vld [vmem:[#allocation2 + $0x2ab8] sm:$0xff]
    %v1390 = vld [vmem:[#allocation2 + $0x2ac0] sm:$0xff]
    %v1391 = vld [vmem:[#allocation2 + $0x2ac8] sm:$0xff]
    %v1392 = vld [vmem:[#allocation2 + $0x2ad0] sm:$0xff]
    %v1393 = vld [vmem:[#allocation2 + $0x2ad8] sm:$0xff]
    %v1394 = vld [vmem:[#allocation2 + $0x2ae0] sm:$0xff]
    %v1395 = vld [vmem:[#allocation2 + $0x2ae8] sm:$0xff]
    %v1396 = vld [vmem:[#allocation2 + $0x2af0] sm:$0xff]
    %v1397 = vld [vmem:[#allocation2 + $0x2af8] sm:$0xff]
    %v1398 = vld [vmem:[#allocation2 + $0x2b00] sm:$0xff]
    %v1399 = vld [vmem:[#allocation2 + $0x2b08] sm:$0xff]
    %v1400 = vld [vmem:[#allocation2 + $0x2b10] sm:$0xff]
    %v1401 = vld [vmem:[#allocation2 + $0x2b18] sm:$0xff]
    %v1402 = vld [vmem:[#allocation2 + $0x2b20] sm:$0xff]
    %v1403 = vld [vmem:[#allocation2 + $0x2b28] sm:$0xff]
    %v1404 = vld [vmem:[#allocation2 + $0x2b30] sm:$0xff]
    %v1405 = vld [vmem:[#allocation2 + $0x2b38] sm:$0xff]
    %v1406 = vld [vmem:[#allocation2 + $0x2b40] sm:$0xff]
    %v1407 = vld [vmem:[#allocation2 + $0x2b48] sm:$0xff]
    %v1408 = vld [vmem:[#allocation2 + $0x2b50] sm:$0xff]
    %v1409 = vld [vmem:[#allocation2 + $0x2b58] sm:$0xff]
    %v1410 = vld [vmem:[#allocation2 + $0x2b60] sm:$0xff]
    %v1411 = vld [vmem:[#allocation2 + $0x2b68] sm:$0xff]
    %v1412 = vld [vmem:[#allocation2 + $0x2b70] sm:$0xff]
    %v1413 = vld [vmem:[#allocation2 + $0x2b78] sm:$0xff]
    %v1414 = vld [vmem:[#allocation2 + $0x2b80] sm:$0xff]
    %v1415 = vld [vmem:[#allocation2 + $0x2b88] sm:$0xff]
    %v1416 = vld [vmem:[#allocation2 + $0x2b90] sm:$0xff]
    %v1417 = vld [vmem:[#allocation2 + $0x2b98] sm:$0xff]
    %v1418 = vld [vmem:[#allocation2 + $0x2ba0] sm:$0xff]
    %v1419 = vld [vmem:[#allocation2 + $0x2ba8] sm:$0xff]
    %v1420 = vld [vmem:[#allocation2 + $0x2bb0] sm:$0xff]
    %v1421 = vld [vmem:[#allocation2 + $0x2bb8] sm:$0xff]
    %v1422 = vld [vmem:[#allocation2 + $0x2bc0] sm:$0xff]
    %v1423 = vld [vmem:[#allocation2 + $0x2bc8] sm:$0xff]
    %v1424 = vld [vmem:[#allocation2 + $0x2bd0] sm:$0xff]
    %v1425 = vld [vmem:[#allocation2 + $0x2bd8] sm:$0xff]
    %v1426 = vld [vmem:[#allocation2 + $0x2be0] sm:$0xff]
    %v1427 = vld [vmem:[#allocation2 + $0x2be8] sm:$0xff]
    %v1428 = vld [vmem:[#allocation2 + $0x2bf0] sm:$0xff]
    %v1429 = vld [vmem:[#allocation2 + $0x2bf8] sm:$0xff]
    %v1430 = vld [vmem:[#allocation2 + $0x2c00] sm:$0xff]
    %v1431 = vld [vmem:[#allocation2 + $0x2c08] sm:$0xff]
    %v1432 = vld [vmem:[#allocation2 + $0x2c10] sm:$0xff]
    %v1433 = vld [vmem:[#allocation2 + $0x2c18] sm:$0xff]
    %v1434 = vld [vmem:[#allocation2 + $0x2c20] sm:$0xff]
    %v1435 = vld [vmem:[#allocation2 + $0x2c28] sm:$0xff]
    %v1436 = vld [vmem:[#allocation2 + $0x2c30] sm:$0xff]
    %v1437 = vld [vmem:[#allocation2 + $0x2c38] sm:$0xff]
    %v1438 = vld [vmem:[#allocation2 + $0x2c40] sm:$0xff]
    %v1439 = vld [vmem:[#allocation2 + $0x2c48] sm:$0xff]
    %v1440 = vld [vmem:[#allocation2 + $0x2c50] sm:$0xff]
    %v1441 = vld [vmem:[#allocation2 + $0x2c58] sm:$0xff]
    %v1442 = vld [vmem:[#allocation2 + $0x2c60] sm:$0xff]
    %v1443 = vld [vmem:[#allocation2 + $0x2c68] sm:$0xff]
    %v1444 = vld [vmem:[#allocation2 + $0x2c70] sm:$0xff]
    %v1445 = vld [vmem:[#allocation2 + $0x2c78] sm:$0xff]
    %v1446 = vld [vmem:[#allocation2 + $0x2c80] sm:$0xff]
    %v1447 = vld [vmem:[#allocation2 + $0x2c88] sm:$0xff]
    %v1448 = vld [vmem:[#allocation2 + $0x2c90] sm:$0xff]
    %v1449 = vld [vmem:[#allocation2 + $0x2c98] sm:$0xff]
    %v1450 = vld [vmem:[#allocation2 + $0x2ca0] sm:$0xff]
    %v1451 = vld [vmem:[#allocation2 + $0x2ca8] sm:$0xff]
    %v1452 = vld [vmem:[#allocation2 + $0x2cb0] sm:$0xff]
    %v1453 = vld [vmem:[#allocation2 + $0x2cb8] sm:$0xff]
    %v1454 = vld [vmem:[#allocation2 + $0x2cc0] sm:$0xff]
    %v1455 = vld [vmem:[#allocation2 + $0x2cc8] sm:$0xff]
    %v1456 = vld [vmem:[#allocation2 + $0x2cd0] sm:$0xff]
    %v1457 = vld [vmem:[#allocation2 + $0x2cd8] sm:$0xff]
    %v1458 = vld [vmem:[#allocation2 + $0x2ce0] sm:$0xff]
    %v1459 = vld [vmem:[#allocation2 + $0x2ce8] sm:$0xff]
    %v1460 = vld [vmem:[#allocation2 + $0x2cf0] sm:$0xff]
    %v1461 = vld [vmem:[#allocation2 + $0x2cf8] sm:$0xff]
    %v1462 = vld [vmem:[#allocation2 + $0x2d00] sm:$0xff]
    %v1463 = vld [vmem:[#allocation2 + $0x2d08] sm:$0xff]
    %v1464 = vld [vmem:[#allocation2 + $0x2d10] sm:$0xff]
    %v1465 = vld [vmem:[#allocation2 + $0x2d18] sm:$0xff]
    %v1466 = vld [vmem:[#allocation2 + $0x2d20] sm:$0xff]
    %v1467 = vld [vmem:[#allocation2 + $0x2d28] sm:$0xff]
    %v1468 = vld [vmem:[#allocation2 + $0x2d30] sm:$0xff]
    %v1469 = vld [vmem:[#allocation2 + $0x2d38] sm:$0xff]
    %v1470 = vld [vmem:[#allocation2 + $0x2d40] sm:$0xff]
    %v1471 = vld [vmem:[#allocation2 + $0x2d48] sm:$0xff]
    %v1472 = vld [vmem:[#allocation2 + $0x2d50] sm:$0xff]
    %v1473 = vld [vmem:[#allocation2 + $0x2d58] sm:$0xff]
    %v1474 = vld [vmem:[#allocation2 + $0x2d60] sm:$0xff]
    %v1475 = vld [vmem:[#allocation2 + $0x2d68] sm:$0xff]
    %v1476 = vld [vmem:[#allocation2 + $0x2d70] sm:$0xff]
    %v1477 = vld [vmem:[#allocation2 + $0x2d78] sm:$0xff]
    %v1478 = vld [vmem:[#allocation2 + $0x2d80] sm:$0xff]
    %v1479 = vld [vmem:[#allocation2 + $0x2d88] sm:$0xff]
    %v1480 = vld [vmem:[#allocation2 + $0x2d90] sm:$0xff]
    %v1481 = vld [vmem:[#allocation2 + $0x2d98] sm:$0xff]
    %v1482 = vld [vmem:[#allocation2 + $0x2da0] sm:$0xff]
    %v1483 = vld [vmem:[#allocation2 + $0x2da8] sm:$0xff]
    %v1484 = vld [vmem:[#allocation2 + $0x2db0] sm:$0xff]
    %v1485 = vld [vmem:[#allocation2 + $0x2db8] sm:$0xff]
    %v1486 = vld [vmem:[#allocation2 + $0x2dc0] sm:$0xff]
    %v1487 = vld [vmem:[#allocation2 + $0x2dc8] sm:$0xff]
    %v1488 = vld [vmem:[#allocation2 + $0x2dd0] sm:$0xff]
    %v1489 = vld [vmem:[#allocation2 + $0x2dd8] sm:$0xff]
    %v1490 = vld [vmem:[#allocation2 + $0x2de0] sm:$0xff]
    %v1491 = vld [vmem:[#allocation2 + $0x2de8] sm:$0xff]
    %v1492 = vld [vmem:[#allocation2 + $0x2df0] sm:$0xff]
    %v1493 = vld [vmem:[#allocation2 + $0x2df8] sm:$0xff]
    %v1494 = vld [vmem:[#allocation2 + $0x2e00] sm:$0xff]
    %v1495 = vld [vmem:[#allocation2 + $0x2e08] sm:$0xff]
    %v1496 = vld [vmem:[#allocation2 + $0x2e10] sm:$0xff]
    %v1497 = vld [vmem:[#allocation2 + $0x2e18] sm:$0xff]
    %v1498 = vld [vmem:[#allocation2 + $0x2e20] sm:$0xff]
    %v1499 = vld [vmem:[#allocation2 + $0x2e28] sm:$0xff]
    %v1500 = vld [vmem:[#allocation2 + $0x2e30] sm:$0xff]
    %v1501 = vld [vmem:[#allocation2 + $0x2e38] sm:$0xff]
    %v1502 = vld [vmem:[#allocation2 + $0x2e40] sm:$0xff]
    %v1503 = vld [vmem:[#allocation2 + $0x2e48] sm:$0xff]
    %v1504 = vld [vmem:[#allocation2 + $0x2e50] sm:$0xff]
    %v1505 = vld [vmem:[#allocation2 + $0x2e58] sm:$0xff]
    %v1506 = vld [vmem:[#allocation2 + $0x2e60] sm:$0xff]
    %v1507 = vld [vmem:[#allocation2 + $0x2e68] sm:$0xff]
    %v1508 = vld [vmem:[#allocation2 + $0x2e70] sm:$0xff]
    %v1509 = vld [vmem:[#allocation2 + $0x2e78] sm:$0xff]
    %v1510 = vld [vmem:[#allocation2 + $0x2e80] sm:$0xff]
    %v1511 = vld [vmem:[#allocation2 + $0x2e88] sm:$0xff]
    %v1512 = vld [vmem:[#allocation2 + $0x2e90] sm:$0xff]
    %v1513 = vld [vmem:[#allocation2 + $0x2e98] sm:$0xff]
    %v1514 = vld [vmem:[#allocation2 + $0x2ea0] sm:$0xff]
    %v1515 = vld [vmem:[#allocation2 + $0x2ea8] sm:$0xff]
    %v1516 = vld [vmem:[#allocation2 + $0x2eb0] sm:$0xff]
    %v1517 = vld [vmem:[#allocation2 + $0x2eb8] sm:$0xff]
    %v1518 = vld [vmem:[#allocation2 + $0x2ec0] sm:$0xff]
    %v1519 = vld [vmem:[#allocation2 + $0x2ec8] sm:$0xff]
    %v1520 = vld [vmem:[#allocation2 + $0x2ed0] sm:$0xff]
    %v1521 = vld [vmem:[#allocation2 + $0x2ed8] sm:$0xff]
    %v1522 = vld [vmem:[#allocation2 + $0x2ee0] sm:$0xff]
    %v1523 = vld [vmem:[#allocation2 + $0x2ee8] sm:$0xff]
    %v1524 = vld [vmem:[#allocation2 + $0x2ef0] sm:$0xff]
    %v1525 = vld [vmem:[#allocation2 + $0x2ef8] sm:$0xff]
    %v1526 = vld [vmem:[#allocation2 + $0x2f00] sm:$0xff]
    %v1527 = vld [vmem:[#allocation2 + $0x2f08] sm:$0xff]
    %v1528 = vld [vmem:[#allocation2 + $0x2f10] sm:$0xff]
    %v1529 = vld [vmem:[#allocation2 + $0x2f18] sm:$0xff]
    %v1530 = vld [vmem:[#allocation2 + $0x2f20] sm:$0xff]
    %v1531 = vld [vmem:[#allocation2 + $0x2f28] sm:$0xff]
    %v1532 = vld [vmem:[#allocation2 + $0x2f30] sm:$0xff]
    %v1533 = vld [vmem:[#allocation2 + $0x2f38] sm:$0xff]
    %v1534 = vld [vmem:[#allocation2 + $0x2f40] sm:$0xff]
    %v1535 = vld [vmem:[#allocation2 + $0x2f48] sm:$0xff]
    %v1536 = vld [vmem:[#allocation2 + $0x2f50] sm:$0xff]
    %v1537 = vld [vmem:[#allocation2 + $0x2f58] sm:$0xff]
    %v1538 = vld [vmem:[#allocation2 + $0x2f60] sm:$0xff]
    %v1539 = vld [vmem:[#allocation2 + $0x2f68] sm:$0xff]
    %v1540 = vld [vmem:[#allocation2 + $0x2f70] sm:$0xff]
    %v1541 = vld [vmem:[#allocation2 + $0x2f78] sm:$0xff]
    %v1542 = vld [vmem:[#allocation2 + $0x2f80] sm:$0xff]
    %v1543 = vld [vmem:[#allocation2 + $0x2f88] sm:$0xff]
    %v1544 = vld [vmem:[#allocation2 + $0x2f90] sm:$0xff]
    %v1545 = vld [vmem:[#allocation2 + $0x2f98] sm:$0xff]
    %v1546 = vld [vmem:[#allocation2 + $0x2fa0] sm:$0xff]
    %v1547 = vld [vmem:[#allocation2 + $0x2fa8] sm:$0xff]
    %v1548 = vld [vmem:[#allocation2 + $0x2fb0] sm:$0xff]
    %v1549 = vld [vmem:[#allocation2 + $0x2fb8] sm:$0xff]
    %v1550 = vld [vmem:[#allocation2 + $0x2fc0] sm:$0xff]
    %v1551 = vld [vmem:[#allocation2 + $0x2fc8] sm:$0xff]
    %v1552 = vld [vmem:[#allocation2 + $0x2fd0] sm:$0xff]
    %v1553 = vld [vmem:[#allocation2 + $0x2fd8] sm:$0xff]
    %v1554 = vld [vmem:[#allocation2 + $0x2fe0] sm:$0xff]
    %v1555 = vld [vmem:[#allocation2 + $0x2fe8] sm:$0xff]
    %v1556 = vld [vmem:[#allocation2 + $0x2ff0] sm:$0xff]
    %v1557 = vld [vmem:[#allocation2 + $0x2ff8] sm:$0xff]
    %v1558 = vadd.f32 %v22, %v23
    %v1559 = vadd.f32 %v24, %v25
    %v1560 = vadd.f32 %v26, %v27
    %v1561 = vadd.f32 %v28, %v29
    %v1562 = vadd.f32 %v30, %v31
    %v1563 = vadd.f32 %v32, %v33
    %v1564 = vadd.f32 %v34, %v35
    %v1565 = vadd.f32 %v36, %v37
    %v1566 = vadd.f32 %v38, %v39
    %v1567 = vadd.f32 %v40, %v41
    %v1568 = vadd.f32 %v42, %v43
    %v1569 = vadd.f32 %v44, %v45
    %v1570 = vadd.f32 %v46, %v47
    %v1571 = vadd.f32 %v48, %v49
    %v1572 = vadd.f32 %v50, %v51
    %v1573 = vadd.f32 %v52, %v53
    %v1574 = vadd.f32 %v54, %v55
    %v1575 = vadd.f32 %v56, %v57
    %v1576 = vadd.f32 %v58, %v59
    %v1577 = vadd.f32 %v60, %v61
    %v1578 = vadd.f32 %v62, %v63
    %v1579 = vadd.f32 %v64, %v65
    %v1580 = vadd.f32 %v66, %v67
    %v1581 = vadd.f32 %v68, %v69
    %v1582 = vadd.f32 %v70, %v71
    %v1583 = vadd.f32 %v72, %v73
    %v1584 = vadd.f32 %v74, %v75
    %v1585 = vadd.f32 %v76, %v77
    %v1586 = vadd.f32 %v78, %v79
    %v1587 = vadd.f32 %v80, %v81
    %v1588 = vadd.f32 %v82, %v83
    %v1589 = vadd.f32 %v84, %v85
    %v1590 = vadd.f32 %v86, %v87
    %v1591 = vadd.f32 %v88, %v89
    %v1592 = vadd.f32 %v90, %v91
    %v1593 = vadd.f32 %v92, %v93
    %v1594 = vadd.f32 %v94, %v95
    %v1595 = vadd.f32 %v96, %v97
    %v1596 = vadd.f32 %v98, %v99
    %v1597 = vadd.f32 %v100, %v101
    %v1598 = vadd.f32 %v102, %v103
    %v1599 = vadd.f32 %v104, %v105
    %v1600 = vadd.f32 %v106, %v107
    %v1601 = vadd.f32 %v108, %v109
    %v1602 = vadd.f32 %v110, %v111
    %v1603 = vadd.f32 %v112, %v113
    %v1604 = vadd.f32 %v114, %v115
    %v1605 = vadd.f32 %v116, %v117
    %v1606 = vadd.f32 %v118, %v119
    %v1607 = vadd.f32 %v120, %v121
    %v1608 = vadd.f32 %v122, %v123
    %v1609 = vadd.f32 %v124, %v125
    %v1610 = vadd.f32 %v126, %v127
    %v1611 = vadd.f32 %v128, %v129
    %v1612 = vadd.f32 %v130, %v131
    %v1613 = vadd.f32 %v132, %v133
    %v1614 = vadd.f32 %v134, %v135
    %v1615 = vadd.f32 %v136, %v137
    %v1616 = vadd.f32 %v138, %v139
    %v1617 = vadd.f32 %v140, %v141
    %v1618 = vadd.f32 %v142, %v143
    %v1619 = vadd.f32 %v144, %v145
    %v1620 = vadd.f32 %v146, %v147
    %v1621 = vadd.f32 %v148, %v149
    %v1622 = vadd.f32 %v150, %v151
    %v1623 = vadd.f32 %v152, %v153
    %v1624 = vadd.f32 %v154, %v155
    %v1625 = vadd.f32 %v156, %v157
    %v1626 = vadd.f32 %v158, %v159
    %v1627 = vadd.f32 %v160, %v161
    %v1628 = vadd.f32 %v162, %v163
    %v1629 = vadd.f32 %v164, %v165
    %v1630 = vadd.f32 %v166, %v167
    %v1631 = vadd.f32 %v168, %v169
    %v1632 = vadd.f32 %v170, %v171
    %v1633 = vadd.f32 %v172, %v173
    %v1634 = vadd.f32 %v174, %v175
    %v1635 = vadd.f32 %v176, %v177
    %v1636 = vadd.f32 %v178, %v179
    %v1637 = vadd.f32 %v180, %v181
    %v1638 = vadd.f32 %v182, %v183
    %v1639 = vadd.f32 %v184, %v185
    %v1640 = vadd.f32 %v186, %v187
    %v1641 = vadd.f32 %v188, %v189
    %v1642 = vadd.f32 %v190, %v191
    %v1643 = vadd.f32 %v192, %v193
    %v1644 = vadd.f32 %v194, %v195
    %v1645 = vadd.f32 %v196, %v197
    %v1646 = vadd.f32 %v198, %v199
    %v1647 = vadd.f32 %v200, %v201
    %v1648 = vadd.f32 %v202, %v203
    %v1649 = vadd.f32 %v204, %v205
    %v1650 = vadd.f32 %v206, %v207
    %v1651 = vadd.f32 %v208, %v209
    %v1652 = vadd.f32 %v210, %v211
    %v1653 = vadd.f32 %v212, %v213
    %v1654 = vadd.f32 %v214, %v215
    %v1655 = vadd.f32 %v216, %v217
    %v1656 = vadd.f32 %v218, %v219
    %v1657 = vadd.f32 %v220, %v221
    %v1658 = vadd.f32 %v222, %v223
    %v1659 = vadd.f32 %v224, %v225
    %v1660 = vadd.f32 %v226, %v227
    %v1661 = vadd.f32 %v228, %v229
    %v1662 = vadd.f32 %v230, %v231
    %v1663 = vadd.f32 %v232, %v233
    %v1664 = vadd.f32 %v234, %v235
    %v1665 = vadd.f32 %v236, %v237
    %v1666 = vadd.f32 %v238, %v239
    %v1667 = vadd.f32 %v240, %v241
    %v1668 = vadd.f32 %v242, %v243
    %v1669 = vadd.f32 %v244, %v245
    %v1670 = vadd.f32 %v246, %v247
    %v1671 = vadd.f32 %v248, %v249
    %v1672 = vadd.f32 %v250, %v251
    %v1673 = vadd.f32 %v252, %v253
    %v1674 = vadd.f32 %v254, %v255
    %v1675 = vadd.f32 %v256, %v257
    %v1676 = vadd.f32 %v258, %v259
    %v1677 = vadd.f32 %v260, %v261
    %v1678 = vadd.f32 %v262, %v263
    %v1679 = vadd.f32 %v264, %v265
    %v1680 = vadd.f32 %v266, %v267
    %v1681 = vadd.f32 %v268, %v269
    %v1682 = vadd.f32 %v270, %v271
    %v1683 = vadd.f32 %v272, %v273
    %v1684 = vadd.f32 %v274, %v275
    %v1685 = vadd.f32 %v276, %v277
    %v1686 = vadd.f32 %v278, %v279
    %v1687 = vadd.f32 %v280, %v281
    %v1688 = vadd.f32 %v282, %v283
    %v1689 = vadd.f32 %v284, %v285
    %v1690 = vadd.f32 %v286, %v287
    %v1691 = vadd.f32 %v288, %v289
    %v1692 = vadd.f32 %v290, %v291
    %v1693 = vadd.f32 %v292, %v293
    %v1694 = vadd.f32 %v294, %v295
    %v1695 = vadd.f32 %v296, %v297
    %v1696 = vadd.f32 %v298, %v299
    %v1697 = vadd.f32 %v300, %v301
    %v1698 = vadd.f32 %v302, %v303
    %v1699 = vadd.f32 %v304, %v305
    %v1700 = vadd.f32 %v306, %v307
    %v1701 = vadd.f32 %v308, %v309
    %v1702 = vadd.f32 %v310, %v311
    %v1703 = vadd.f32 %v312, %v313
    %v1704 = vadd.f32 %v314, %v315
    %v1705 = vadd.f32 %v316, %v317
    %v1706 = vadd.f32 %v318, %v319
    %v1707 = vadd.f32 %v320, %v321
    %v1708 = vadd.f32 %v322, %v323
    %v1709 = vadd.f32 %v324, %v325
    %v1710 = vadd.f32 %v326, %v327
    %v1711 = vadd.f32 %v328, %v329
    %v1712 = vadd.f32 %v330, %v331
    %v1713 = vadd.f32 %v332, %v333
    %v1714 = vadd.f32 %v334, %v335
    %v1715 = vadd.f32 %v336, %v337
    %v1716 = vadd.f32 %v338, %v339
    %v1717 = vadd.f32 %v340, %v341
    %v1718 = vadd.f32 %v342, %v343
    %v1719 = vadd.f32 %v344, %v345
    %v1720 = vadd.f32 %v346, %v347
    %v1721 = vadd.f32 %v348, %v349
    %v1722 = vadd.f32 %v350, %v351
    %v1723 = vadd.f32 %v352, %v353
    %v1724 = vadd.f32 %v354, %v355
    %v1725 = vadd.f32 %v356, %v357
    %v1726 = vadd.f32 %v358, %v359
    %v1727 = vadd.f32 %v360, %v361
    %v1728 = vadd.f32 %v362, %v363
    %v1729 = vadd.f32 %v364, %v365
    %v1730 = vadd.f32 %v366, %v367
    %v1731 = vadd.f32 %v368, %v369
    %v1732 = vadd.f32 %v370, %v371
    %v1733 = vadd.f32 %v372, %v373
    %v1734 = vadd.f32 %v374, %v375
    %v1735 = vadd.f32 %v376, %v377
    %v1736 = vadd.f32 %v378, %v379
    %v1737 = vadd.f32 %v380, %v381
    %v1738 = vadd.f32 %v382, %v383
    %v1739 = vadd.f32 %v384, %v385
    %v1740 = vadd.f32 %v386, %v387
    %v1741 = vadd.f32 %v388, %v389
    %v1742 = vadd.f32 %v390, %v391
    %v1743 = vadd.f32 %v392, %v393
    %v1744 = vadd.f32 %v394, %v395
    %v1745 = vadd.f32 %v396, %v397
    %v1746 = vadd.f32 %v398, %v399
    %v1747 = vadd.f32 %v400, %v401
    %v1748 = vadd.f32 %v402, %v403
    %v1749 = vadd.f32 %v404, %v405
    %v1750 = vadd.f32 %v406, %v407
    %v1751 = vadd.f32 %v408, %v409
    %v1752 = vadd.f32 %v410, %v411
    %v1753 = vadd.f32 %v412, %v413
    %v1754 = vadd.f32 %v414, %v415
    %v1755 = vadd.f32 %v416, %v417
    %v1756 = vadd.f32 %v418, %v419
    %v1757 = vadd.f32 %v420, %v421
    %v1758 = vadd.f32 %v422, %v423
    %v1759 = vadd.f32 %v424, %v425
    %v1760 = vadd.f32 %v426, %v427
    %v1761 = vadd.f32 %v428, %v429
    %v1762 = vadd.f32 %v430, %v431
    %v1763 = vadd.f32 %v432, %v433
    %v1764 = vadd.f32 %v434, %v435
    %v1765 = vadd.f32 %v436, %v437
    %v1766 = vadd.f32 %v438, %v439
    %v1767 = vadd.f32 %v440, %v441
    %v1768 = vadd.f32 %v442, %v443
    %v1769 = vadd.f32 %v444, %v445
    %v1770 = vadd.f32 %v446, %v447
    %v1771 = vadd.f32 %v448, %v449
    %v1772 = vadd.f32 %v450, %v451
    %v1773 = vadd.f32 %v452, %v453
    %v1774 = vadd.f32 %v454, %v455
    %v1775 = vadd.f32 %v456, %v457
    %v1776 = vadd.f32 %v458, %v459
    %v1777 = vadd.f32 %v460, %v461
    %v1778 = vadd.f32 %v462, %v463
    %v1779 = vadd.f32 %v464, %v465
    %v1780 = vadd.f32 %v466, %v467
    %v1781 = vadd.f32 %v468, %v469
    %v1782 = vadd.f32 %v470, %v471
    %v1783 = vadd.f32 %v472, %v473
    %v1784 = vadd.f32 %v474, %v475
    %v1785 = vadd.f32 %v476, %v477
    %v1786 = vadd.f32 %v478, %v479
    %v1787 = vadd.f32 %v480, %v481
    %v1788 = vadd.f32 %v482, %v483
    %v1789 = vadd.f32 %v484, %v485
    %v1790 = vadd.f32 %v486, %v487
    %v1791 = vadd.f32 %v488, %v489
    %v1792 = vadd.f32 %v490, %v491
    %v1793 = vadd.f32 %v492, %v493
    %v1794 = vadd.f32 %v494, %v495
    %v1795 = vadd.f32 %v496, %v497
    %v1796 = vadd.f32 %v498, %v499
    %v1797 = vadd.f32 %v500, %v501
    %v1798 = vadd.f32 %v502, %v503
    %v1799 = vadd.f32 %v504, %v505
    %v1800 = vadd.f32 %v506, %v507
    %v1801 = vadd.f32 %v508, %v509
    %v1802 = vadd.f32 %v510, %v511
    %v1803 = vadd.f32 %v512, %v513
    %v1804 = vadd.f32 %v514, %v515
    %v1805 = vadd.f32 %v516, %v517
    %v1806 = vadd.f32 %v518, %v519
    %v1807 = vadd.f32 %v520, %v521
    %v1808 = vadd.f32 %v522, %v523
    %v1809 = vadd.f32 %v524, %v525
    %v1810 = vadd.f32 %v526, %v527
    %v1811 = vadd.f32 %v528, %v529
    %v1812 = vadd.f32 %v530, %v531
    %v1813 = vadd.f32 %v532, %v533
    %v1814 = vadd.f32 %v534, %v535
    %v1815 = vadd.f32 %v536, %v537
    %v1816 = vadd.f32 %v538, %v539
    %v1817 = vadd.f32 %v540, %v541
    %v1818 = vadd.f32 %v542, %v543
    %v1819 = vadd.f32 %v544, %v545
    %v1820 = vadd.f32 %v546, %v547
    %v1821 = vadd.f32 %v548, %v549
    %v1822 = vadd.f32 %v550, %v551
    %v1823 = vadd.f32 %v552, %v553
    %v1824 = vadd.f32 %v554, %v555
    %v1825 = vadd.f32 %v556, %v557
    %v1826 = vadd.f32 %v558, %v559
    %v1827 = vadd.f32 %v560, %v561
    %v1828 = vadd.f32 %v562, %v563
    %v1829 = vadd.f32 %v564, %v565
    %v1830 = vadd.f32 %v566, %v567
    %v1831 = vadd.f32 %v568, %v569
    %v1832 = vadd.f32 %v570, %v571
    %v1833 = vadd.f32 %v572, %v573
    %v1834 = vadd.f32 %v574, %v575
    %v1835 = vadd.f32 %v576, %v577
    %v1836 = vadd.f32 %v578, %v579
    %v1837 = vadd.f32 %v580, %v581
    %v1838 = vadd.f32 %v582, %v583
    %v1839 = vadd.f32 %v584, %v585
    %v1840 = vadd.f32 %v586, %v587
    %v1841 = vadd.f32 %v588, %v589
    %v1842 = vadd.f32 %v590, %v591
    %v1843 = vadd.f32 %v592, %v593
    %v1844 = vadd.f32 %v594, %v595
    %v1845 = vadd.f32 %v596, %v597
    %v1846 = vadd.f32 %v598, %v599
    %v1847 = vadd.f32 %v600, %v601
    %v1848 = vadd.f32 %v602, %v603
    %v1849 = vadd.f32 %v604, %v605
    %v1850 = vadd.f32 %v606, %v607
    %v1851 = vadd.f32 %v608, %v609
    %v1852 = vadd.f32 %v610, %v611
    %v1853 = vadd.f32 %v612, %v613
    %v1854 = vadd.f32 %v614, %v615
    %v1855 = vadd.f32 %v616, %v617
    %v1856 = vadd.f32 %v618, %v619
    %v1857 = vadd.f32 %v620, %v621
    %v1858 = vadd.f32 %v622, %v623
    %v1859 = vadd.f32 %v624, %v625
    %v1860 = vadd.f32 %v626, %v627
    %v1861 = vadd.f32 %v628, %v629
    %v1862 = vadd.f32 %v630, %v631
    %v1863 = vadd.f32 %v632, %v633
    %v1864 = vadd.f32 %v634, %v635
    %v1865 = vadd.f32 %v636, %v637
    %v1866 = vadd.f32 %v638, %v639
    %v1867 = vadd.f32 %v640, %v641
    %v1868 = vadd.f32 %v642, %v643
    %v1869 = vadd.f32 %v644, %v645
    %v1870 = vadd.f32 %v646, %v647
    %v1871 = vadd.f32 %v648, %v649
    %v1872 = vadd.f32 %v650, %v651
    %v1873 = vadd.f32 %v652, %v653
    %v1874 = vadd.f32 %v654, %v655
    %v1875 = vadd.f32 %v656, %v657
    %v1876 = vadd.f32 %v658, %v659
    %v1877 = vadd.f32 %v660, %v661
    %v1878 = vadd.f32 %v662, %v663
    %v1879 = vadd.f32 %v664, %v665
    %v1880 = vadd.f32 %v666, %v667
    %v1881 = vadd.f32 %v668, %v669
    %v1882 = vadd.f32 %v670, %v671
    %v1883 = vadd.f32 %v672, %v673
    %v1884 = vadd.f32 %v674, %v675
    %v1885 = vadd.f32 %v676, %v677
    %v1886 = vadd.f32 %v678, %v679
    %v1887 = vadd.f32 %v680, %v681
    %v1888 = vadd.f32 %v682, %v683
    %v1889 = vadd.f32 %v684, %v685
    %v1890 = vadd.f32 %v686, %v687
    %v1891 = vadd.f32 %v688, %v689
    %v1892 = vadd.f32 %v690, %v691
    %v1893 = vadd.f32 %v692, %v693
    %v1894 = vadd.f32 %v694, %v695
    %v1895 = vadd.f32 %v696, %v697
    %v1896 = vadd.f32 %v698, %v699
    %v1897 = vadd.f32 %v700, %v701
    %v1898 = vadd.f32 %v702, %v703
    %v1899 = vadd.f32 %v704, %v705
    %v1900 = vadd.f32 %v706, %v707
    %v1901 = vadd.f32 %v708, %v709
    %v1902 = vadd.f32 %v710, %v711
    %v1903 = vadd.f32 %v712, %v713
    %v1904 = vadd.f32 %v714, %v715
    %v1905 = vadd.f32 %v716, %v717
    %v1906 = vadd.f32 %v718, %v719
    %v1907 = vadd.f32 %v720, %v721
    %v1908 = vadd.f32 %v722, %v723
    %v1909 = vadd.f32 %v724, %v725
    %v1910 = vadd.f32 %v726, %v727
    %v1911 = vadd.f32 %v728, %v729
    %v1912 = vadd.f32 %v730, %v731
    %v1913 = vadd.f32 %v732, %v733
    %v1914 = vadd.f32 %v734, %v735
    %v1915 = vadd.f32 %v736, %v737
    %v1916 = vadd.f32 %v738, %v739
    %v1917 = vadd.f32 %v740, %v741
    %v1918 = vadd.f32 %v742, %v743
    %v1919 = vadd.f32 %v744, %v745
    %v1920 = vadd.f32 %v746, %v747
    %v1921 = vadd.f32 %v748, %v749
    %v1922 = vadd.f32 %v750, %v751
    %v1923 = vadd.f32 %v752, %v753
    %v1924 = vadd.f32 %v754, %v755
    %v1925 = vadd.f32 %v756, %v757
    %v1926 = vadd.f32 %v758, %v759
    %v1927 = vadd.f32 %v760, %v761
    %v1928 = vadd.f32 %v762, %v763
    %v1929 = vadd.f32 %v764, %v765
    %v1930 = vadd.f32 %v766, %v767
    %v1931 = vadd.f32 %v768, %v769
    %v1932 = vadd.f32 %v770, %v771
    %v1933 = vadd.f32 %v772, %v773
    %v1934 = vadd.f32 %v774, %v775
    %v1935 = vadd.f32 %v776, %v777
    %v1936 = vadd.f32 %v778, %v779
    %v1937 = vadd.f32 %v780, %v781
    %v1938 = vadd.f32 %v782, %v783
    %v1939 = vadd.f32 %v784, %v785
    %v1940 = vadd.f32 %v786, %v787
    %v1941 = vadd.f32 %v788, %v789
    %v1942 = vadd.f32 %v790, %v791
    %v1943 = vadd.f32 %v792, %v793
    %v1944 = vadd.f32 %v794, %v795
    %v1945 = vadd.f32 %v796, %v797
    %v1946 = vadd.f32 %v798, %v799
    %v1947 = vadd.f32 %v800, %v801
    %v1948 = vadd.f32 %v802, %v803
    %v1949 = vadd.f32 %v804, %v805
    %v1950 = vadd.f32 %v806, %v807
    %v1951 = vadd.f32 %v808, %v809
    %v1952 = vadd.f32 %v810, %v811
    %v1953 = vadd.f32 %v812, %v813
    %v1954 = vadd.f32 %v814, %v815
    %v1955 = vadd.f32 %v816, %v817
    %v1956 = vadd.f32 %v818, %v819
    %v1957 = vadd.f32 %v820, %v821
    %v1958 = vadd.f32 %v822, %v823
    %v1959 = vadd.f32 %v824, %v825
    %v1960 = vadd.f32 %v826, %v827
    %v1961 = vadd.f32 %v828, %v829
    %v1962 = vadd.f32 %v830, %v831
    %v1963 = vadd.f32 %v832, %v833
    %v1964 = vadd.f32 %v834, %v835
    %v1965 = vadd.f32 %v836, %v837
    %v1966 = vadd.f32 %v838, %v839
    %v1967 = vadd.f32 %v840, %v841
    %v1968 = vadd.f32 %v842, %v843
    %v1969 = vadd.f32 %v844, %v845
    %v1970 = vadd.f32 %v846, %v847
    %v1971 = vadd.f32 %v848, %v849
    %v1972 = vadd.f32 %v850, %v851
    %v1973 = vadd.f32 %v852, %v853
    %v1974 = vadd.f32 %v854, %v855
    %v1975 = vadd.f32 %v856, %v857
    %v1976 = vadd.f32 %v858, %v859
    %v1977 = vadd.f32 %v860, %v861
    %v1978 = vadd.f32 %v862, %v863
    %v1979 = vadd.f32 %v864, %v865
    %v1980 = vadd.f32 %v866, %v867
    %v1981 = vadd.f32 %v868, %v869
    %v1982 = vadd.f32 %v870, %v871
    %v1983 = vadd.f32 %v872, %v873
    %v1984 = vadd.f32 %v874, %v875
    %v1985 = vadd.f32 %v876, %v877
    %v1986 = vadd.f32 %v878, %v879
    %v1987 = vadd.f32 %v880, %v881
    %v1988 = vadd.f32 %v882, %v883
    %v1989 = vadd.f32 %v884, %v885
    %v1990 = vadd.f32 %v886, %v887
    %v1991 = vadd.f32 %v888, %v889
    %v1992 = vadd.f32 %v890, %v891
    %v1993 = vadd.f32 %v892, %v893
    %v1994 = vadd.f32 %v894, %v895
    %v1995 = vadd.f32 %v896, %v897
    %v1996 = vadd.f32 %v898, %v899
    %v1997 = vadd.f32 %v900, %v901
    %v1998 = vadd.f32 %v902, %v903
    %v1999 = vadd.f32 %v904, %v905
    %v2000 = vadd.f32 %v906, %v907
    %v2001 = vadd.f32 %v908, %v909
    %v2002 = vadd.f32 %v910, %v911
    %v2003 = vadd.f32 %v912, %v913
    %v2004 = vadd.f32 %v914, %v915
    %v2005 = vadd.f32 %v916, %v917
    %v2006 = vadd.f32 %v918, %v919
    %v2007 = vadd.f32 %v920, %v921
    %v2008 = vadd.f32 %v922, %v923
    %v2009 = vadd.f32 %v924, %v925
    %v2010 = vadd.f32 %v926, %v927
    %v2011 = vadd.f32 %v928, %v929
    %v2012 = vadd.f32 %v930, %v931
    %v2013 = vadd.f32 %v932, %v933
    %v2014 = vadd.f32 %v934, %v935
    %v2015 = vadd.f32 %v936, %v937
    %v2016 = vadd.f32 %v938, %v939
    %v2017 = vadd.f32 %v940, %v941
    %v2018 = vadd.f32 %v942, %v943
    %v2019 = vadd.f32 %v944, %v945
    %v2020 = vadd.f32 %v946, %v947
    %v2021 = vadd.f32 %v948, %v949
    %v2022 = vadd.f32 %v950, %v951
    %v2023 = vadd.f32 %v952, %v953
    %v2024 = vadd.f32 %v954, %v955
    %v2025 = vadd.f32 %v956, %v957
    %v2026 = vadd.f32 %v958, %v959
    %v2027 = vadd.f32 %v960, %v961
    %v2028 = vadd.f32 %v962, %v963
    %v2029 = vadd.f32 %v964, %v965
    %v2030 = vadd.f32 %v966, %v967
    %v2031 = vadd.f32 %v968, %v969
    %v2032 = vadd.f32 %v970, %v971
    %v2033 = vadd.f32 %v972, %v973
    %v2034 = vadd.f32 %v974, %v975
    %v2035 = vadd.f32 %v976, %v977
    %v2036 = vadd.f32 %v978, %v979
    %v2037 = vadd.f32 %v980, %v981
    %v2038 = vadd.f32 %v982, %v983
    %v2039 = vadd.f32 %v984, %v985
    %v2040 = vadd.f32 %v986, %v987
    %v2041 = vadd.f32 %v988, %v989
    %v2042 = vadd.f32 %v990, %v991
    %v2043 = vadd.f32 %v992, %v993
    %v2044 = vadd.f32 %v994, %v995
    %v2045 = vadd.f32 %v996, %v997
    %v2046 = vadd.f32 %v998, %v999
    %v2047 = vadd.f32 %v1000, %v1001
    %v2048 = vadd.f32 %v1002, %v1003
    %v2049 = vadd.f32 %v1004, %v1005
    %v2050 = vadd.f32 %v1006, %v1007
    %v2051 = vadd.f32 %v1008, %v1009
    %v2052 = vadd.f32 %v1010, %v1011
    %v2053 = vadd.f32 %v1012, %v1013
    %v2054 = vadd.f32 %v1014, %v1015
    %v2055 = vadd.f32 %v1016, %v1017
    %v2056 = vadd.f32 %v1018, %v1019
    %v2057 = vadd.f32 %v1020, %v1021
    %v2058 = vadd.f32 %v1022, %v1023
    %v2059 = vadd.f32 %v1024, %v1025
    %v2060 = vadd.f32 %v1026, %v1027
    %v2061 = vadd.f32 %v1028, %v1029
    %v2062 = vadd.f32 %v1030, %v1031
    %v2063 = vadd.f32 %v1032, %v1033
    %v2064 = vadd.f32 %v1034, %v1035
    %v2065 = vadd.f32 %v1036, %v1037
    %v2066 = vadd.f32 %v1038, %v1039
    %v2067 = vadd.f32 %v1040, %v1041
    %v2068 = vadd.f32 %v1042, %v1043
    %v2069 = vadd.f32 %v1044, %v1045
    %v2070 = vadd.f32 %v1046, %v1047
    %v2071 = vadd.f32 %v1048, %v1049
    %v2072 = vadd.f32 %v1050, %v1051
    %v2073 = vadd.f32 %v1052, %v1053
    %v2074 = vadd.f32 %v1054, %v1055
    %v2075 = vadd.f32 %v1056, %v1057
    %v2076 = vadd.f32 %v1058, %v1059
    %v2077 = vadd.f32 %v1060, %v1061
    %v2078 = vadd.f32 %v1062, %v1063
    %v2079 = vadd.f32 %v1064, %v1065
    %v2080 = vadd.f32 %v1066, %v1067
    %v2081 = vadd.f32 %v1068, %v1069
    %v2082 = vadd.f32 %v1070, %v1071
    %v2083 = vadd.f32 %v1072, %v1073
    %v2084 = vadd.f32 %v1074, %v1075
    %v2085 = vadd.f32 %v1076, %v1077
    %v2086 = vadd.f32 %v1078, %v1079
    %v2087 = vadd.f32 %v1080, %v1081
    %v2088 = vadd.f32 %v1082, %v1083
    %v2089 = vadd.f32 %v1084, %v1085
    %v2090 = vadd.f32 %v1086, %v1087
    %v2091 = vadd.f32 %v1088, %v1089
    %v2092 = vadd.f32 %v1090, %v1091
    %v2093 = vadd.f32 %v1092, %v1093
    %v2094 = vadd.f32 %v1094, %v1095
    %v2095 = vadd.f32 %v1096, %v1097
    %v2096 = vadd.f32 %v1098, %v1099
    %v2097 = vadd.f32 %v1100, %v1101
    %v2098 = vadd.f32 %v1102, %v1103
    %v2099 = vadd.f32 %v1104, %v1105
    %v2100 = vadd.f32 %v1106, %v1107
    %v2101 = vadd.f32 %v1108, %v1109
    %v2102 = vadd.f32 %v1110, %v1111
    %v2103 = vadd.f32 %v1112, %v1113
    %v2104 = vadd.f32 %v1114, %v1115
    %v2105 = vadd.f32 %v1116, %v1117
    %v2106 = vadd.f32 %v1118, %v1119
    %v2107 = vadd.f32 %v1120, %v1121
    %v2108 = vadd.f32 %v1122, %v1123
    %v2109 = vadd.f32 %v1124, %v1125
    %v2110 = vadd.f32 %v1126, %v1127
    %v2111 = vadd.f32 %v1128, %v1129
    %v2112 = vadd.f32 %v1130, %v1131
    %v2113 = vadd.f32 %v1132, %v1133
    %v2114 = vadd.f32 %v1134, %v1135
    %v2115 = vadd.f32 %v1136, %v1137
    %v2116 = vadd.f32 %v1138, %v1139
    %v2117 = vadd.f32 %v1140, %v1141
    %v2118 = vadd.f32 %v1142, %v1143
    %v2119 = vadd.f32 %v1144, %v1145
    %v2120 = vadd.f32 %v1146, %v1147
    %v2121 = vadd.f32 %v1148, %v1149
    %v2122 = vadd.f32 %v1150, %v1151
    %v2123 = vadd.f32 %v1152, %v1153
    %v2124 = vadd.f32 %v1154, %v1155
    %v2125 = vadd.f32 %v1156, %v1157
    %v2126 = vadd.f32 %v1158, %v1159
    %v2127 = vadd.f32 %v1160, %v1161
    %v2128 = vadd.f32 %v1162, %v1163
    %v2129 = vadd.f32 %v1164, %v1165
    %v2130 = vadd.f32 %v1166, %v1167
    %v2131 = vadd.f32 %v1168, %v1169
    %v2132 = vadd.f32 %v1170, %v1171
    %v2133 = vadd.f32 %v1172, %v1173
    %v2134 = vadd.f32 %v1174, %v1175
    %v2135 = vadd.f32 %v1176, %v1177
    %v2136 = vadd.f32 %v1178, %v1179
    %v2137 = vadd.f32 %v1180, %v1181
    %v2138 = vadd.f32 %v1182, %v1183
    %v2139 = vadd.f32 %v1184, %v1185
    %v2140 = vadd.f32 %v1186, %v1187
    %v2141 = vadd.f32 %v1188, %v1189
    %v2142 = vadd.f32 %v1190, %v1191
    %v2143 = vadd.f32 %v1192, %v1193
    %v2144 = vadd.f32 %v1194, %v1195
    %v2145 = vadd.f32 %v1196, %v1197
    %v2146 = vadd.f32 %v1198, %v1199
    %v2147 = vadd.f32 %v1200, %v1201
    %v2148 = vadd.f32 %v1202, %v1203
    %v2149 = vadd.f32 %v1204, %v1205
    %v2150 = vadd.f32 %v1206, %v1207
    %v2151 = vadd.f32 %v1208, %v1209
    %v2152 = vadd.f32 %v1210, %v1211
    %v2153 = vadd.f32 %v1212, %v1213
    %v2154 = vadd.f32 %v1214, %v1215
    %v2155 = vadd.f32 %v1216, %v1217
    %v2156 = vadd.f32 %v1218, %v1219
    %v2157 = vadd.f32 %v1220, %v1221
    %v2158 = vadd.f32 %v1222, %v1223
    %v2159 = vadd.f32 %v1224, %v1225
    %v2160 = vadd.f32 %v1226, %v1227
    %v2161 = vadd.f32 %v1228, %v1229
    %v2162 = vadd.f32 %v1230, %v1231
    %v2163 = vadd.f32 %v1232, %v1233
    %v2164 = vadd.f32 %v1234, %v1235
    %v2165 = vadd.f32 %v1236, %v1237
    %v2166 = vadd.f32 %v1238, %v1239
    %v2167 = vadd.f32 %v1240, %v1241
    %v2168 = vadd.f32 %v1242, %v1243
    %v2169 = vadd.f32 %v1244, %v1245
    %v2170 = vadd.f32 %v1246, %v1247
    %v2171 = vadd.f32 %v1248, %v1249
    %v2172 = vadd.f32 %v1250, %v1251
    %v2173 = vadd.f32 %v1252, %v1253
    %v2174 = vadd.f32 %v1254, %v1255
    %v2175 = vadd.f32 %v1256, %v1257
    %v2176 = vadd.f32 %v1258, %v1259
    %v2177 = vadd.f32 %v1260, %v1261
    %v2178 = vadd.f32 %v1262, %v1263
    %v2179 = vadd.f32 %v1264, %v1265
    %v2180 = vadd.f32 %v1266, %v1267
    %v2181 = vadd.f32 %v1268, %v1269
    %v2182 = vadd.f32 %v1270, %v1271
    %v2183 = vadd.f32 %v1272, %v1273
    %v2184 = vadd.f32 %v1274, %v1275
    %v2185 = vadd.f32 %v1276, %v1277
    %v2186 = vadd.f32 %v1278, %v1279
    %v2187 = vadd.f32 %v1280, %v1281
    %v2188 = vadd.f32 %v1282, %v1283
    %v2189 = vadd.f32 %v1284, %v1285
    %v2190 = vadd.f32 %v1286, %v1287
    %v2191 = vadd.f32 %v1288, %v1289
    %v2192 = vadd.f32 %v1290, %v1291
    %v2193 = vadd.f32 %v1292, %v1293
    %v2194 = vadd.f32 %v1294, %v1295
    %v2195 = vadd.f32 %v1296, %v1297
    %v2196 = vadd.f32 %v1298, %v1299
    %v2197 = vadd.f32 %v1300, %v1301
    %v2198 = vadd.f32 %v1302, %v1303
    %v2199 = vadd.f32 %v1304, %v1305
    %v2200 = vadd.f32 %v1306, %v1307
    %v2201 = vadd.f32 %v1308, %v1309
    %v2202 = vadd.f32 %v1310, %v1311
    %v2203 = vadd.f32 %v1312, %v1313
    %v2204 = vadd.f32 %v1314, %v1315
    %v2205 = vadd.f32 %v1316, %v1317
    %v2206 = vadd.f32 %v1318, %v1319
    %v2207 = vadd.f32 %v1320, %v1321
    %v2208 = vadd.f32 %v1322, %v1323
    %v2209 = vadd.f32 %v1324, %v1325
    %v2210 = vadd.f32 %v1326, %v1327
    %v2211 = vadd.f32 %v1328, %v1329
    %v2212 = vadd.f32 %v1330, %v1331
    %v2213 = vadd.f32 %v1332, %v1333
    %v2214 = vadd.f32 %v1334, %v1335
    %v2215 = vadd.f32 %v1336, %v1337
    %v2216 = vadd.f32 %v1338, %v1339
    %v2217 = vadd.f32 %v1340, %v1341
    %v2218 = vadd.f32 %v1342, %v1343
    %v2219 = vadd.f32 %v1344, %v1345
    %v2220 = vadd.f32 %v1346, %v1347
    %v2221 = vadd.f32 %v1348, %v1349
    %v2222 = vadd.f32 %v1350, %v1351
    %v2223 = vadd.f32 %v1352, %v1353
    %v2224 = vadd.f32 %v1354, %v1355
    %v2225 = vadd.f32 %v1356, %v1357
    %v2226 = vadd.f32 %v1358, %v1359
    %v2227 = vadd.f32 %v1360, %v1361
    %v2228 = vadd.f32 %v1362, %v1363
    %v2229 = vadd.f32 %v1364, %v1365
    %v2230 = vadd.f32 %v1366, %v1367
    %v2231 = vadd.f32 %v1368, %v1369
    %v2232 = vadd.f32 %v1370, %v1371
    %v2233 = vadd.f32 %v1372, %v1373
    %v2234 = vadd.f32 %v1374, %v1375
    %v2235 = vadd.f32 %v1376, %v1377
    %v2236 = vadd.f32 %v1378, %v1379
    %v2237 = vadd.f32 %v1380, %v1381
    %v2238 = vadd.f32 %v1382, %v1383
    %v2239 = vadd.f32 %v1384, %v1385
    %v2240 = vadd.f32 %v1386, %v1387
    %v2241 = vadd.f32 %v1388, %v1389
    %v2242 = vadd.f32 %v1390, %v1391
    %v2243 = vadd.f32 %v1392, %v1393
    %v2244 = vadd.f32 %v1394, %v1395
    %v2245 = vadd.f32 %v1396, %v1397
    %v2246 = vadd.f32 %v1398, %v1399
    %v2247 = vadd.f32 %v1400, %v1401
    %v2248 = vadd.f32 %v1402, %v1403
    %v2249 = vadd.f32 %v1404, %v1405
    %v2250 = vadd.f32 %v1406, %v1407
    %v2251 = vadd.f32 %v1408, %v1409
    %v2252 = vadd.f32 %v1410, %v1411
    %v2253 = vadd.f32 %v1412, %v1413
    %v2254 = vadd.f32 %v1414, %v1415
    %v2255 = vadd.f32 %v1416, %v1417
    %v2256 = vadd.f32 %v1418, %v1419
    %v2257 = vadd.f32 %v1420, %v1421
    %v2258 = vadd.f32 %v1422, %v1423
    %v2259 = vadd.f32 %v1424, %v1425
    %v2260 = vadd.f32 %v1426, %v1427
    %v2261 = vadd.f32 %v1428, %v1429
    %v2262 = vadd.f32 %v1430, %v1431
    %v2263 = vadd.f32 %v1432, %v1433
    %v2264 = vadd.f32 %v1434, %v1435
    %v2265 = vadd.f32 %v1436, %v1437
    %v2266 = vadd.f32 %v1438, %v1439
    %v2267 = vadd.f32 %v1440, %v1441
    %v2268 = vadd.f32 %v1442, %v1443
    %v2269 = vadd.f32 %v1444, %v1445
    %v2270 = vadd.f32 %v1446, %v1447
    %v2271 = vadd.f32 %v1448, %v1449
    %v2272 = vadd.f32 %v1450, %v1451
    %v2273 = vadd.f32 %v1452, %v1453
    %v2274 = vadd.f32 %v1454, %v1455
    %v2275 = vadd.f32 %v1456, %v1457
    %v2276 = vadd.f32 %v1458, %v1459
    %v2277 = vadd.f32 %v1460, %v1461
    %v2278 = vadd.f32 %v1462, %v1463
    %v2279 = vadd.f32 %v1464, %v1465
    %v2280 = vadd.f32 %v1466, %v1467
    %v2281 = vadd.f32 %v1468, %v1469
    %v2282 = vadd.f32 %v1470, %v1471
    %v2283 = vadd.f32 %v1472, %v1473
    %v2284 = vadd.f32 %v1474, %v1475
    %v2285 = vadd.f32 %v1476, %v1477
    %v2286 = vadd.f32 %v1478, %v1479
    %v2287 = vadd.f32 %v1480, %v1481
    %v2288 = vadd.f32 %v1482, %v1483
    %v2289 = vadd.f32 %v1484, %v1485
    %v2290 = vadd.f32 %v1486, %v1487
    %v2291 = vadd.f32 %v1488, %v1489
    %v2292 = vadd.f32 %v1490, %v1491
    %v2293 = vadd.f32 %v1492, %v1493
    %v2294 = vadd.f32 %v1494, %v1495
    %v2295 = vadd.f32 %v1496, %v1497
    %v2296 = vadd.f32 %v1498, %v1499
    %v2297 = vadd.f32 %v1500, %v1501
    %v2298 = vadd.f32 %v1502, %v1503
    %v2299 = vadd.f32 %v1504, %v1505
    %v2300 = vadd.f32 %v1506, %v1507
    %v2301 = vadd.f32 %v1508, %v1509
    %v2302 = vadd.f32 %v1510, %v1511
    %v2303 = vadd.f32 %v1512, %v1513
    %v2304 = vadd.f32 %v1514, %v1515
    %v2305 = vadd.f32 %v1516, %v1517
    %v2306 = vadd.f32 %v1518, %v1519
    %v2307 = vadd.f32 %v1520, %v1521
    %v2308 = vadd.f32 %v1522, %v1523
    %v2309 = vadd.f32 %v1524, %v1525
    %v2310 = vadd.f32 %v1526, %v1527
    %v2311 = vadd.f32 %v1528, %v1529
    %v2312 = vadd.f32 %v1530, %v1531
    %v2313 = vadd.f32 %v1532, %v1533
    %v2314 = vadd.f32 %v1534, %v1535
    %v2315 = vadd.f32 %v1536, %v1537
    %v2316 = vadd.f32 %v1538, %v1539
    %v2317 = vadd.f32 %v1540, %v1541
    %v2318 = vadd.f32 %v1542, %v1543
    %v2319 = vadd.f32 %v1544, %v1545
    %v2320 = vadd.f32 %v1546, %v1547
    %v2321 = vadd.f32 %v1548, %v1549
    %v2322 = vadd.f32 %v1550, %v1551
    %v2323 = vadd.f32 %v1552, %v1553
    %v2324 = vadd.f32 %v1554, %v1555
    %v2325 = vadd.f32 %v1556, %v1557
    %2326 = vadd.xlane.f32.xlu0 %v1558
    %v2327 = vpop.xlane.xlu0 %2326
    %2328 = vadd.xlane.f32.xlu0 %v1559
    %v2329 = vpop.xlane.xlu0 %2328
    %2330 = vadd.xlane.f32.xlu0 %v1560
    %v2331 = vpop.xlane.xlu0 %2330
    %2332 = vadd.xlane.f32.xlu0 %v1561
    %v2333 = vpop.xlane.xlu0 %2332
    %2334 = vadd.xlane.f32.xlu0 %v1562
    %v2335 = vpop.xlane.xlu0 %2334
    %2336 = vadd.xlane.f32.xlu0 %v1563
    %v2337 = vpop.xlane.xlu0 %2336
    %2338 = vadd.xlane.f32.xlu0 %v1564
    %v2339 = vpop.xlane.xlu0 %2338
    %2340 = vadd.xlane.f32.xlu0 %v1565
    %v2341 = vpop.xlane.xlu0 %2340
    %2342 = vadd.xlane.f32.xlu0 %v1566
    %v2343 = vpop.xlane.xlu0 %2342
    %2344 = vadd.xlane.f32.xlu0 %v1567
    %v2345 = vpop.xlane.xlu0 %2344
    %2346 = vadd.xlane.f32.xlu0 %v1568
    %v2347 = vpop.xlane.xlu0 %2346
    %2348 = vadd.xlane.f32.xlu0 %v1569
    %v2349 = vpop.xlane.xlu0 %2348
    %2350 = vadd.xlane.f32.xlu0 %v1570
    %v2351 = vpop.xlane.xlu0 %2350
    %2352 = vadd.xlane.f32.xlu0 %v1571
    %v2353 = vpop.xlane.xlu0 %2352
    %2354 = vadd.xlane.f32.xlu0 %v1572
    %v2355 = vpop.xlane.xlu0 %2354
    %2356 = vadd.xlane.f32.xlu0 %v1573
    %v2357 = vpop.xlane.xlu0 %2356
    %2358 = vadd.xlane.f32.xlu0 %v1574
    %v2359 = vpop.xlane.xlu0 %2358
    %2360 = vadd.xlane.f32.xlu0 %v1575
    %v2361 = vpop.xlane.xlu0 %2360
    %2362 = vadd.xlane.f32.xlu0 %v1576
    %v2363 = vpop.xlane.xlu0 %2362
    %2364 = vadd.xlane.f32.xlu0 %v1577
    %v2365 = vpop.xlane.xlu0 %2364
    %2366 = vadd.xlane.f32.xlu0 %v1578
    %v2367 = vpop.xlane.xlu0 %2366
    %2368 = vadd.xlane.f32.xlu0 %v1579
    %v2369 = vpop.xlane.xlu0 %2368
    %2370 = vadd.xlane.f32.xlu0 %v1580
    %v2371 = vpop.xlane.xlu0 %2370
    %2372 = vadd.xlane.f32.xlu0 %v1581
    %v2373 = vpop.xlane.xlu0 %2372
    %2374 = vadd.xlane.f32.xlu0 %v1582
    %v2375 = vpop.xlane.xlu0 %2374
    %2376 = vadd.xlane.f32.xlu0 %v1583
    %v2377 = vpop.xlane.xlu0 %2376
    %2378 = vadd.xlane.f32.xlu0 %v1584
    %v2379 = vpop.xlane.xlu0 %2378
    %2380 = vadd.xlane.f32.xlu0 %v1585
    %v2381 = vpop.xlane.xlu0 %2380
    %2382 = vadd.xlane.f32.xlu0 %v1586
    %v2383 = vpop.xlane.xlu0 %2382
    %2384 = vadd.xlane.f32.xlu0 %v1587
    %v2385 = vpop.xlane.xlu0 %2384
    %2386 = vadd.xlane.f32.xlu0 %v1588
    %v2387 = vpop.xlane.xlu0 %2386
    %2388 = vadd.xlane.f32.xlu0 %v1589
    %v2389 = vpop.xlane.xlu0 %2388
    %2390 = vadd.xlane.f32.xlu0 %v1590
    %v2391 = vpop.xlane.xlu0 %2390
    %2392 = vadd.xlane.f32.xlu0 %v1591
    %v2393 = vpop.xlane.xlu0 %2392
    %2394 = vadd.xlane.f32.xlu0 %v1592
    %v2395 = vpop.xlane.xlu0 %2394
    %2396 = vadd.xlane.f32.xlu0 %v1593
    %v2397 = vpop.xlane.xlu0 %2396
    %2398 = vadd.xlane.f32.xlu0 %v1594
    %v2399 = vpop.xlane.xlu0 %2398
    %2400 = vadd.xlane.f32.xlu0 %v1595
    %v2401 = vpop.xlane.xlu0 %2400
    %2402 = vadd.xlane.f32.xlu0 %v1596
    %v2403 = vpop.xlane.xlu0 %2402
    %2404 = vadd.xlane.f32.xlu0 %v1597
    %v2405 = vpop.xlane.xlu0 %2404
    %2406 = vadd.xlane.f32.xlu0 %v1598
    %v2407 = vpop.xlane.xlu0 %2406
    %2408 = vadd.xlane.f32.xlu0 %v1599
    %v2409 = vpop.xlane.xlu0 %2408
    %2410 = vadd.xlane.f32.xlu0 %v1600
    %v2411 = vpop.xlane.xlu0 %2410
    %2412 = vadd.xlane.f32.xlu0 %v1601
    %v2413 = vpop.xlane.xlu0 %2412
    %2414 = vadd.xlane.f32.xlu0 %v1602
    %v2415 = vpop.xlane.xlu0 %2414
    %2416 = vadd.xlane.f32.xlu0 %v1603
    %v2417 = vpop.xlane.xlu0 %2416
    %2418 = vadd.xlane.f32.xlu0 %v1604
    %v2419 = vpop.xlane.xlu0 %2418
    %2420 = vadd.xlane.f32.xlu0 %v1605
    %v2421 = vpop.xlane.xlu0 %2420
    %2422 = vadd.xlane.f32.xlu0 %v1606
    %v2423 = vpop.xlane.xlu0 %2422
    %2424 = vadd.xlane.f32.xlu0 %v1607
    %v2425 = vpop.xlane.xlu0 %2424
    %2426 = vadd.xlane.f32.xlu0 %v1608
    %v2427 = vpop.xlane.xlu0 %2426
    %2428 = vadd.xlane.f32.xlu0 %v1609
    %v2429 = vpop.xlane.xlu0 %2428
    %2430 = vadd.xlane.f32.xlu0 %v1610
    %v2431 = vpop.xlane.xlu0 %2430
    %2432 = vadd.xlane.f32.xlu0 %v1611
    %v2433 = vpop.xlane.xlu0 %2432
    %2434 = vadd.xlane.f32.xlu0 %v1612
    %v2435 = vpop.xlane.xlu0 %2434
    %2436 = vadd.xlane.f32.xlu0 %v1613
    %v2437 = vpop.xlane.xlu0 %2436
    %2438 = vadd.xlane.f32.xlu0 %v1614
    %v2439 = vpop.xlane.xlu0 %2438
    %2440 = vadd.xlane.f32.xlu0 %v1615
    %v2441 = vpop.xlane.xlu0 %2440
    %2442 = vadd.xlane.f32.xlu0 %v1616
    %v2443 = vpop.xlane.xlu0 %2442
    %2444 = vadd.xlane.f32.xlu0 %v1617
    %v2445 = vpop.xlane.xlu0 %2444
    %2446 = vadd.xlane.f32.xlu0 %v1618
    %v2447 = vpop.xlane.xlu0 %2446
    %2448 = vadd.xlane.f32.xlu0 %v1619
    %v2449 = vpop.xlane.xlu0 %2448
    %2450 = vadd.xlane.f32.xlu0 %v1620
    %v2451 = vpop.xlane.xlu0 %2450
    %2452 = vadd.xlane.f32.xlu0 %v1621
    %v2453 = vpop.xlane.xlu0 %2452
    %2454 = vadd.xlane.f32.xlu0 %v1622
    %v2455 = vpop.xlane.xlu0 %2454
    %2456 = vadd.xlane.f32.xlu0 %v1623
    %v2457 = vpop.xlane.xlu0 %2456
    %2458 = vadd.xlane.f32.xlu0 %v1624
    %v2459 = vpop.xlane.xlu0 %2458
    %2460 = vadd.xlane.f32.xlu0 %v1625
    %v2461 = vpop.xlane.xlu0 %2460
    %2462 = vadd.xlane.f32.xlu0 %v1626
    %v2463 = vpop.xlane.xlu0 %2462
    %2464 = vadd.xlane.f32.xlu0 %v1627
    %v2465 = vpop.xlane.xlu0 %2464
    %2466 = vadd.xlane.f32.xlu0 %v1628
    %v2467 = vpop.xlane.xlu0 %2466
    %2468 = vadd.xlane.f32.xlu0 %v1629
    %v2469 = vpop.xlane.xlu0 %2468
    %2470 = vadd.xlane.f32.xlu0 %v1630
    %v2471 = vpop.xlane.xlu0 %2470
    %2472 = vadd.xlane.f32.xlu0 %v1631
    %v2473 = vpop.xlane.xlu0 %2472
    %2474 = vadd.xlane.f32.xlu0 %v1632
    %v2475 = vpop.xlane.xlu0 %2474
    %2476 = vadd.xlane.f32.xlu0 %v1633
    %v2477 = vpop.xlane.xlu0 %2476
    %2478 = vadd.xlane.f32.xlu0 %v1634
    %v2479 = vpop.xlane.xlu0 %2478
    %2480 = vadd.xlane.f32.xlu0 %v1635
    %v2481 = vpop.xlane.xlu0 %2480
    %2482 = vadd.xlane.f32.xlu0 %v1636
    %v2483 = vpop.xlane.xlu0 %2482
    %2484 = vadd.xlane.f32.xlu0 %v1637
    %v2485 = vpop.xlane.xlu0 %2484
    %2486 = vadd.xlane.f32.xlu0 %v1638
    %v2487 = vpop.xlane.xlu0 %2486
    %2488 = vadd.xlane.f32.xlu0 %v1639
    %v2489 = vpop.xlane.xlu0 %2488
    %2490 = vadd.xlane.f32.xlu0 %v1640
    %v2491 = vpop.xlane.xlu0 %2490
    %2492 = vadd.xlane.f32.xlu0 %v1641
    %v2493 = vpop.xlane.xlu0 %2492
    %2494 = vadd.xlane.f32.xlu0 %v1642
    %v2495 = vpop.xlane.xlu0 %2494
    %2496 = vadd.xlane.f32.xlu0 %v1643
    %v2497 = vpop.xlane.xlu0 %2496
    %2498 = vadd.xlane.f32.xlu0 %v1644
    %v2499 = vpop.xlane.xlu0 %2498
    %2500 = vadd.xlane.f32.xlu0 %v1645
    %v2501 = vpop.xlane.xlu0 %2500
    %2502 = vadd.xlane.f32.xlu0 %v1646
    %v2503 = vpop.xlane.xlu0 %2502
    %2504 = vadd.xlane.f32.xlu0 %v1647
    %v2505 = vpop.xlane.xlu0 %2504
    %2506 = vadd.xlane.f32.xlu0 %v1648
    %v2507 = vpop.xlane.xlu0 %2506
    %2508 = vadd.xlane.f32.xlu0 %v1649
    %v2509 = vpop.xlane.xlu0 %2508
    %2510 = vadd.xlane.f32.xlu0 %v1650
    %v2511 = vpop.xlane.xlu0 %2510
    %2512 = vadd.xlane.f32.xlu0 %v1651
    %v2513 = vpop.xlane.xlu0 %2512
    %2514 = vadd.xlane.f32.xlu0 %v1652
    %v2515 = vpop.xlane.xlu0 %2514
    %2516 = vadd.xlane.f32.xlu0 %v1653
    %v2517 = vpop.xlane.xlu0 %2516
    %2518 = vadd.xlane.f32.xlu0 %v1654
    %v2519 = vpop.xlane.xlu0 %2518
    %2520 = vadd.xlane.f32.xlu0 %v1655
    %v2521 = vpop.xlane.xlu0 %2520
    %2522 = vadd.xlane.f32.xlu0 %v1656
    %v2523 = vpop.xlane.xlu0 %2522
    %2524 = vadd.xlane.f32.xlu0 %v1657
    %v2525 = vpop.xlane.xlu0 %2524
    %2526 = vadd.xlane.f32.xlu0 %v1658
    %v2527 = vpop.xlane.xlu0 %2526
    %2528 = vadd.xlane.f32.xlu0 %v1659
    %v2529 = vpop.xlane.xlu0 %2528
    %2530 = vadd.xlane.f32.xlu0 %v1660
    %v2531 = vpop.xlane.xlu0 %2530
    %2532 = vadd.xlane.f32.xlu0 %v1661
    %v2533 = vpop.xlane.xlu0 %2532
    %2534 = vadd.xlane.f32.xlu0 %v1662
    %v2535 = vpop.xlane.xlu0 %2534
    %2536 = vadd.xlane.f32.xlu0 %v1663
    %v2537 = vpop.xlane.xlu0 %2536
    %2538 = vadd.xlane.f32.xlu0 %v1664
    %v2539 = vpop.xlane.xlu0 %2538
    %2540 = vadd.xlane.f32.xlu0 %v1665
    %v2541 = vpop.xlane.xlu0 %2540
    %2542 = vadd.xlane.f32.xlu0 %v1666
    %v2543 = vpop.xlane.xlu0 %2542
    %2544 = vadd.xlane.f32.xlu0 %v1667
    %v2545 = vpop.xlane.xlu0 %2544
    %2546 = vadd.xlane.f32.xlu0 %v1668
    %v2547 = vpop.xlane.xlu0 %2546
    %2548 = vadd.xlane.f32.xlu0 %v1669
    %v2549 = vpop.xlane.xlu0 %2548
    %2550 = vadd.xlane.f32.xlu0 %v1670
    %v2551 = vpop.xlane.xlu0 %2550
    %2552 = vadd.xlane.f32.xlu0 %v1671
    %v2553 = vpop.xlane.xlu0 %2552
    %2554 = vadd.xlane.f32.xlu0 %v1672
    %v2555 = vpop.xlane.xlu0 %2554
    %2556 = vadd.xlane.f32.xlu0 %v1673
    %v2557 = vpop.xlane.xlu0 %2556
    %2558 = vadd.xlane.f32.xlu0 %v1674
    %v2559 = vpop.xlane.xlu0 %2558
    %2560 = vadd.xlane.f32.xlu0 %v1675
    %v2561 = vpop.xlane.xlu0 %2560
    %2562 = vadd.xlane.f32.xlu0 %v1676
    %v2563 = vpop.xlane.xlu0 %2562
    %2564 = vadd.xlane.f32.xlu0 %v1677
    %v2565 = vpop.xlane.xlu0 %2564
    %2566 = vadd.xlane.f32.xlu0 %v1678
    %v2567 = vpop.xlane.xlu0 %2566
    %2568 = vadd.xlane.f32.xlu0 %v1679
    %v2569 = vpop.xlane.xlu0 %2568
    %2570 = vadd.xlane.f32.xlu0 %v1680
    %v2571 = vpop.xlane.xlu0 %2570
    %2572 = vadd.xlane.f32.xlu0 %v1681
    %v2573 = vpop.xlane.xlu0 %2572
    %2574 = vadd.xlane.f32.xlu0 %v1682
    %v2575 = vpop.xlane.xlu0 %2574
    %2576 = vadd.xlane.f32.xlu0 %v1683
    %v2577 = vpop.xlane.xlu0 %2576
    %2578 = vadd.xlane.f32.xlu0 %v1684
    %v2579 = vpop.xlane.xlu0 %2578
    %2580 = vadd.xlane.f32.xlu0 %v1685
    %v2581 = vpop.xlane.xlu0 %2580
    %2582 = vadd.xlane.f32.xlu0 %v1686
    %v2583 = vpop.xlane.xlu0 %2582
    %2584 = vadd.xlane.f32.xlu0 %v1687
    %v2585 = vpop.xlane.xlu0 %2584
    %2586 = vadd.xlane.f32.xlu0 %v1688
    %v2587 = vpop.xlane.xlu0 %2586
    %2588 = vadd.xlane.f32.xlu0 %v1689
    %v2589 = vpop.xlane.xlu0 %2588
    %2590 = vadd.xlane.f32.xlu0 %v1690
    %v2591 = vpop.xlane.xlu0 %2590
    %2592 = vadd.xlane.f32.xlu0 %v1691
    %v2593 = vpop.xlane.xlu0 %2592
    %2594 = vadd.xlane.f32.xlu0 %v1692
    %v2595 = vpop.xlane.xlu0 %2594
    %2596 = vadd.xlane.f32.xlu0 %v1693
    %v2597 = vpop.xlane.xlu0 %2596
    %2598 = vadd.xlane.f32.xlu0 %v1694
    %v2599 = vpop.xlane.xlu0 %2598
    %2600 = vadd.xlane.f32.xlu0 %v1695
    %v2601 = vpop.xlane.xlu0 %2600
    %2602 = vadd.xlane.f32.xlu0 %v1696
    %v2603 = vpop.xlane.xlu0 %2602
    %2604 = vadd.xlane.f32.xlu0 %v1697
    %v2605 = vpop.xlane.xlu0 %2604
    %2606 = vadd.xlane.f32.xlu0 %v1698
    %v2607 = vpop.xlane.xlu0 %2606
    %2608 = vadd.xlane.f32.xlu0 %v1699
    %v2609 = vpop.xlane.xlu0 %2608
    %2610 = vadd.xlane.f32.xlu0 %v1700
    %v2611 = vpop.xlane.xlu0 %2610
    %2612 = vadd.xlane.f32.xlu0 %v1701
    %v2613 = vpop.xlane.xlu0 %2612
    %2614 = vadd.xlane.f32.xlu0 %v1702
    %v2615 = vpop.xlane.xlu0 %2614
    %2616 = vadd.xlane.f32.xlu0 %v1703
    %v2617 = vpop.xlane.xlu0 %2616
    %2618 = vadd.xlane.f32.xlu0 %v1704
    %v2619 = vpop.xlane.xlu0 %2618
    %2620 = vadd.xlane.f32.xlu0 %v1705
    %v2621 = vpop.xlane.xlu0 %2620
    %2622 = vadd.xlane.f32.xlu0 %v1706
    %v2623 = vpop.xlane.xlu0 %2622
    %2624 = vadd.xlane.f32.xlu0 %v1707
    %v2625 = vpop.xlane.xlu0 %2624
    %2626 = vadd.xlane.f32.xlu0 %v1708
    %v2627 = vpop.xlane.xlu0 %2626
    %2628 = vadd.xlane.f32.xlu0 %v1709
    %v2629 = vpop.xlane.xlu0 %2628
    %2630 = vadd.xlane.f32.xlu0 %v1710
    %v2631 = vpop.xlane.xlu0 %2630
    %2632 = vadd.xlane.f32.xlu0 %v1711
    %v2633 = vpop.xlane.xlu0 %2632
    %2634 = vadd.xlane.f32.xlu0 %v1712
    %v2635 = vpop.xlane.xlu0 %2634
    %2636 = vadd.xlane.f32.xlu0 %v1713
    %v2637 = vpop.xlane.xlu0 %2636
    %2638 = vadd.xlane.f32.xlu0 %v1714
    %v2639 = vpop.xlane.xlu0 %2638
    %2640 = vadd.xlane.f32.xlu0 %v1715
    %v2641 = vpop.xlane.xlu0 %2640
    %2642 = vadd.xlane.f32.xlu0 %v1716
    %v2643 = vpop.xlane.xlu0 %2642
    %2644 = vadd.xlane.f32.xlu0 %v1717
    %v2645 = vpop.xlane.xlu0 %2644
    %2646 = vadd.xlane.f32.xlu0 %v1718
    %v2647 = vpop.xlane.xlu0 %2646
    %2648 = vadd.xlane.f32.xlu0 %v1719
    %v2649 = vpop.xlane.xlu0 %2648
    %2650 = vadd.xlane.f32.xlu0 %v1720
    %v2651 = vpop.xlane.xlu0 %2650
    %2652 = vadd.xlane.f32.xlu0 %v1721
    %v2653 = vpop.xlane.xlu0 %2652
    %2654 = vadd.xlane.f32.xlu0 %v1722
    %v2655 = vpop.xlane.xlu0 %2654
    %2656 = vadd.xlane.f32.xlu0 %v1723
    %v2657 = vpop.xlane.xlu0 %2656
    %2658 = vadd.xlane.f32.xlu0 %v1724
    %v2659 = vpop.xlane.xlu0 %2658
    %2660 = vadd.xlane.f32.xlu0 %v1725
    %v2661 = vpop.xlane.xlu0 %2660
    %2662 = vadd.xlane.f32.xlu0 %v1726
    %v2663 = vpop.xlane.xlu0 %2662
    %2664 = vadd.xlane.f32.xlu0 %v1727
    %v2665 = vpop.xlane.xlu0 %2664
    %2666 = vadd.xlane.f32.xlu0 %v1728
    %v2667 = vpop.xlane.xlu0 %2666
    %2668 = vadd.xlane.f32.xlu0 %v1729
    %v2669 = vpop.xlane.xlu0 %2668
    %2670 = vadd.xlane.f32.xlu0 %v1730
    %v2671 = vpop.xlane.xlu0 %2670
    %2672 = vadd.xlane.f32.xlu0 %v1731
    %v2673 = vpop.xlane.xlu0 %2672
    %2674 = vadd.xlane.f32.xlu0 %v1732
    %v2675 = vpop.xlane.xlu0 %2674
    %2676 = vadd.xlane.f32.xlu0 %v1733
    %v2677 = vpop.xlane.xlu0 %2676
    %2678 = vadd.xlane.f32.xlu0 %v1734
    %v2679 = vpop.xlane.xlu0 %2678
    %2680 = vadd.xlane.f32.xlu0 %v1735
    %v2681 = vpop.xlane.xlu0 %2680
    %2682 = vadd.xlane.f32.xlu0 %v1736
    %v2683 = vpop.xlane.xlu0 %2682
    %2684 = vadd.xlane.f32.xlu0 %v1737
    %v2685 = vpop.xlane.xlu0 %2684
    %2686 = vadd.xlane.f32.xlu0 %v1738
    %v2687 = vpop.xlane.xlu0 %2686
    %2688 = vadd.xlane.f32.xlu0 %v1739
    %v2689 = vpop.xlane.xlu0 %2688
    %2690 = vadd.xlane.f32.xlu0 %v1740
    %v2691 = vpop.xlane.xlu0 %2690
    %2692 = vadd.xlane.f32.xlu0 %v1741
    %v2693 = vpop.xlane.xlu0 %2692
    %2694 = vadd.xlane.f32.xlu0 %v1742
    %v2695 = vpop.xlane.xlu0 %2694
    %2696 = vadd.xlane.f32.xlu0 %v1743
    %v2697 = vpop.xlane.xlu0 %2696
    %2698 = vadd.xlane.f32.xlu0 %v1744
    %v2699 = vpop.xlane.xlu0 %2698
    %2700 = vadd.xlane.f32.xlu0 %v1745
    %v2701 = vpop.xlane.xlu0 %2700
    %2702 = vadd.xlane.f32.xlu0 %v1746
    %v2703 = vpop.xlane.xlu0 %2702
    %2704 = vadd.xlane.f32.xlu0 %v1747
    %v2705 = vpop.xlane.xlu0 %2704
    %2706 = vadd.xlane.f32.xlu0 %v1748
    %v2707 = vpop.xlane.xlu0 %2706
    %2708 = vadd.xlane.f32.xlu0 %v1749
    %v2709 = vpop.xlane.xlu0 %2708
    %2710 = vadd.xlane.f32.xlu0 %v1750
    %v2711 = vpop.xlane.xlu0 %2710
    %2712 = vadd.xlane.f32.xlu0 %v1751
    %v2713 = vpop.xlane.xlu0 %2712
    %2714 = vadd.xlane.f32.xlu0 %v1752
    %v2715 = vpop.xlane.xlu0 %2714
    %2716 = vadd.xlane.f32.xlu0 %v1753
    %v2717 = vpop.xlane.xlu0 %2716
    %2718 = vadd.xlane.f32.xlu0 %v1754
    %v2719 = vpop.xlane.xlu0 %2718
    %2720 = vadd.xlane.f32.xlu0 %v1755
    %v2721 = vpop.xlane.xlu0 %2720
    %2722 = vadd.xlane.f32.xlu0 %v1756
    %v2723 = vpop.xlane.xlu0 %2722
    %2724 = vadd.xlane.f32.xlu0 %v1757
    %v2725 = vpop.xlane.xlu0 %2724
    %2726 = vadd.xlane.f32.xlu0 %v1758
    %v2727 = vpop.xlane.xlu0 %2726
    %2728 = vadd.xlane.f32.xlu0 %v1759
    %v2729 = vpop.xlane.xlu0 %2728
    %2730 = vadd.xlane.f32.xlu0 %v1760
    %v2731 = vpop.xlane.xlu0 %2730
    %2732 = vadd.xlane.f32.xlu0 %v1761
    %v2733 = vpop.xlane.xlu0 %2732
    %2734 = vadd.xlane.f32.xlu0 %v1762
    %v2735 = vpop.xlane.xlu0 %2734
    %2736 = vadd.xlane.f32.xlu0 %v1763
    %v2737 = vpop.xlane.xlu0 %2736
    %2738 = vadd.xlane.f32.xlu0 %v1764
    %v2739 = vpop.xlane.xlu0 %2738
    %2740 = vadd.xlane.f32.xlu0 %v1765
    %v2741 = vpop.xlane.xlu0 %2740
    %2742 = vadd.xlane.f32.xlu0 %v1766
    %v2743 = vpop.xlane.xlu0 %2742
    %2744 = vadd.xlane.f32.xlu0 %v1767
    %v2745 = vpop.xlane.xlu0 %2744
    %2746 = vadd.xlane.f32.xlu0 %v1768
    %v2747 = vpop.xlane.xlu0 %2746
    %2748 = vadd.xlane.f32.xlu0 %v1769
    %v2749 = vpop.xlane.xlu0 %2748
    %2750 = vadd.xlane.f32.xlu0 %v1770
    %v2751 = vpop.xlane.xlu0 %2750
    %2752 = vadd.xlane.f32.xlu0 %v1771
    %v2753 = vpop.xlane.xlu0 %2752
    %2754 = vadd.xlane.f32.xlu0 %v1772
    %v2755 = vpop.xlane.xlu0 %2754
    %2756 = vadd.xlane.f32.xlu0 %v1773
    %v2757 = vpop.xlane.xlu0 %2756
    %2758 = vadd.xlane.f32.xlu0 %v1774
    %v2759 = vpop.xlane.xlu0 %2758
    %2760 = vadd.xlane.f32.xlu0 %v1775
    %v2761 = vpop.xlane.xlu0 %2760
    %2762 = vadd.xlane.f32.xlu0 %v1776
    %v2763 = vpop.xlane.xlu0 %2762
    %2764 = vadd.xlane.f32.xlu0 %v1777
    %v2765 = vpop.xlane.xlu0 %2764
    %2766 = vadd.xlane.f32.xlu0 %v1778
    %v2767 = vpop.xlane.xlu0 %2766
    %2768 = vadd.xlane.f32.xlu0 %v1779
    %v2769 = vpop.xlane.xlu0 %2768
    %2770 = vadd.xlane.f32.xlu0 %v1780
    %v2771 = vpop.xlane.xlu0 %2770
    %2772 = vadd.xlane.f32.xlu0 %v1781
    %v2773 = vpop.xlane.xlu0 %2772
    %2774 = vadd.xlane.f32.xlu0 %v1782
    %v2775 = vpop.xlane.xlu0 %2774
    %2776 = vadd.xlane.f32.xlu0 %v1783
    %v2777 = vpop.xlane.xlu0 %2776
    %2778 = vadd.xlane.f32.xlu0 %v1784
    %v2779 = vpop.xlane.xlu0 %2778
    %2780 = vadd.xlane.f32.xlu0 %v1785
    %v2781 = vpop.xlane.xlu0 %2780
    %2782 = vadd.xlane.f32.xlu0 %v1786
    %v2783 = vpop.xlane.xlu0 %2782
    %2784 = vadd.xlane.f32.xlu0 %v1787
    %v2785 = vpop.xlane.xlu0 %2784
    %2786 = vadd.xlane.f32.xlu0 %v1788
    %v2787 = vpop.xlane.xlu0 %2786
    %2788 = vadd.xlane.f32.xlu0 %v1789
    %v2789 = vpop.xlane.xlu0 %2788
    %2790 = vadd.xlane.f32.xlu0 %v1790
    %v2791 = vpop.xlane.xlu0 %2790
    %2792 = vadd.xlane.f32.xlu0 %v1791
    %v2793 = vpop.xlane.xlu0 %2792
    %2794 = vadd.xlane.f32.xlu0 %v1792
    %v2795 = vpop.xlane.xlu0 %2794
    %2796 = vadd.xlane.f32.xlu0 %v1793
    %v2797 = vpop.xlane.xlu0 %2796
    %2798 = vadd.xlane.f32.xlu0 %v1794
    %v2799 = vpop.xlane.xlu0 %2798
    %2800 = vadd.xlane.f32.xlu0 %v1795
    %v2801 = vpop.xlane.xlu0 %2800
    %2802 = vadd.xlane.f32.xlu0 %v1796
    %v2803 = vpop.xlane.xlu0 %2802
    %2804 = vadd.xlane.f32.xlu0 %v1797
    %v2805 = vpop.xlane.xlu0 %2804
    %2806 = vadd.xlane.f32.xlu0 %v1798
    %v2807 = vpop.xlane.xlu0 %2806
    %2808 = vadd.xlane.f32.xlu0 %v1799
    %v2809 = vpop.xlane.xlu0 %2808
    %2810 = vadd.xlane.f32.xlu0 %v1800
    %v2811 = vpop.xlane.xlu0 %2810
    %2812 = vadd.xlane.f32.xlu0 %v1801
    %v2813 = vpop.xlane.xlu0 %2812
    %2814 = vadd.xlane.f32.xlu0 %v1802
    %v2815 = vpop.xlane.xlu0 %2814
    %2816 = vadd.xlane.f32.xlu0 %v1803
    %v2817 = vpop.xlane.xlu0 %2816
    %2818 = vadd.xlane.f32.xlu0 %v1804
    %v2819 = vpop.xlane.xlu0 %2818
    %2820 = vadd.xlane.f32.xlu0 %v1805
    %v2821 = vpop.xlane.xlu0 %2820
    %2822 = vadd.xlane.f32.xlu0 %v1806
    %v2823 = vpop.xlane.xlu0 %2822
    %2824 = vadd.xlane.f32.xlu0 %v1807
    %v2825 = vpop.xlane.xlu0 %2824
    %2826 = vadd.xlane.f32.xlu0 %v1808
    %v2827 = vpop.xlane.xlu0 %2826
    %2828 = vadd.xlane.f32.xlu0 %v1809
    %v2829 = vpop.xlane.xlu0 %2828
    %2830 = vadd.xlane.f32.xlu0 %v1810
    %v2831 = vpop.xlane.xlu0 %2830
    %2832 = vadd.xlane.f32.xlu0 %v1811
    %v2833 = vpop.xlane.xlu0 %2832
    %2834 = vadd.xlane.f32.xlu0 %v1812
    %v2835 = vpop.xlane.xlu0 %2834
    %2836 = vadd.xlane.f32.xlu0 %v1813
    %v2837 = vpop.xlane.xlu0 %2836
    %2838 = vadd.xlane.f32.xlu0 %v1814
    %v2839 = vpop.xlane.xlu0 %2838
    %2840 = vadd.xlane.f32.xlu0 %v1815
    %v2841 = vpop.xlane.xlu0 %2840
    %2842 = vadd.xlane.f32.xlu0 %v1816
    %v2843 = vpop.xlane.xlu0 %2842
    %2844 = vadd.xlane.f32.xlu0 %v1817
    %v2845 = vpop.xlane.xlu0 %2844
    %2846 = vadd.xlane.f32.xlu0 %v1818
    %v2847 = vpop.xlane.xlu0 %2846
    %2848 = vadd.xlane.f32.xlu0 %v1819
    %v2849 = vpop.xlane.xlu0 %2848
    %2850 = vadd.xlane.f32.xlu0 %v1820
    %v2851 = vpop.xlane.xlu0 %2850
    %2852 = vadd.xlane.f32.xlu0 %v1821
    %v2853 = vpop.xlane.xlu0 %2852
    %2854 = vadd.xlane.f32.xlu0 %v1822
    %v2855 = vpop.xlane.xlu0 %2854
    %2856 = vadd.xlane.f32.xlu0 %v1823
    %v2857 = vpop.xlane.xlu0 %2856
    %2858 = vadd.xlane.f32.xlu0 %v1824
    %v2859 = vpop.xlane.xlu0 %2858
    %2860 = vadd.xlane.f32.xlu0 %v1825
    %v2861 = vpop.xlane.xlu0 %2860
    %2862 = vadd.xlane.f32.xlu0 %v1826
    %v2863 = vpop.xlane.xlu0 %2862
    %2864 = vadd.xlane.f32.xlu0 %v1827
    %v2865 = vpop.xlane.xlu0 %2864
    %2866 = vadd.xlane.f32.xlu0 %v1828
    %v2867 = vpop.xlane.xlu0 %2866
    %2868 = vadd.xlane.f32.xlu0 %v1829
    %v2869 = vpop.xlane.xlu0 %2868
    %2870 = vadd.xlane.f32.xlu0 %v1830
    %v2871 = vpop.xlane.xlu0 %2870
    %2872 = vadd.xlane.f32.xlu0 %v1831
    %v2873 = vpop.xlane.xlu0 %2872
    %2874 = vadd.xlane.f32.xlu0 %v1832
    %v2875 = vpop.xlane.xlu0 %2874
    %2876 = vadd.xlane.f32.xlu0 %v1833
    %v2877 = vpop.xlane.xlu0 %2876
    %2878 = vadd.xlane.f32.xlu0 %v1834
    %v2879 = vpop.xlane.xlu0 %2878
    %2880 = vadd.xlane.f32.xlu0 %v1835
    %v2881 = vpop.xlane.xlu0 %2880
    %2882 = vadd.xlane.f32.xlu0 %v1836
    %v2883 = vpop.xlane.xlu0 %2882
    %2884 = vadd.xlane.f32.xlu0 %v1837
    %v2885 = vpop.xlane.xlu0 %2884
    %2886 = vadd.xlane.f32.xlu0 %v1838
    %v2887 = vpop.xlane.xlu0 %2886
    %2888 = vadd.xlane.f32.xlu0 %v1839
    %v2889 = vpop.xlane.xlu0 %2888
    %2890 = vadd.xlane.f32.xlu0 %v1840
    %v2891 = vpop.xlane.xlu0 %2890
    %2892 = vadd.xlane.f32.xlu0 %v1841
    %v2893 = vpop.xlane.xlu0 %2892
    %2894 = vadd.xlane.f32.xlu0 %v1842
    %v2895 = vpop.xlane.xlu0 %2894
    %2896 = vadd.xlane.f32.xlu0 %v1843
    %v2897 = vpop.xlane.xlu0 %2896
    %2898 = vadd.xlane.f32.xlu0 %v1844
    %v2899 = vpop.xlane.xlu0 %2898
    %2900 = vadd.xlane.f32.xlu0 %v1845
    %v2901 = vpop.xlane.xlu0 %2900
    %2902 = vadd.xlane.f32.xlu0 %v1846
    %v2903 = vpop.xlane.xlu0 %2902
    %2904 = vadd.xlane.f32.xlu0 %v1847
    %v2905 = vpop.xlane.xlu0 %2904
    %2906 = vadd.xlane.f32.xlu0 %v1848
    %v2907 = vpop.xlane.xlu0 %2906
    %2908 = vadd.xlane.f32.xlu0 %v1849
    %v2909 = vpop.xlane.xlu0 %2908
    %2910 = vadd.xlane.f32.xlu0 %v1850
    %v2911 = vpop.xlane.xlu0 %2910
    %2912 = vadd.xlane.f32.xlu0 %v1851
    %v2913 = vpop.xlane.xlu0 %2912
    %2914 = vadd.xlane.f32.xlu0 %v1852
    %v2915 = vpop.xlane.xlu0 %2914
    %2916 = vadd.xlane.f32.xlu0 %v1853
    %v2917 = vpop.xlane.xlu0 %2916
    %2918 = vadd.xlane.f32.xlu0 %v1854
    %v2919 = vpop.xlane.xlu0 %2918
    %2920 = vadd.xlane.f32.xlu0 %v1855
    %v2921 = vpop.xlane.xlu0 %2920
    %2922 = vadd.xlane.f32.xlu0 %v1856
    %v2923 = vpop.xlane.xlu0 %2922
    %2924 = vadd.xlane.f32.xlu0 %v1857
    %v2925 = vpop.xlane.xlu0 %2924
    %2926 = vadd.xlane.f32.xlu0 %v1858
    %v2927 = vpop.xlane.xlu0 %2926
    %2928 = vadd.xlane.f32.xlu0 %v1859
    %v2929 = vpop.xlane.xlu0 %2928
    %2930 = vadd.xlane.f32.xlu0 %v1860
    %v2931 = vpop.xlane.xlu0 %2930
    %2932 = vadd.xlane.f32.xlu0 %v1861
    %v2933 = vpop.xlane.xlu0 %2932
    %2934 = vadd.xlane.f32.xlu0 %v1862
    %v2935 = vpop.xlane.xlu0 %2934
    %2936 = vadd.xlane.f32.xlu0 %v1863
    %v2937 = vpop.xlane.xlu0 %2936
    %2938 = vadd.xlane.f32.xlu0 %v1864
    %v2939 = vpop.xlane.xlu0 %2938
    %2940 = vadd.xlane.f32.xlu0 %v1865
    %v2941 = vpop.xlane.xlu0 %2940
    %2942 = vadd.xlane.f32.xlu0 %v1866
    %v2943 = vpop.xlane.xlu0 %2942
    %2944 = vadd.xlane.f32.xlu0 %v1867
    %v2945 = vpop.xlane.xlu0 %2944
    %2946 = vadd.xlane.f32.xlu0 %v1868
    %v2947 = vpop.xlane.xlu0 %2946
    %2948 = vadd.xlane.f32.xlu0 %v1869
    %v2949 = vpop.xlane.xlu0 %2948
    %2950 = vadd.xlane.f32.xlu0 %v1870
    %v2951 = vpop.xlane.xlu0 %2950
    %2952 = vadd.xlane.f32.xlu0 %v1871
    %v2953 = vpop.xlane.xlu0 %2952
    %2954 = vadd.xlane.f32.xlu0 %v1872
    %v2955 = vpop.xlane.xlu0 %2954
    %2956 = vadd.xlane.f32.xlu0 %v1873
    %v2957 = vpop.xlane.xlu0 %2956
    %2958 = vadd.xlane.f32.xlu0 %v1874
    %v2959 = vpop.xlane.xlu0 %2958
    %2960 = vadd.xlane.f32.xlu0 %v1875
    %v2961 = vpop.xlane.xlu0 %2960
    %2962 = vadd.xlane.f32.xlu0 %v1876
    %v2963 = vpop.xlane.xlu0 %2962
    %2964 = vadd.xlane.f32.xlu0 %v1877
    %v2965 = vpop.xlane.xlu0 %2964
    %2966 = vadd.xlane.f32.xlu0 %v1878
    %v2967 = vpop.xlane.xlu0 %2966
    %2968 = vadd.xlane.f32.xlu0 %v1879
    %v2969 = vpop.xlane.xlu0 %2968
    %2970 = vadd.xlane.f32.xlu0 %v1880
    %v2971 = vpop.xlane.xlu0 %2970
    %2972 = vadd.xlane.f32.xlu0 %v1881
    %v2973 = vpop.xlane.xlu0 %2972
    %2974 = vadd.xlane.f32.xlu0 %v1882
    %v2975 = vpop.xlane.xlu0 %2974
    %2976 = vadd.xlane.f32.xlu0 %v1883
    %v2977 = vpop.xlane.xlu0 %2976
    %2978 = vadd.xlane.f32.xlu0 %v1884
    %v2979 = vpop.xlane.xlu0 %2978
    %2980 = vadd.xlane.f32.xlu0 %v1885
    %v2981 = vpop.xlane.xlu0 %2980
    %2982 = vadd.xlane.f32.xlu0 %v1886
    %v2983 = vpop.xlane.xlu0 %2982
    %2984 = vadd.xlane.f32.xlu0 %v1887
    %v2985 = vpop.xlane.xlu0 %2984
    %2986 = vadd.xlane.f32.xlu0 %v1888
    %v2987 = vpop.xlane.xlu0 %2986
    %2988 = vadd.xlane.f32.xlu0 %v1889
    %v2989 = vpop.xlane.xlu0 %2988
    %2990 = vadd.xlane.f32.xlu0 %v1890
    %v2991 = vpop.xlane.xlu0 %2990
    %2992 = vadd.xlane.f32.xlu0 %v1891
    %v2993 = vpop.xlane.xlu0 %2992
    %2994 = vadd.xlane.f32.xlu0 %v1892
    %v2995 = vpop.xlane.xlu0 %2994
    %2996 = vadd.xlane.f32.xlu0 %v1893
    %v2997 = vpop.xlane.xlu0 %2996
    %2998 = vadd.xlane.f32.xlu0 %v1894
    %v2999 = vpop.xlane.xlu0 %2998
    %3000 = vadd.xlane.f32.xlu0 %v1895
    %v3001 = vpop.xlane.xlu0 %3000
    %3002 = vadd.xlane.f32.xlu0 %v1896
    %v3003 = vpop.xlane.xlu0 %3002
    %3004 = vadd.xlane.f32.xlu0 %v1897
    %v3005 = vpop.xlane.xlu0 %3004
    %3006 = vadd.xlane.f32.xlu0 %v1898
    %v3007 = vpop.xlane.xlu0 %3006
    %3008 = vadd.xlane.f32.xlu0 %v1899
    %v3009 = vpop.xlane.xlu0 %3008
    %3010 = vadd.xlane.f32.xlu0 %v1900
    %v3011 = vpop.xlane.xlu0 %3010
    %3012 = vadd.xlane.f32.xlu0 %v1901
    %v3013 = vpop.xlane.xlu0 %3012
    %3014 = vadd.xlane.f32.xlu0 %v1902
    %v3015 = vpop.xlane.xlu0 %3014
    %3016 = vadd.xlane.f32.xlu0 %v1903
    %v3017 = vpop.xlane.xlu0 %3016
    %3018 = vadd.xlane.f32.xlu0 %v1904
    %v3019 = vpop.xlane.xlu0 %3018
    %3020 = vadd.xlane.f32.xlu0 %v1905
    %v3021 = vpop.xlane.xlu0 %3020
    %3022 = vadd.xlane.f32.xlu0 %v1906
    %v3023 = vpop.xlane.xlu0 %3022
    %3024 = vadd.xlane.f32.xlu0 %v1907
    %v3025 = vpop.xlane.xlu0 %3024
    %3026 = vadd.xlane.f32.xlu0 %v1908
    %v3027 = vpop.xlane.xlu0 %3026
    %3028 = vadd.xlane.f32.xlu0 %v1909
    %v3029 = vpop.xlane.xlu0 %3028
    %3030 = vadd.xlane.f32.xlu0 %v1910
    %v3031 = vpop.xlane.xlu0 %3030
    %3032 = vadd.xlane.f32.xlu0 %v1911
    %v3033 = vpop.xlane.xlu0 %3032
    %3034 = vadd.xlane.f32.xlu0 %v1912
    %v3035 = vpop.xlane.xlu0 %3034
    %3036 = vadd.xlane.f32.xlu0 %v1913
    %v3037 = vpop.xlane.xlu0 %3036
    %3038 = vadd.xlane.f32.xlu0 %v1914
    %v3039 = vpop.xlane.xlu0 %3038
    %3040 = vadd.xlane.f32.xlu0 %v1915
    %v3041 = vpop.xlane.xlu0 %3040
    %3042 = vadd.xlane.f32.xlu0 %v1916
    %v3043 = vpop.xlane.xlu0 %3042
    %3044 = vadd.xlane.f32.xlu0 %v1917
    %v3045 = vpop.xlane.xlu0 %3044
    %3046 = vadd.xlane.f32.xlu0 %v1918
    %v3047 = vpop.xlane.xlu0 %3046
    %3048 = vadd.xlane.f32.xlu0 %v1919
    %v3049 = vpop.xlane.xlu0 %3048
    %3050 = vadd.xlane.f32.xlu0 %v1920
    %v3051 = vpop.xlane.xlu0 %3050
    %3052 = vadd.xlane.f32.xlu0 %v1921
    %v3053 = vpop.xlane.xlu0 %3052
    %3054 = vadd.xlane.f32.xlu0 %v1922
    %v3055 = vpop.xlane.xlu0 %3054
    %3056 = vadd.xlane.f32.xlu0 %v1923
    %v3057 = vpop.xlane.xlu0 %3056
    %3058 = vadd.xlane.f32.xlu0 %v1924
    %v3059 = vpop.xlane.xlu0 %3058
    %3060 = vadd.xlane.f32.xlu0 %v1925
    %v3061 = vpop.xlane.xlu0 %3060
    %3062 = vadd.xlane.f32.xlu0 %v1926
    %v3063 = vpop.xlane.xlu0 %3062
    %3064 = vadd.xlane.f32.xlu0 %v1927
    %v3065 = vpop.xlane.xlu0 %3064
    %3066 = vadd.xlane.f32.xlu0 %v1928
    %v3067 = vpop.xlane.xlu0 %3066
    %3068 = vadd.xlane.f32.xlu0 %v1929
    %v3069 = vpop.xlane.xlu0 %3068
    %3070 = vadd.xlane.f32.xlu0 %v1930
    %v3071 = vpop.xlane.xlu0 %3070
    %3072 = vadd.xlane.f32.xlu0 %v1931
    %v3073 = vpop.xlane.xlu0 %3072
    %3074 = vadd.xlane.f32.xlu0 %v1932
    %v3075 = vpop.xlane.xlu0 %3074
    %3076 = vadd.xlane.f32.xlu0 %v1933
    %v3077 = vpop.xlane.xlu0 %3076
    %3078 = vadd.xlane.f32.xlu0 %v1934
    %v3079 = vpop.xlane.xlu0 %3078
    %3080 = vadd.xlane.f32.xlu0 %v1935
    %v3081 = vpop.xlane.xlu0 %3080
    %3082 = vadd.xlane.f32.xlu0 %v1936
    %v3083 = vpop.xlane.xlu0 %3082
    %3084 = vadd.xlane.f32.xlu0 %v1937
    %v3085 = vpop.xlane.xlu0 %3084
    %3086 = vadd.xlane.f32.xlu0 %v1938
    %v3087 = vpop.xlane.xlu0 %3086
    %3088 = vadd.xlane.f32.xlu0 %v1939
    %v3089 = vpop.xlane.xlu0 %3088
    %3090 = vadd.xlane.f32.xlu0 %v1940
    %v3091 = vpop.xlane.xlu0 %3090
    %3092 = vadd.xlane.f32.xlu0 %v1941
    %v3093 = vpop.xlane.xlu0 %3092
    %3094 = vadd.xlane.f32.xlu0 %v1942
    %v3095 = vpop.xlane.xlu0 %3094
    %3096 = vadd.xlane.f32.xlu0 %v1943
    %v3097 = vpop.xlane.xlu0 %3096
    %3098 = vadd.xlane.f32.xlu0 %v1944
    %v3099 = vpop.xlane.xlu0 %3098
    %3100 = vadd.xlane.f32.xlu0 %v1945
    %v3101 = vpop.xlane.xlu0 %3100
    %3102 = vadd.xlane.f32.xlu0 %v1946
    %v3103 = vpop.xlane.xlu0 %3102
    %3104 = vadd.xlane.f32.xlu0 %v1947
    %v3105 = vpop.xlane.xlu0 %3104
    %3106 = vadd.xlane.f32.xlu0 %v1948
    %v3107 = vpop.xlane.xlu0 %3106
    %3108 = vadd.xlane.f32.xlu0 %v1949
    %v3109 = vpop.xlane.xlu0 %3108
    %3110 = vadd.xlane.f32.xlu0 %v1950
    %v3111 = vpop.xlane.xlu0 %3110
    %3112 = vadd.xlane.f32.xlu0 %v1951
    %v3113 = vpop.xlane.xlu0 %3112
    %3114 = vadd.xlane.f32.xlu0 %v1952
    %v3115 = vpop.xlane.xlu0 %3114
    %3116 = vadd.xlane.f32.xlu0 %v1953
    %v3117 = vpop.xlane.xlu0 %3116
    %3118 = vadd.xlane.f32.xlu0 %v1954
    %v3119 = vpop.xlane.xlu0 %3118
    %3120 = vadd.xlane.f32.xlu0 %v1955
    %v3121 = vpop.xlane.xlu0 %3120
    %3122 = vadd.xlane.f32.xlu0 %v1956
    %v3123 = vpop.xlane.xlu0 %3122
    %3124 = vadd.xlane.f32.xlu0 %v1957
    %v3125 = vpop.xlane.xlu0 %3124
    %3126 = vadd.xlane.f32.xlu0 %v1958
    %v3127 = vpop.xlane.xlu0 %3126
    %3128 = vadd.xlane.f32.xlu0 %v1959
    %v3129 = vpop.xlane.xlu0 %3128
    %3130 = vadd.xlane.f32.xlu0 %v1960
    %v3131 = vpop.xlane.xlu0 %3130
    %3132 = vadd.xlane.f32.xlu0 %v1961
    %v3133 = vpop.xlane.xlu0 %3132
    %3134 = vadd.xlane.f32.xlu0 %v1962
    %v3135 = vpop.xlane.xlu0 %3134
    %3136 = vadd.xlane.f32.xlu0 %v1963
    %v3137 = vpop.xlane.xlu0 %3136
    %3138 = vadd.xlane.f32.xlu0 %v1964
    %v3139 = vpop.xlane.xlu0 %3138
    %3140 = vadd.xlane.f32.xlu0 %v1965
    %v3141 = vpop.xlane.xlu0 %3140
    %3142 = vadd.xlane.f32.xlu0 %v1966
    %v3143 = vpop.xlane.xlu0 %3142
    %3144 = vadd.xlane.f32.xlu0 %v1967
    %v3145 = vpop.xlane.xlu0 %3144
    %3146 = vadd.xlane.f32.xlu0 %v1968
    %v3147 = vpop.xlane.xlu0 %3146
    %3148 = vadd.xlane.f32.xlu0 %v1969
    %v3149 = vpop.xlane.xlu0 %3148
    %3150 = vadd.xlane.f32.xlu0 %v1970
    %v3151 = vpop.xlane.xlu0 %3150
    %3152 = vadd.xlane.f32.xlu0 %v1971
    %v3153 = vpop.xlane.xlu0 %3152
    %3154 = vadd.xlane.f32.xlu0 %v1972
    %v3155 = vpop.xlane.xlu0 %3154
    %3156 = vadd.xlane.f32.xlu0 %v1973
    %v3157 = vpop.xlane.xlu0 %3156
    %3158 = vadd.xlane.f32.xlu0 %v1974
    %v3159 = vpop.xlane.xlu0 %3158
    %3160 = vadd.xlane.f32.xlu0 %v1975
    %v3161 = vpop.xlane.xlu0 %3160
    %3162 = vadd.xlane.f32.xlu0 %v1976
    %v3163 = vpop.xlane.xlu0 %3162
    %3164 = vadd.xlane.f32.xlu0 %v1977
    %v3165 = vpop.xlane.xlu0 %3164
    %3166 = vadd.xlane.f32.xlu0 %v1978
    %v3167 = vpop.xlane.xlu0 %3166
    %3168 = vadd.xlane.f32.xlu0 %v1979
    %v3169 = vpop.xlane.xlu0 %3168
    %3170 = vadd.xlane.f32.xlu0 %v1980
    %v3171 = vpop.xlane.xlu0 %3170
    %3172 = vadd.xlane.f32.xlu0 %v1981
    %v3173 = vpop.xlane.xlu0 %3172
    %3174 = vadd.xlane.f32.xlu0 %v1982
    %v3175 = vpop.xlane.xlu0 %3174
    %3176 = vadd.xlane.f32.xlu0 %v1983
    %v3177 = vpop.xlane.xlu0 %3176
    %3178 = vadd.xlane.f32.xlu0 %v1984
    %v3179 = vpop.xlane.xlu0 %3178
    %3180 = vadd.xlane.f32.xlu0 %v1985
    %v3181 = vpop.xlane.xlu0 %3180
    %3182 = vadd.xlane.f32.xlu0 %v1986
    %v3183 = vpop.xlane.xlu0 %3182
    %3184 = vadd.xlane.f32.xlu0 %v1987
    %v3185 = vpop.xlane.xlu0 %3184
    %3186 = vadd.xlane.f32.xlu0 %v1988
    %v3187 = vpop.xlane.xlu0 %3186
    %3188 = vadd.xlane.f32.xlu0 %v1989
    %v3189 = vpop.xlane.xlu0 %3188
    %3190 = vadd.xlane.f32.xlu0 %v1990
    %v3191 = vpop.xlane.xlu0 %3190
    %3192 = vadd.xlane.f32.xlu0 %v1991
    %v3193 = vpop.xlane.xlu0 %3192
    %3194 = vadd.xlane.f32.xlu0 %v1992
    %v3195 = vpop.xlane.xlu0 %3194
    %3196 = vadd.xlane.f32.xlu0 %v1993
    %v3197 = vpop.xlane.xlu0 %3196
    %3198 = vadd.xlane.f32.xlu0 %v1994
    %v3199 = vpop.xlane.xlu0 %3198
    %3200 = vadd.xlane.f32.xlu0 %v1995
    %v3201 = vpop.xlane.xlu0 %3200
    %3202 = vadd.xlane.f32.xlu0 %v1996
    %v3203 = vpop.xlane.xlu0 %3202
    %3204 = vadd.xlane.f32.xlu0 %v1997
    %v3205 = vpop.xlane.xlu0 %3204
    %3206 = vadd.xlane.f32.xlu0 %v1998
    %v3207 = vpop.xlane.xlu0 %3206
    %3208 = vadd.xlane.f32.xlu0 %v1999
    %v3209 = vpop.xlane.xlu0 %3208
    %3210 = vadd.xlane.f32.xlu0 %v2000
    %v3211 = vpop.xlane.xlu0 %3210
    %3212 = vadd.xlane.f32.xlu0 %v2001
    %v3213 = vpop.xlane.xlu0 %3212
    %3214 = vadd.xlane.f32.xlu0 %v2002
    %v3215 = vpop.xlane.xlu0 %3214
    %3216 = vadd.xlane.f32.xlu0 %v2003
    %v3217 = vpop.xlane.xlu0 %3216
    %3218 = vadd.xlane.f32.xlu0 %v2004
    %v3219 = vpop.xlane.xlu0 %3218
    %3220 = vadd.xlane.f32.xlu0 %v2005
    %v3221 = vpop.xlane.xlu0 %3220
    %3222 = vadd.xlane.f32.xlu0 %v2006
    %v3223 = vpop.xlane.xlu0 %3222
    %3224 = vadd.xlane.f32.xlu0 %v2007
    %v3225 = vpop.xlane.xlu0 %3224
    %3226 = vadd.xlane.f32.xlu0 %v2008
    %v3227 = vpop.xlane.xlu0 %3226
    %3228 = vadd.xlane.f32.xlu0 %v2009
    %v3229 = vpop.xlane.xlu0 %3228
    %3230 = vadd.xlane.f32.xlu0 %v2010
    %v3231 = vpop.xlane.xlu0 %3230
    %3232 = vadd.xlane.f32.xlu0 %v2011
    %v3233 = vpop.xlane.xlu0 %3232
    %3234 = vadd.xlane.f32.xlu0 %v2012
    %v3235 = vpop.xlane.xlu0 %3234
    %3236 = vadd.xlane.f32.xlu0 %v2013
    %v3237 = vpop.xlane.xlu0 %3236
    %3238 = vadd.xlane.f32.xlu0 %v2014
    %v3239 = vpop.xlane.xlu0 %3238
    %3240 = vadd.xlane.f32.xlu0 %v2015
    %v3241 = vpop.xlane.xlu0 %3240
    %3242 = vadd.xlane.f32.xlu0 %v2016
    %v3243 = vpop.xlane.xlu0 %3242
    %3244 = vadd.xlane.f32.xlu0 %v2017
    %v3245 = vpop.xlane.xlu0 %3244
    %3246 = vadd.xlane.f32.xlu0 %v2018
    %v3247 = vpop.xlane.xlu0 %3246
    %3248 = vadd.xlane.f32.xlu0 %v2019
    %v3249 = vpop.xlane.xlu0 %3248
    %3250 = vadd.xlane.f32.xlu0 %v2020
    %v3251 = vpop.xlane.xlu0 %3250
    %3252 = vadd.xlane.f32.xlu0 %v2021
    %v3253 = vpop.xlane.xlu0 %3252
    %3254 = vadd.xlane.f32.xlu0 %v2022
    %v3255 = vpop.xlane.xlu0 %3254
    %3256 = vadd.xlane.f32.xlu0 %v2023
    %v3257 = vpop.xlane.xlu0 %3256
    %3258 = vadd.xlane.f32.xlu0 %v2024
    %v3259 = vpop.xlane.xlu0 %3258
    %3260 = vadd.xlane.f32.xlu0 %v2025
    %v3261 = vpop.xlane.xlu0 %3260
    %3262 = vadd.xlane.f32.xlu0 %v2026
    %v3263 = vpop.xlane.xlu0 %3262
    %3264 = vadd.xlane.f32.xlu0 %v2027
    %v3265 = vpop.xlane.xlu0 %3264
    %3266 = vadd.xlane.f32.xlu0 %v2028
    %v3267 = vpop.xlane.xlu0 %3266
    %3268 = vadd.xlane.f32.xlu0 %v2029
    %v3269 = vpop.xlane.xlu0 %3268
    %3270 = vadd.xlane.f32.xlu0 %v2030
    %v3271 = vpop.xlane.xlu0 %3270
    %3272 = vadd.xlane.f32.xlu0 %v2031
    %v3273 = vpop.xlane.xlu0 %3272
    %3274 = vadd.xlane.f32.xlu0 %v2032
    %v3275 = vpop.xlane.xlu0 %3274
    %3276 = vadd.xlane.f32.xlu0 %v2033
    %v3277 = vpop.xlane.xlu0 %3276
    %3278 = vadd.xlane.f32.xlu0 %v2034
    %v3279 = vpop.xlane.xlu0 %3278
    %3280 = vadd.xlane.f32.xlu0 %v2035
    %v3281 = vpop.xlane.xlu0 %3280
    %3282 = vadd.xlane.f32.xlu0 %v2036
    %v3283 = vpop.xlane.xlu0 %3282
    %3284 = vadd.xlane.f32.xlu0 %v2037
    %v3285 = vpop.xlane.xlu0 %3284
    %3286 = vadd.xlane.f32.xlu0 %v2038
    %v3287 = vpop.xlane.xlu0 %3286
    %3288 = vadd.xlane.f32.xlu0 %v2039
    %v3289 = vpop.xlane.xlu0 %3288
    %3290 = vadd.xlane.f32.xlu0 %v2040
    %v3291 = vpop.xlane.xlu0 %3290
    %3292 = vadd.xlane.f32.xlu0 %v2041
    %v3293 = vpop.xlane.xlu0 %3292
    %3294 = vadd.xlane.f32.xlu0 %v2042
    %v3295 = vpop.xlane.xlu0 %3294
    %3296 = vadd.xlane.f32.xlu0 %v2043
    %v3297 = vpop.xlane.xlu0 %3296
    %3298 = vadd.xlane.f32.xlu0 %v2044
    %v3299 = vpop.xlane.xlu0 %3298
    %3300 = vadd.xlane.f32.xlu0 %v2045
    %v3301 = vpop.xlane.xlu0 %3300
    %3302 = vadd.xlane.f32.xlu0 %v2046
    %v3303 = vpop.xlane.xlu0 %3302
    %3304 = vadd.xlane.f32.xlu0 %v2047
    %v3305 = vpop.xlane.xlu0 %3304
    %3306 = vadd.xlane.f32.xlu0 %v2048
    %v3307 = vpop.xlane.xlu0 %3306
    %3308 = vadd.xlane.f32.xlu0 %v2049
    %v3309 = vpop.xlane.xlu0 %3308
    %3310 = vadd.xlane.f32.xlu0 %v2050
    %v3311 = vpop.xlane.xlu0 %3310
    %3312 = vadd.xlane.f32.xlu0 %v2051
    %v3313 = vpop.xlane.xlu0 %3312
    %3314 = vadd.xlane.f32.xlu0 %v2052
    %v3315 = vpop.xlane.xlu0 %3314
    %3316 = vadd.xlane.f32.xlu0 %v2053
    %v3317 = vpop.xlane.xlu0 %3316
    %3318 = vadd.xlane.f32.xlu0 %v2054
    %v3319 = vpop.xlane.xlu0 %3318
    %3320 = vadd.xlane.f32.xlu0 %v2055
    %v3321 = vpop.xlane.xlu0 %3320
    %3322 = vadd.xlane.f32.xlu0 %v2056
    %v3323 = vpop.xlane.xlu0 %3322
    %3324 = vadd.xlane.f32.xlu0 %v2057
    %v3325 = vpop.xlane.xlu0 %3324
    %3326 = vadd.xlane.f32.xlu0 %v2058
    %v3327 = vpop.xlane.xlu0 %3326
    %3328 = vadd.xlane.f32.xlu0 %v2059
    %v3329 = vpop.xlane.xlu0 %3328
    %3330 = vadd.xlane.f32.xlu0 %v2060
    %v3331 = vpop.xlane.xlu0 %3330
    %3332 = vadd.xlane.f32.xlu0 %v2061
    %v3333 = vpop.xlane.xlu0 %3332
    %3334 = vadd.xlane.f32.xlu0 %v2062
    %v3335 = vpop.xlane.xlu0 %3334
    %3336 = vadd.xlane.f32.xlu0 %v2063
    %v3337 = vpop.xlane.xlu0 %3336
    %3338 = vadd.xlane.f32.xlu0 %v2064
    %v3339 = vpop.xlane.xlu0 %3338
    %3340 = vadd.xlane.f32.xlu0 %v2065
    %v3341 = vpop.xlane.xlu0 %3340
    %3342 = vadd.xlane.f32.xlu0 %v2066
    %v3343 = vpop.xlane.xlu0 %3342
    %3344 = vadd.xlane.f32.xlu0 %v2067
    %v3345 = vpop.xlane.xlu0 %3344
    %3346 = vadd.xlane.f32.xlu0 %v2068
    %v3347 = vpop.xlane.xlu0 %3346
    %3348 = vadd.xlane.f32.xlu0 %v2069
    %v3349 = vpop.xlane.xlu0 %3348
    %3350 = vadd.xlane.f32.xlu0 %v2070
    %v3351 = vpop.xlane.xlu0 %3350
    %3352 = vadd.xlane.f32.xlu0 %v2071
    %v3353 = vpop.xlane.xlu0 %3352
    %3354 = vadd.xlane.f32.xlu0 %v2072
    %v3355 = vpop.xlane.xlu0 %3354
    %3356 = vadd.xlane.f32.xlu0 %v2073
    %v3357 = vpop.xlane.xlu0 %3356
    %3358 = vadd.xlane.f32.xlu0 %v2074
    %v3359 = vpop.xlane.xlu0 %3358
    %3360 = vadd.xlane.f32.xlu0 %v2075
    %v3361 = vpop.xlane.xlu0 %3360
    %3362 = vadd.xlane.f32.xlu0 %v2076
    %v3363 = vpop.xlane.xlu0 %3362
    %3364 = vadd.xlane.f32.xlu0 %v2077
    %v3365 = vpop.xlane.xlu0 %3364
    %3366 = vadd.xlane.f32.xlu0 %v2078
    %v3367 = vpop.xlane.xlu0 %3366
    %3368 = vadd.xlane.f32.xlu0 %v2079
    %v3369 = vpop.xlane.xlu0 %3368
    %3370 = vadd.xlane.f32.xlu0 %v2080
    %v3371 = vpop.xlane.xlu0 %3370
    %3372 = vadd.xlane.f32.xlu0 %v2081
    %v3373 = vpop.xlane.xlu0 %3372
    %3374 = vadd.xlane.f32.xlu0 %v2082
    %v3375 = vpop.xlane.xlu0 %3374
    %3376 = vadd.xlane.f32.xlu0 %v2083
    %v3377 = vpop.xlane.xlu0 %3376
    %3378 = vadd.xlane.f32.xlu0 %v2084
    %v3379 = vpop.xlane.xlu0 %3378
    %3380 = vadd.xlane.f32.xlu0 %v2085
    %v3381 = vpop.xlane.xlu0 %3380
    %3382 = vadd.xlane.f32.xlu0 %v2086
    %v3383 = vpop.xlane.xlu0 %3382
    %3384 = vadd.xlane.f32.xlu0 %v2087
    %v3385 = vpop.xlane.xlu0 %3384
    %3386 = vadd.xlane.f32.xlu0 %v2088
    %v3387 = vpop.xlane.xlu0 %3386
    %3388 = vadd.xlane.f32.xlu0 %v2089
    %v3389 = vpop.xlane.xlu0 %3388
    %3390 = vadd.xlane.f32.xlu0 %v2090
    %v3391 = vpop.xlane.xlu0 %3390
    %3392 = vadd.xlane.f32.xlu0 %v2091
    %v3393 = vpop.xlane.xlu0 %3392
    %3394 = vadd.xlane.f32.xlu0 %v2092
    %v3395 = vpop.xlane.xlu0 %3394
    %3396 = vadd.xlane.f32.xlu0 %v2093
    %v3397 = vpop.xlane.xlu0 %3396
    %3398 = vadd.xlane.f32.xlu0 %v2094
    %v3399 = vpop.xlane.xlu0 %3398
    %3400 = vadd.xlane.f32.xlu0 %v2095
    %v3401 = vpop.xlane.xlu0 %3400
    %3402 = vadd.xlane.f32.xlu0 %v2096
    %v3403 = vpop.xlane.xlu0 %3402
    %3404 = vadd.xlane.f32.xlu0 %v2097
    %v3405 = vpop.xlane.xlu0 %3404
    %3406 = vadd.xlane.f32.xlu0 %v2098
    %v3407 = vpop.xlane.xlu0 %3406
    %3408 = vadd.xlane.f32.xlu0 %v2099
    %v3409 = vpop.xlane.xlu0 %3408
    %3410 = vadd.xlane.f32.xlu0 %v2100
    %v3411 = vpop.xlane.xlu0 %3410
    %3412 = vadd.xlane.f32.xlu0 %v2101
    %v3413 = vpop.xlane.xlu0 %3412
    %3414 = vadd.xlane.f32.xlu0 %v2102
    %v3415 = vpop.xlane.xlu0 %3414
    %3416 = vadd.xlane.f32.xlu0 %v2103
    %v3417 = vpop.xlane.xlu0 %3416
    %3418 = vadd.xlane.f32.xlu0 %v2104
    %v3419 = vpop.xlane.xlu0 %3418
    %3420 = vadd.xlane.f32.xlu0 %v2105
    %v3421 = vpop.xlane.xlu0 %3420
    %3422 = vadd.xlane.f32.xlu0 %v2106
    %v3423 = vpop.xlane.xlu0 %3422
    %3424 = vadd.xlane.f32.xlu0 %v2107
    %v3425 = vpop.xlane.xlu0 %3424
    %3426 = vadd.xlane.f32.xlu0 %v2108
    %v3427 = vpop.xlane.xlu0 %3426
    %3428 = vadd.xlane.f32.xlu0 %v2109
    %v3429 = vpop.xlane.xlu0 %3428
    %3430 = vadd.xlane.f32.xlu0 %v2110
    %v3431 = vpop.xlane.xlu0 %3430
    %3432 = vadd.xlane.f32.xlu0 %v2111
    %v3433 = vpop.xlane.xlu0 %3432
    %3434 = vadd.xlane.f32.xlu0 %v2112
    %v3435 = vpop.xlane.xlu0 %3434
    %3436 = vadd.xlane.f32.xlu0 %v2113
    %v3437 = vpop.xlane.xlu0 %3436
    %3438 = vadd.xlane.f32.xlu0 %v2114
    %v3439 = vpop.xlane.xlu0 %3438
    %3440 = vadd.xlane.f32.xlu0 %v2115
    %v3441 = vpop.xlane.xlu0 %3440
    %3442 = vadd.xlane.f32.xlu0 %v2116
    %v3443 = vpop.xlane.xlu0 %3442
    %3444 = vadd.xlane.f32.xlu0 %v2117
    %v3445 = vpop.xlane.xlu0 %3444
    %3446 = vadd.xlane.f32.xlu0 %v2118
    %v3447 = vpop.xlane.xlu0 %3446
    %3448 = vadd.xlane.f32.xlu0 %v2119
    %v3449 = vpop.xlane.xlu0 %3448
    %3450 = vadd.xlane.f32.xlu0 %v2120
    %v3451 = vpop.xlane.xlu0 %3450
    %3452 = vadd.xlane.f32.xlu0 %v2121
    %v3453 = vpop.xlane.xlu0 %3452
    %3454 = vadd.xlane.f32.xlu0 %v2122
    %v3455 = vpop.xlane.xlu0 %3454
    %3456 = vadd.xlane.f32.xlu0 %v2123
    %v3457 = vpop.xlane.xlu0 %3456
    %3458 = vadd.xlane.f32.xlu0 %v2124
    %v3459 = vpop.xlane.xlu0 %3458
    %3460 = vadd.xlane.f32.xlu0 %v2125
    %v3461 = vpop.xlane.xlu0 %3460
    %3462 = vadd.xlane.f32.xlu0 %v2126
    %v3463 = vpop.xlane.xlu0 %3462
    %3464 = vadd.xlane.f32.xlu0 %v2127
    %v3465 = vpop.xlane.xlu0 %3464
    %3466 = vadd.xlane.f32.xlu0 %v2128
    %v3467 = vpop.xlane.xlu0 %3466
    %3468 = vadd.xlane.f32.xlu0 %v2129
    %v3469 = vpop.xlane.xlu0 %3468
    %3470 = vadd.xlane.f32.xlu0 %v2130
    %v3471 = vpop.xlane.xlu0 %3470
    %3472 = vadd.xlane.f32.xlu0 %v2131
    %v3473 = vpop.xlane.xlu0 %3472
    %3474 = vadd.xlane.f32.xlu0 %v2132
    %v3475 = vpop.xlane.xlu0 %3474
    %3476 = vadd.xlane.f32.xlu0 %v2133
    %v3477 = vpop.xlane.xlu0 %3476
    %3478 = vadd.xlane.f32.xlu0 %v2134
    %v3479 = vpop.xlane.xlu0 %3478
    %3480 = vadd.xlane.f32.xlu0 %v2135
    %v3481 = vpop.xlane.xlu0 %3480
    %3482 = vadd.xlane.f32.xlu0 %v2136
    %v3483 = vpop.xlane.xlu0 %3482
    %3484 = vadd.xlane.f32.xlu0 %v2137
    %v3485 = vpop.xlane.xlu0 %3484
    %3486 = vadd.xlane.f32.xlu0 %v2138
    %v3487 = vpop.xlane.xlu0 %3486
    %3488 = vadd.xlane.f32.xlu0 %v2139
    %v3489 = vpop.xlane.xlu0 %3488
    %3490 = vadd.xlane.f32.xlu0 %v2140
    %v3491 = vpop.xlane.xlu0 %3490
    %3492 = vadd.xlane.f32.xlu0 %v2141
    %v3493 = vpop.xlane.xlu0 %3492
    %3494 = vadd.xlane.f32.xlu0 %v2142
    %v3495 = vpop.xlane.xlu0 %3494
    %3496 = vadd.xlane.f32.xlu0 %v2143
    %v3497 = vpop.xlane.xlu0 %3496
    %3498 = vadd.xlane.f32.xlu0 %v2144
    %v3499 = vpop.xlane.xlu0 %3498
    %3500 = vadd.xlane.f32.xlu0 %v2145
    %v3501 = vpop.xlane.xlu0 %3500
    %3502 = vadd.xlane.f32.xlu0 %v2146
    %v3503 = vpop.xlane.xlu0 %3502
    %3504 = vadd.xlane.f32.xlu0 %v2147
    %v3505 = vpop.xlane.xlu0 %3504
    %3506 = vadd.xlane.f32.xlu0 %v2148
    %v3507 = vpop.xlane.xlu0 %3506
    %3508 = vadd.xlane.f32.xlu0 %v2149
    %v3509 = vpop.xlane.xlu0 %3508
    %3510 = vadd.xlane.f32.xlu0 %v2150
    %v3511 = vpop.xlane.xlu0 %3510
    %3512 = vadd.xlane.f32.xlu0 %v2151
    %v3513 = vpop.xlane.xlu0 %3512
    %3514 = vadd.xlane.f32.xlu0 %v2152
    %v3515 = vpop.xlane.xlu0 %3514
    %3516 = vadd.xlane.f32.xlu0 %v2153
    %v3517 = vpop.xlane.xlu0 %3516
    %3518 = vadd.xlane.f32.xlu0 %v2154
    %v3519 = vpop.xlane.xlu0 %3518
    %3520 = vadd.xlane.f32.xlu0 %v2155
    %v3521 = vpop.xlane.xlu0 %3520
    %3522 = vadd.xlane.f32.xlu0 %v2156
    %v3523 = vpop.xlane.xlu0 %3522
    %3524 = vadd.xlane.f32.xlu0 %v2157
    %v3525 = vpop.xlane.xlu0 %3524
    %3526 = vadd.xlane.f32.xlu0 %v2158
    %v3527 = vpop.xlane.xlu0 %3526
    %3528 = vadd.xlane.f32.xlu0 %v2159
    %v3529 = vpop.xlane.xlu0 %3528
    %3530 = vadd.xlane.f32.xlu0 %v2160
    %v3531 = vpop.xlane.xlu0 %3530
    %3532 = vadd.xlane.f32.xlu0 %v2161
    %v3533 = vpop.xlane.xlu0 %3532
    %3534 = vadd.xlane.f32.xlu0 %v2162
    %v3535 = vpop.xlane.xlu0 %3534
    %3536 = vadd.xlane.f32.xlu0 %v2163
    %v3537 = vpop.xlane.xlu0 %3536
    %3538 = vadd.xlane.f32.xlu0 %v2164
    %v3539 = vpop.xlane.xlu0 %3538
    %3540 = vadd.xlane.f32.xlu0 %v2165
    %v3541 = vpop.xlane.xlu0 %3540
    %3542 = vadd.xlane.f32.xlu0 %v2166
    %v3543 = vpop.xlane.xlu0 %3542
    %3544 = vadd.xlane.f32.xlu0 %v2167
    %v3545 = vpop.xlane.xlu0 %3544
    %3546 = vadd.xlane.f32.xlu0 %v2168
    %v3547 = vpop.xlane.xlu0 %3546
    %3548 = vadd.xlane.f32.xlu0 %v2169
    %v3549 = vpop.xlane.xlu0 %3548
    %3550 = vadd.xlane.f32.xlu0 %v2170
    %v3551 = vpop.xlane.xlu0 %3550
    %3552 = vadd.xlane.f32.xlu0 %v2171
    %v3553 = vpop.xlane.xlu0 %3552
    %3554 = vadd.xlane.f32.xlu0 %v2172
    %v3555 = vpop.xlane.xlu0 %3554
    %3556 = vadd.xlane.f32.xlu0 %v2173
    %v3557 = vpop.xlane.xlu0 %3556
    %3558 = vadd.xlane.f32.xlu0 %v2174
    %v3559 = vpop.xlane.xlu0 %3558
    %3560 = vadd.xlane.f32.xlu0 %v2175
    %v3561 = vpop.xlane.xlu0 %3560
    %3562 = vadd.xlane.f32.xlu0 %v2176
    %v3563 = vpop.xlane.xlu0 %3562
    %3564 = vadd.xlane.f32.xlu0 %v2177
    %v3565 = vpop.xlane.xlu0 %3564
    %3566 = vadd.xlane.f32.xlu0 %v2178
    %v3567 = vpop.xlane.xlu0 %3566
    %3568 = vadd.xlane.f32.xlu0 %v2179
    %v3569 = vpop.xlane.xlu0 %3568
    %3570 = vadd.xlane.f32.xlu0 %v2180
    %v3571 = vpop.xlane.xlu0 %3570
    %3572 = vadd.xlane.f32.xlu0 %v2181
    %v3573 = vpop.xlane.xlu0 %3572
    %3574 = vadd.xlane.f32.xlu0 %v2182
    %v3575 = vpop.xlane.xlu0 %3574
    %3576 = vadd.xlane.f32.xlu0 %v2183
    %v3577 = vpop.xlane.xlu0 %3576
    %3578 = vadd.xlane.f32.xlu0 %v2184
    %v3579 = vpop.xlane.xlu0 %3578
    %3580 = vadd.xlane.f32.xlu0 %v2185
    %v3581 = vpop.xlane.xlu0 %3580
    %3582 = vadd.xlane.f32.xlu0 %v2186
    %v3583 = vpop.xlane.xlu0 %3582
    %3584 = vadd.xlane.f32.xlu0 %v2187
    %v3585 = vpop.xlane.xlu0 %3584
    %3586 = vadd.xlane.f32.xlu0 %v2188
    %v3587 = vpop.xlane.xlu0 %3586
    %3588 = vadd.xlane.f32.xlu0 %v2189
    %v3589 = vpop.xlane.xlu0 %3588
    %3590 = vadd.xlane.f32.xlu0 %v2190
    %v3591 = vpop.xlane.xlu0 %3590
    %3592 = vadd.xlane.f32.xlu0 %v2191
    %v3593 = vpop.xlane.xlu0 %3592
    %3594 = vadd.xlane.f32.xlu0 %v2192
    %v3595 = vpop.xlane.xlu0 %3594
    %3596 = vadd.xlane.f32.xlu0 %v2193
    %v3597 = vpop.xlane.xlu0 %3596
    %3598 = vadd.xlane.f32.xlu0 %v2194
    %v3599 = vpop.xlane.xlu0 %3598
    %3600 = vadd.xlane.f32.xlu0 %v2195
    %v3601 = vpop.xlane.xlu0 %3600
    %3602 = vadd.xlane.f32.xlu0 %v2196
    %v3603 = vpop.xlane.xlu0 %3602
    %3604 = vadd.xlane.f32.xlu0 %v2197
    %v3605 = vpop.xlane.xlu0 %3604
    %3606 = vadd.xlane.f32.xlu0 %v2198
    %v3607 = vpop.xlane.xlu0 %3606
    %3608 = vadd.xlane.f32.xlu0 %v2199
    %v3609 = vpop.xlane.xlu0 %3608
    %3610 = vadd.xlane.f32.xlu0 %v2200
    %v3611 = vpop.xlane.xlu0 %3610
    %3612 = vadd.xlane.f32.xlu0 %v2201
    %v3613 = vpop.xlane.xlu0 %3612
    %3614 = vadd.xlane.f32.xlu0 %v2202
    %v3615 = vpop.xlane.xlu0 %3614
    %3616 = vadd.xlane.f32.xlu0 %v2203
    %v3617 = vpop.xlane.xlu0 %3616
    %3618 = vadd.xlane.f32.xlu0 %v2204
    %v3619 = vpop.xlane.xlu0 %3618
    %3620 = vadd.xlane.f32.xlu0 %v2205
    %v3621 = vpop.xlane.xlu0 %3620
    %3622 = vadd.xlane.f32.xlu0 %v2206
    %v3623 = vpop.xlane.xlu0 %3622
    %3624 = vadd.xlane.f32.xlu0 %v2207
    %v3625 = vpop.xlane.xlu0 %3624
    %3626 = vadd.xlane.f32.xlu0 %v2208
    %v3627 = vpop.xlane.xlu0 %3626
    %3628 = vadd.xlane.f32.xlu0 %v2209
    %v3629 = vpop.xlane.xlu0 %3628
    %3630 = vadd.xlane.f32.xlu0 %v2210
    %v3631 = vpop.xlane.xlu0 %3630
    %3632 = vadd.xlane.f32.xlu0 %v2211
    %v3633 = vpop.xlane.xlu0 %3632
    %3634 = vadd.xlane.f32.xlu0 %v2212
    %v3635 = vpop.xlane.xlu0 %3634
    %3636 = vadd.xlane.f32.xlu0 %v2213
    %v3637 = vpop.xlane.xlu0 %3636
    %3638 = vadd.xlane.f32.xlu0 %v2214
    %v3639 = vpop.xlane.xlu0 %3638
    %3640 = vadd.xlane.f32.xlu0 %v2215
    %v3641 = vpop.xlane.xlu0 %3640
    %3642 = vadd.xlane.f32.xlu0 %v2216
    %v3643 = vpop.xlane.xlu0 %3642
    %3644 = vadd.xlane.f32.xlu0 %v2217
    %v3645 = vpop.xlane.xlu0 %3644
    %3646 = vadd.xlane.f32.xlu0 %v2218
    %v3647 = vpop.xlane.xlu0 %3646
    %3648 = vadd.xlane.f32.xlu0 %v2219
    %v3649 = vpop.xlane.xlu0 %3648
    %3650 = vadd.xlane.f32.xlu0 %v2220
    %v3651 = vpop.xlane.xlu0 %3650
    %3652 = vadd.xlane.f32.xlu0 %v2221
    %v3653 = vpop.xlane.xlu0 %3652
    %3654 = vadd.xlane.f32.xlu0 %v2222
    %v3655 = vpop.xlane.xlu0 %3654
    %3656 = vadd.xlane.f32.xlu0 %v2223
    %v3657 = vpop.xlane.xlu0 %3656
    %3658 = vadd.xlane.f32.xlu0 %v2224
    %v3659 = vpop.xlane.xlu0 %3658
    %3660 = vadd.xlane.f32.xlu0 %v2225
    %v3661 = vpop.xlane.xlu0 %3660
    %3662 = vadd.xlane.f32.xlu0 %v2226
    %v3663 = vpop.xlane.xlu0 %3662
    %3664 = vadd.xlane.f32.xlu0 %v2227
    %v3665 = vpop.xlane.xlu0 %3664
    %3666 = vadd.xlane.f32.xlu0 %v2228
    %v3667 = vpop.xlane.xlu0 %3666
    %3668 = vadd.xlane.f32.xlu0 %v2229
    %v3669 = vpop.xlane.xlu0 %3668
    %3670 = vadd.xlane.f32.xlu0 %v2230
    %v3671 = vpop.xlane.xlu0 %3670
    %3672 = vadd.xlane.f32.xlu0 %v2231
    %v3673 = vpop.xlane.xlu0 %3672
    %3674 = vadd.xlane.f32.xlu0 %v2232
    %v3675 = vpop.xlane.xlu0 %3674
    %3676 = vadd.xlane.f32.xlu0 %v2233
    %v3677 = vpop.xlane.xlu0 %3676
    %3678 = vadd.xlane.f32.xlu0 %v2234
    %v3679 = vpop.xlane.xlu0 %3678
    %3680 = vadd.xlane.f32.xlu0 %v2235
    %v3681 = vpop.xlane.xlu0 %3680
    %3682 = vadd.xlane.f32.xlu0 %v2236
    %v3683 = vpop.xlane.xlu0 %3682
    %3684 = vadd.xlane.f32.xlu0 %v2237
    %v3685 = vpop.xlane.xlu0 %3684
    %3686 = vadd.xlane.f32.xlu0 %v2238
    %v3687 = vpop.xlane.xlu0 %3686
    %3688 = vadd.xlane.f32.xlu0 %v2239
    %v3689 = vpop.xlane.xlu0 %3688
    %3690 = vadd.xlane.f32.xlu0 %v2240
    %v3691 = vpop.xlane.xlu0 %3690
    %3692 = vadd.xlane.f32.xlu0 %v2241
    %v3693 = vpop.xlane.xlu0 %3692
    %3694 = vadd.xlane.f32.xlu0 %v2242
    %v3695 = vpop.xlane.xlu0 %3694
    %3696 = vadd.xlane.f32.xlu0 %v2243
    %v3697 = vpop.xlane.xlu0 %3696
    %3698 = vadd.xlane.f32.xlu0 %v2244
    %v3699 = vpop.xlane.xlu0 %3698
    %3700 = vadd.xlane.f32.xlu0 %v2245
    %v3701 = vpop.xlane.xlu0 %3700
    %3702 = vadd.xlane.f32.xlu0 %v2246
    %v3703 = vpop.xlane.xlu0 %3702
    %3704 = vadd.xlane.f32.xlu0 %v2247
    %v3705 = vpop.xlane.xlu0 %3704
    %3706 = vadd.xlane.f32.xlu0 %v2248
    %v3707 = vpop.xlane.xlu0 %3706
    %3708 = vadd.xlane.f32.xlu0 %v2249
    %v3709 = vpop.xlane.xlu0 %3708
    %3710 = vadd.xlane.f32.xlu0 %v2250
    %v3711 = vpop.xlane.xlu0 %3710
    %3712 = vadd.xlane.f32.xlu0 %v2251
    %v3713 = vpop.xlane.xlu0 %3712
    %3714 = vadd.xlane.f32.xlu0 %v2252
    %v3715 = vpop.xlane.xlu0 %3714
    %3716 = vadd.xlane.f32.xlu0 %v2253
    %v3717 = vpop.xlane.xlu0 %3716
    %3718 = vadd.xlane.f32.xlu0 %v2254
    %v3719 = vpop.xlane.xlu0 %3718
    %3720 = vadd.xlane.f32.xlu0 %v2255
    %v3721 = vpop.xlane.xlu0 %3720
    %3722 = vadd.xlane.f32.xlu0 %v2256
    %v3723 = vpop.xlane.xlu0 %3722
    %3724 = vadd.xlane.f32.xlu0 %v2257
    %v3725 = vpop.xlane.xlu0 %3724
    %3726 = vadd.xlane.f32.xlu0 %v2258
    %v3727 = vpop.xlane.xlu0 %3726
    %3728 = vadd.xlane.f32.xlu0 %v2259
    %v3729 = vpop.xlane.xlu0 %3728
    %3730 = vadd.xlane.f32.xlu0 %v2260
    %v3731 = vpop.xlane.xlu0 %3730
    %3732 = vadd.xlane.f32.xlu0 %v2261
    %v3733 = vpop.xlane.xlu0 %3732
    %3734 = vadd.xlane.f32.xlu0 %v2262
    %v3735 = vpop.xlane.xlu0 %3734
    %3736 = vadd.xlane.f32.xlu0 %v2263
    %v3737 = vpop.xlane.xlu0 %3736
    %3738 = vadd.xlane.f32.xlu0 %v2264
    %v3739 = vpop.xlane.xlu0 %3738
    %3740 = vadd.xlane.f32.xlu0 %v2265
    %v3741 = vpop.xlane.xlu0 %3740
    %3742 = vadd.xlane.f32.xlu0 %v2266
    %v3743 = vpop.xlane.xlu0 %3742
    %3744 = vadd.xlane.f32.xlu0 %v2267
    %v3745 = vpop.xlane.xlu0 %3744
    %3746 = vadd.xlane.f32.xlu0 %v2268
    %v3747 = vpop.xlane.xlu0 %3746
    %3748 = vadd.xlane.f32.xlu0 %v2269
    %v3749 = vpop.xlane.xlu0 %3748
    %3750 = vadd.xlane.f32.xlu0 %v2270
    %v3751 = vpop.xlane.xlu0 %3750
    %3752 = vadd.xlane.f32.xlu0 %v2271
    %v3753 = vpop.xlane.xlu0 %3752
    %3754 = vadd.xlane.f32.xlu0 %v2272
    %v3755 = vpop.xlane.xlu0 %3754
    %3756 = vadd.xlane.f32.xlu0 %v2273
    %v3757 = vpop.xlane.xlu0 %3756
    %3758 = vadd.xlane.f32.xlu0 %v2274
    %v3759 = vpop.xlane.xlu0 %3758
    %3760 = vadd.xlane.f32.xlu0 %v2275
    %v3761 = vpop.xlane.xlu0 %3760
    %3762 = vadd.xlane.f32.xlu0 %v2276
    %v3763 = vpop.xlane.xlu0 %3762
    %3764 = vadd.xlane.f32.xlu0 %v2277
    %v3765 = vpop.xlane.xlu0 %3764
    %3766 = vadd.xlane.f32.xlu0 %v2278
    %v3767 = vpop.xlane.xlu0 %3766
    %3768 = vadd.xlane.f32.xlu0 %v2279
    %v3769 = vpop.xlane.xlu0 %3768
    %3770 = vadd.xlane.f32.xlu0 %v2280
    %v3771 = vpop.xlane.xlu0 %3770
    %3772 = vadd.xlane.f32.xlu0 %v2281
    %v3773 = vpop.xlane.xlu0 %3772
    %3774 = vadd.xlane.f32.xlu0 %v2282
    %v3775 = vpop.xlane.xlu0 %3774
    %3776 = vadd.xlane.f32.xlu0 %v2283
    %v3777 = vpop.xlane.xlu0 %3776
    %3778 = vadd.xlane.f32.xlu0 %v2284
    %v3779 = vpop.xlane.xlu0 %3778
    %3780 = vadd.xlane.f32.xlu0 %v2285
    %v3781 = vpop.xlane.xlu0 %3780
    %3782 = vadd.xlane.f32.xlu0 %v2286
    %v3783 = vpop.xlane.xlu0 %3782
    %3784 = vadd.xlane.f32.xlu0 %v2287
    %v3785 = vpop.xlane.xlu0 %3784
    %3786 = vadd.xlane.f32.xlu0 %v2288
    %v3787 = vpop.xlane.xlu0 %3786
    %3788 = vadd.xlane.f32.xlu0 %v2289
    %v3789 = vpop.xlane.xlu0 %3788
    %3790 = vadd.xlane.f32.xlu0 %v2290
    %v3791 = vpop.xlane.xlu0 %3790
    %3792 = vadd.xlane.f32.xlu0 %v2291
    %v3793 = vpop.xlane.xlu0 %3792
    %3794 = vadd.xlane.f32.xlu0 %v2292
    %v3795 = vpop.xlane.xlu0 %3794
    %3796 = vadd.xlane.f32.xlu0 %v2293
    %v3797 = vpop.xlane.xlu0 %3796
    %3798 = vadd.xlane.f32.xlu0 %v2294
    %v3799 = vpop.xlane.xlu0 %3798
    %3800 = vadd.xlane.f32.xlu0 %v2295
    %v3801 = vpop.xlane.xlu0 %3800
    %3802 = vadd.xlane.f32.xlu0 %v2296
    %v3803 = vpop.xlane.xlu0 %3802
    %3804 = vadd.xlane.f32.xlu0 %v2297
    %v3805 = vpop.xlane.xlu0 %3804
    %3806 = vadd.xlane.f32.xlu0 %v2298
    %v3807 = vpop.xlane.xlu0 %3806
    %3808 = vadd.xlane.f32.xlu0 %v2299
    %v3809 = vpop.xlane.xlu0 %3808
    %3810 = vadd.xlane.f32.xlu0 %v2300
    %v3811 = vpop.xlane.xlu0 %3810
    %3812 = vadd.xlane.f32.xlu0 %v2301
    %v3813 = vpop.xlane.xlu0 %3812
    %3814 = vadd.xlane.f32.xlu0 %v2302
    %v3815 = vpop.xlane.xlu0 %3814
    %3816 = vadd.xlane.f32.xlu0 %v2303
    %v3817 = vpop.xlane.xlu0 %3816
    %3818 = vadd.xlane.f32.xlu0 %v2304
    %v3819 = vpop.xlane.xlu0 %3818
    %3820 = vadd.xlane.f32.xlu0 %v2305
    %v3821 = vpop.xlane.xlu0 %3820
    %3822 = vadd.xlane.f32.xlu0 %v2306
    %v3823 = vpop.xlane.xlu0 %3822
    %3824 = vadd.xlane.f32.xlu0 %v2307
    %v3825 = vpop.xlane.xlu0 %3824
    %3826 = vadd.xlane.f32.xlu0 %v2308
    %v3827 = vpop.xlane.xlu0 %3826
    %3828 = vadd.xlane.f32.xlu0 %v2309
    %v3829 = vpop.xlane.xlu0 %3828
    %3830 = vadd.xlane.f32.xlu0 %v2310
    %v3831 = vpop.xlane.xlu0 %3830
    %3832 = vadd.xlane.f32.xlu0 %v2311
    %v3833 = vpop.xlane.xlu0 %3832
    %3834 = vadd.xlane.f32.xlu0 %v2312
    %v3835 = vpop.xlane.xlu0 %3834
    %3836 = vadd.xlane.f32.xlu0 %v2313
    %v3837 = vpop.xlane.xlu0 %3836
    %3838 = vadd.xlane.f32.xlu0 %v2314
    %v3839 = vpop.xlane.xlu0 %3838
    %3840 = vadd.xlane.f32.xlu0 %v2315
    %v3841 = vpop.xlane.xlu0 %3840
    %3842 = vadd.xlane.f32.xlu0 %v2316
    %v3843 = vpop.xlane.xlu0 %3842
    %3844 = vadd.xlane.f32.xlu0 %v2317
    %v3845 = vpop.xlane.xlu0 %3844
    %3846 = vadd.xlane.f32.xlu0 %v2318
    %v3847 = vpop.xlane.xlu0 %3846
    %3848 = vadd.xlane.f32.xlu0 %v2319
    %v3849 = vpop.xlane.xlu0 %3848
    %3850 = vadd.xlane.f32.xlu0 %v2320
    %v3851 = vpop.xlane.xlu0 %3850
    %3852 = vadd.xlane.f32.xlu0 %v2321
    %v3853 = vpop.xlane.xlu0 %3852
    %3854 = vadd.xlane.f32.xlu0 %v2322
    %v3855 = vpop.xlane.xlu0 %3854
    %3856 = vadd.xlane.f32.xlu0 %v2323
    %v3857 = vpop.xlane.xlu0 %3856
    %3858 = vadd.xlane.f32.xlu0 %v2324
    %v3859 = vpop.xlane.xlu0 %3858
    %3860 = vadd.xlane.f32.xlu0 %v2325
    %v3861 = vpop.xlane.xlu0 %3860
    %vm3862 = vcmask 7168
    %3863 = vst.msk [vmem:[%s1] sm:$0xff] %vm3862, %v2327
    %3864 = vst.msk [vmem:[%s1 + $0x8] sm:$0xff] %vm3862, %v2329
    %3865 = vst.msk [vmem:[%s1 + $0x10] sm:$0xff] %vm3862, %v2331
    %3866 = vst.msk [vmem:[%s1 + $0x18] sm:$0xff] %vm3862, %v2333
    %3867 = vst.msk [vmem:[%s1 + $0x20] sm:$0xff] %vm3862, %v2335
    %3868 = vst.msk [vmem:[%s1 + $0x28] sm:$0xff] %vm3862, %v2337
    %3869 = vst.msk [vmem:[%s1 + $0x30] sm:$0xff] %vm3862, %v2339
    %3870 = vst.msk [vmem:[%s1 + $0x38] sm:$0xff] %vm3862, %v2341
    %3871 = vst.msk [vmem:[%s1 + $0x40] sm:$0xff] %vm3862, %v2343
    %3872 = vst.msk [vmem:[%s1 + $0x48] sm:$0xff] %vm3862, %v2345
    %3873 = vst.msk [vmem:[%s1 + $0x50] sm:$0xff] %vm3862, %v2347
    %3874 = vst.msk [vmem:[%s1 + $0x58] sm:$0xff] %vm3862, %v2349
    %3875 = vst.msk [vmem:[%s1 + $0x60] sm:$0xff] %vm3862, %v2351
    %3876 = vst.msk [vmem:[%s1 + $0x68] sm:$0xff] %vm3862, %v2353
    %3877 = vst.msk [vmem:[%s1 + $0x70] sm:$0xff] %vm3862, %v2355
    %3878 = vst.msk [vmem:[%s1 + $0x78] sm:$0xff] %vm3862, %v2357
    %3879 = vst.msk [vmem:[%s1 + $0x80] sm:$0xff] %vm3862, %v2359
    %3880 = vst.msk [vmem:[%s1 + $0x88] sm:$0xff] %vm3862, %v2361
    %3881 = vst.msk [vmem:[%s1 + $0x90] sm:$0xff] %vm3862, %v2363
    %3882 = vst.msk [vmem:[%s1 + $0x98] sm:$0xff] %vm3862, %v2365
    %3883 = vst.msk [vmem:[%s1 + $0xa0] sm:$0xff] %vm3862, %v2367
    %3884 = vst.msk [vmem:[%s1 + $0xa8] sm:$0xff] %vm3862, %v2369
    %3885 = vst.msk [vmem:[%s1 + $0xb0] sm:$0xff] %vm3862, %v2371
    %3886 = vst.msk [vmem:[%s1 + $0xb8] sm:$0xff] %vm3862, %v2373
    %3887 = vst.msk [vmem:[%s1 + $0xc0] sm:$0xff] %vm3862, %v2375
    %3888 = vst.msk [vmem:[%s1 + $0xc8] sm:$0xff] %vm3862, %v2377
    %3889 = vst.msk [vmem:[%s1 + $0xd0] sm:$0xff] %vm3862, %v2379
    %3890 = vst.msk [vmem:[%s1 + $0xd8] sm:$0xff] %vm3862, %v2381
    %3891 = vst.msk [vmem:[%s1 + $0xe0] sm:$0xff] %vm3862, %v2383
    %3892 = vst.msk [vmem:[%s1 + $0xe8] sm:$0xff] %vm3862, %v2385
    %3893 = vst.msk [vmem:[%s1 + $0xf0] sm:$0xff] %vm3862, %v2387
    %3894 = vst.msk [vmem:[%s1 + $0xf8] sm:$0xff] %vm3862, %v2389
    %3895 = vst.msk [vmem:[%s1 + $0x100] sm:$0xff] %vm3862, %v2391
    %3896 = vst.msk [vmem:[%s1 + $0x108] sm:$0xff] %vm3862, %v2393
    %3897 = vst.msk [vmem:[%s1 + $0x110] sm:$0xff] %vm3862, %v2395
    %3898 = vst.msk [vmem:[%s1 + $0x118] sm:$0xff] %vm3862, %v2397
    %3899 = vst.msk [vmem:[%s1 + $0x120] sm:$0xff] %vm3862, %v2399
    %3900 = vst.msk [vmem:[%s1 + $0x128] sm:$0xff] %vm3862, %v2401
    %3901 = vst.msk [vmem:[%s1 + $0x130] sm:$0xff] %vm3862, %v2403
    %3902 = vst.msk [vmem:[%s1 + $0x138] sm:$0xff] %vm3862, %v2405
    %3903 = vst.msk [vmem:[%s1 + $0x140] sm:$0xff] %vm3862, %v2407
    %3904 = vst.msk [vmem:[%s1 + $0x148] sm:$0xff] %vm3862, %v2409
    %3905 = vst.msk [vmem:[%s1 + $0x150] sm:$0xff] %vm3862, %v2411
    %3906 = vst.msk [vmem:[%s1 + $0x158] sm:$0xff] %vm3862, %v2413
    %3907 = vst.msk [vmem:[%s1 + $0x160] sm:$0xff] %vm3862, %v2415
    %3908 = vst.msk [vmem:[%s1 + $0x168] sm:$0xff] %vm3862, %v2417
    %3909 = vst.msk [vmem:[%s1 + $0x170] sm:$0xff] %vm3862, %v2419
    %3910 = vst.msk [vmem:[%s1 + $0x178] sm:$0xff] %vm3862, %v2421
    %3911 = vst.msk [vmem:[%s1 + $0x180] sm:$0xff] %vm3862, %v2423
    %3912 = vst.msk [vmem:[%s1 + $0x188] sm:$0xff] %vm3862, %v2425
    %3913 = vst.msk [vmem:[%s1 + $0x190] sm:$0xff] %vm3862, %v2427
    %3914 = vst.msk [vmem:[%s1 + $0x198] sm:$0xff] %vm3862, %v2429
    %3915 = vst.msk [vmem:[%s1 + $0x1a0] sm:$0xff] %vm3862, %v2431
    %3916 = vst.msk [vmem:[%s1 + $0x1a8] sm:$0xff] %vm3862, %v2433
    %3917 = vst.msk [vmem:[%s1 + $0x1b0] sm:$0xff] %vm3862, %v2435
    %3918 = vst.msk [vmem:[%s1 + $0x1b8] sm:$0xff] %vm3862, %v2437
    %3919 = vst.msk [vmem:[%s1 + $0x1c0] sm:$0xff] %vm3862, %v2439
    %3920 = vst.msk [vmem:[%s1 + $0x1c8] sm:$0xff] %vm3862, %v2441
    %3921 = vst.msk [vmem:[%s1 + $0x1d0] sm:$0xff] %vm3862, %v2443
    %3922 = vst.msk [vmem:[%s1 + $0x1d8] sm:$0xff] %vm3862, %v2445
    %3923 = vst.msk [vmem:[%s1 + $0x1e0] sm:$0xff] %vm3862, %v2447
    %3924 = vst.msk [vmem:[%s1 + $0x1e8] sm:$0xff] %vm3862, %v2449
    %3925 = vst.msk [vmem:[%s1 + $0x1f0] sm:$0xff] %vm3862, %v2451
    %3926 = vst.msk [vmem:[%s1 + $0x1f8] sm:$0xff] %vm3862, %v2453
    %3927 = vst.msk [vmem:[%s1 + $0x200] sm:$0xff] %vm3862, %v2455
    %3928 = vst.msk [vmem:[%s1 + $0x208] sm:$0xff] %vm3862, %v2457
    %3929 = vst.msk [vmem:[%s1 + $0x210] sm:$0xff] %vm3862, %v2459
    %3930 = vst.msk [vmem:[%s1 + $0x218] sm:$0xff] %vm3862, %v2461
    %3931 = vst.msk [vmem:[%s1 + $0x220] sm:$0xff] %vm3862, %v2463
    %3932 = vst.msk [vmem:[%s1 + $0x228] sm:$0xff] %vm3862, %v2465
    %3933 = vst.msk [vmem:[%s1 + $0x230] sm:$0xff] %vm3862, %v2467
    %3934 = vst.msk [vmem:[%s1 + $0x238] sm:$0xff] %vm3862, %v2469
    %3935 = vst.msk [vmem:[%s1 + $0x240] sm:$0xff] %vm3862, %v2471
    %3936 = vst.msk [vmem:[%s1 + $0x248] sm:$0xff] %vm3862, %v2473
    %3937 = vst.msk [vmem:[%s1 + $0x250] sm:$0xff] %vm3862, %v2475
    %3938 = vst.msk [vmem:[%s1 + $0x258] sm:$0xff] %vm3862, %v2477
    %3939 = vst.msk [vmem:[%s1 + $0x260] sm:$0xff] %vm3862, %v2479
    %3940 = vst.msk [vmem:[%s1 + $0x268] sm:$0xff] %vm3862, %v2481
    %3941 = vst.msk [vmem:[%s1 + $0x270] sm:$0xff] %vm3862, %v2483
    %3942 = vst.msk [vmem:[%s1 + $0x278] sm:$0xff] %vm3862, %v2485
    %3943 = vst.msk [vmem:[%s1 + $0x280] sm:$0xff] %vm3862, %v2487
    %3944 = vst.msk [vmem:[%s1 + $0x288] sm:$0xff] %vm3862, %v2489
    %3945 = vst.msk [vmem:[%s1 + $0x290] sm:$0xff] %vm3862, %v2491
    %3946 = vst.msk [vmem:[%s1 + $0x298] sm:$0xff] %vm3862, %v2493
    %3947 = vst.msk [vmem:[%s1 + $0x2a0] sm:$0xff] %vm3862, %v2495
    %3948 = vst.msk [vmem:[%s1 + $0x2a8] sm:$0xff] %vm3862, %v2497
    %3949 = vst.msk [vmem:[%s1 + $0x2b0] sm:$0xff] %vm3862, %v2499
    %3950 = vst.msk [vmem:[%s1 + $0x2b8] sm:$0xff] %vm3862, %v2501
    %3951 = vst.msk [vmem:[%s1 + $0x2c0] sm:$0xff] %vm3862, %v2503
    %3952 = vst.msk [vmem:[%s1 + $0x2c8] sm:$0xff] %vm3862, %v2505
    %3953 = vst.msk [vmem:[%s1 + $0x2d0] sm:$0xff] %vm3862, %v2507
    %3954 = vst.msk [vmem:[%s1 + $0x2d8] sm:$0xff] %vm3862, %v2509
    %3955 = vst.msk [vmem:[%s1 + $0x2e0] sm:$0xff] %vm3862, %v2511
    %3956 = vst.msk [vmem:[%s1 + $0x2e8] sm:$0xff] %vm3862, %v2513
    %3957 = vst.msk [vmem:[%s1 + $0x2f0] sm:$0xff] %vm3862, %v2515
    %3958 = vst.msk [vmem:[%s1 + $0x2f8] sm:$0xff] %vm3862, %v2517
    %3959 = vst.msk [vmem:[%s1 + $0x300] sm:$0xff] %vm3862, %v2519
    %3960 = vst.msk [vmem:[%s1 + $0x308] sm:$0xff] %vm3862, %v2521
    %3961 = vst.msk [vmem:[%s1 + $0x310] sm:$0xff] %vm3862, %v2523
    %3962 = vst.msk [vmem:[%s1 + $0x318] sm:$0xff] %vm3862, %v2525
    %3963 = vst.msk [vmem:[%s1 + $0x320] sm:$0xff] %vm3862, %v2527
    %3964 = vst.msk [vmem:[%s1 + $0x328] sm:$0xff] %vm3862, %v2529
    %3965 = vst.msk [vmem:[%s1 + $0x330] sm:$0xff] %vm3862, %v2531
    %3966 = vst.msk [vmem:[%s1 + $0x338] sm:$0xff] %vm3862, %v2533
    %3967 = vst.msk [vmem:[%s1 + $0x340] sm:$0xff] %vm3862, %v2535
    %3968 = vst.msk [vmem:[%s1 + $0x348] sm:$0xff] %vm3862, %v2537
    %3969 = vst.msk [vmem:[%s1 + $0x350] sm:$0xff] %vm3862, %v2539
    %3970 = vst.msk [vmem:[%s1 + $0x358] sm:$0xff] %vm3862, %v2541
    %3971 = vst.msk [vmem:[%s1 + $0x360] sm:$0xff] %vm3862, %v2543
    %3972 = vst.msk [vmem:[%s1 + $0x368] sm:$0xff] %vm3862, %v2545
    %3973 = vst.msk [vmem:[%s1 + $0x370] sm:$0xff] %vm3862, %v2547
    %3974 = vst.msk [vmem:[%s1 + $0x378] sm:$0xff] %vm3862, %v2549
    %3975 = vst.msk [vmem:[%s1 + $0x380] sm:$0xff] %vm3862, %v2551
    %3976 = vst.msk [vmem:[%s1 + $0x388] sm:$0xff] %vm3862, %v2553
    %3977 = vst.msk [vmem:[%s1 + $0x390] sm:$0xff] %vm3862, %v2555
    %3978 = vst.msk [vmem:[%s1 + $0x398] sm:$0xff] %vm3862, %v2557
    %3979 = vst.msk [vmem:[%s1 + $0x3a0] sm:$0xff] %vm3862, %v2559
    %3980 = vst.msk [vmem:[%s1 + $0x3a8] sm:$0xff] %vm3862, %v2561
    %3981 = vst.msk [vmem:[%s1 + $0x3b0] sm:$0xff] %vm3862, %v2563
    %3982 = vst.msk [vmem:[%s1 + $0x3b8] sm:$0xff] %vm3862, %v2565
    %3983 = vst.msk [vmem:[%s1 + $0x3c0] sm:$0xff] %vm3862, %v2567
    %3984 = vst.msk [vmem:[%s1 + $0x3c8] sm:$0xff] %vm3862, %v2569
    %3985 = vst.msk [vmem:[%s1 + $0x3d0] sm:$0xff] %vm3862, %v2571
    %3986 = vst.msk [vmem:[%s1 + $0x3d8] sm:$0xff] %vm3862, %v2573
    %3987 = vst.msk [vmem:[%s1 + $0x3e0] sm:$0xff] %vm3862, %v2575
    %3988 = vst.msk [vmem:[%s1 + $0x3e8] sm:$0xff] %vm3862, %v2577
    %3989 = vst.msk [vmem:[%s1 + $0x3f0] sm:$0xff] %vm3862, %v2579
    %3990 = vst.msk [vmem:[%s1 + $0x3f8] sm:$0xff] %vm3862, %v2581
    %3991 = vst.msk [vmem:[%s1 + $0x400] sm:$0xff] %vm3862, %v2583
    %3992 = vst.msk [vmem:[%s1 + $0x408] sm:$0xff] %vm3862, %v2585
    %3993 = vst.msk [vmem:[%s1 + $0x410] sm:$0xff] %vm3862, %v2587
    %3994 = vst.msk [vmem:[%s1 + $0x418] sm:$0xff] %vm3862, %v2589
    %3995 = vst.msk [vmem:[%s1 + $0x420] sm:$0xff] %vm3862, %v2591
    %3996 = vst.msk [vmem:[%s1 + $0x428] sm:$0xff] %vm3862, %v2593
    %3997 = vst.msk [vmem:[%s1 + $0x430] sm:$0xff] %vm3862, %v2595
    %3998 = vst.msk [vmem:[%s1 + $0x438] sm:$0xff] %vm3862, %v2597
    %3999 = vst.msk [vmem:[%s1 + $0x440] sm:$0xff] %vm3862, %v2599
    %4000 = vst.msk [vmem:[%s1 + $0x448] sm:$0xff] %vm3862, %v2601
    %4001 = vst.msk [vmem:[%s1 + $0x450] sm:$0xff] %vm3862, %v2603
    %4002 = vst.msk [vmem:[%s1 + $0x458] sm:$0xff] %vm3862, %v2605
    %4003 = vst.msk [vmem:[%s1 + $0x460] sm:$0xff] %vm3862, %v2607
    %4004 = vst.msk [vmem:[%s1 + $0x468] sm:$0xff] %vm3862, %v2609
    %4005 = vst.msk [vmem:[%s1 + $0x470] sm:$0xff] %vm3862, %v2611
    %4006 = vst.msk [vmem:[%s1 + $0x478] sm:$0xff] %vm3862, %v2613
    %4007 = vst.msk [vmem:[%s1 + $0x480] sm:$0xff] %vm3862, %v2615
    %4008 = vst.msk [vmem:[%s1 + $0x488] sm:$0xff] %vm3862, %v2617
    %4009 = vst.msk [vmem:[%s1 + $0x490] sm:$0xff] %vm3862, %v2619
    %4010 = vst.msk [vmem:[%s1 + $0x498] sm:$0xff] %vm3862, %v2621
    %4011 = vst.msk [vmem:[%s1 + $0x4a0] sm:$0xff] %vm3862, %v2623
    %4012 = vst.msk [vmem:[%s1 + $0x4a8] sm:$0xff] %vm3862, %v2625
    %4013 = vst.msk [vmem:[%s1 + $0x4b0] sm:$0xff] %vm3862, %v2627
    %4014 = vst.msk [vmem:[%s1 + $0x4b8] sm:$0xff] %vm3862, %v2629
    %4015 = vst.msk [vmem:[%s1 + $0x4c0] sm:$0xff] %vm3862, %v2631
    %4016 = vst.msk [vmem:[%s1 + $0x4c8] sm:$0xff] %vm3862, %v2633
    %4017 = vst.msk [vmem:[%s1 + $0x4d0] sm:$0xff] %vm3862, %v2635
    %4018 = vst.msk [vmem:[%s1 + $0x4d8] sm:$0xff] %vm3862, %v2637
    %4019 = vst.msk [vmem:[%s1 + $0x4e0] sm:$0xff] %vm3862, %v2639
    %4020 = vst.msk [vmem:[%s1 + $0x4e8] sm:$0xff] %vm3862, %v2641
    %4021 = vst.msk [vmem:[%s1 + $0x4f0] sm:$0xff] %vm3862, %v2643
    %4022 = vst.msk [vmem:[%s1 + $0x4f8] sm:$0xff] %vm3862, %v2645
    %4023 = vst.msk [vmem:[%s1 + $0x500] sm:$0xff] %vm3862, %v2647
    %4024 = vst.msk [vmem:[%s1 + $0x508] sm:$0xff] %vm3862, %v2649
    %4025 = vst.msk [vmem:[%s1 + $0x510] sm:$0xff] %vm3862, %v2651
    %4026 = vst.msk [vmem:[%s1 + $0x518] sm:$0xff] %vm3862, %v2653
    %4027 = vst.msk [vmem:[%s1 + $0x520] sm:$0xff] %vm3862, %v2655
    %4028 = vst.msk [vmem:[%s1 + $0x528] sm:$0xff] %vm3862, %v2657
    %4029 = vst.msk [vmem:[%s1 + $0x530] sm:$0xff] %vm3862, %v2659
    %4030 = vst.msk [vmem:[%s1 + $0x538] sm:$0xff] %vm3862, %v2661
    %4031 = vst.msk [vmem:[%s1 + $0x540] sm:$0xff] %vm3862, %v2663
    %4032 = vst.msk [vmem:[%s1 + $0x548] sm:$0xff] %vm3862, %v2665
    %4033 = vst.msk [vmem:[%s1 + $0x550] sm:$0xff] %vm3862, %v2667
    %4034 = vst.msk [vmem:[%s1 + $0x558] sm:$0xff] %vm3862, %v2669
    %4035 = vst.msk [vmem:[%s1 + $0x560] sm:$0xff] %vm3862, %v2671
    %4036 = vst.msk [vmem:[%s1 + $0x568] sm:$0xff] %vm3862, %v2673
    %4037 = vst.msk [vmem:[%s1 + $0x570] sm:$0xff] %vm3862, %v2675
    %4038 = vst.msk [vmem:[%s1 + $0x578] sm:$0xff] %vm3862, %v2677
    %4039 = vst.msk [vmem:[%s1 + $0x580] sm:$0xff] %vm3862, %v2679
    %4040 = vst.msk [vmem:[%s1 + $0x588] sm:$0xff] %vm3862, %v2681
    %4041 = vst.msk [vmem:[%s1 + $0x590] sm:$0xff] %vm3862, %v2683
    %4042 = vst.msk [vmem:[%s1 + $0x598] sm:$0xff] %vm3862, %v2685
    %4043 = vst.msk [vmem:[%s1 + $0x5a0] sm:$0xff] %vm3862, %v2687
    %4044 = vst.msk [vmem:[%s1 + $0x5a8] sm:$0xff] %vm3862, %v2689
    %4045 = vst.msk [vmem:[%s1 + $0x5b0] sm:$0xff] %vm3862, %v2691
    %4046 = vst.msk [vmem:[%s1 + $0x5b8] sm:$0xff] %vm3862, %v2693
    %4047 = vst.msk [vmem:[%s1 + $0x5c0] sm:$0xff] %vm3862, %v2695
    %4048 = vst.msk [vmem:[%s1 + $0x5c8] sm:$0xff] %vm3862, %v2697
    %4049 = vst.msk [vmem:[%s1 + $0x5d0] sm:$0xff] %vm3862, %v2699
    %4050 = vst.msk [vmem:[%s1 + $0x5d8] sm:$0xff] %vm3862, %v2701
    %4051 = vst.msk [vmem:[%s1 + $0x5e0] sm:$0xff] %vm3862, %v2703
    %4052 = vst.msk [vmem:[%s1 + $0x5e8] sm:$0xff] %vm3862, %v2705
    %4053 = vst.msk [vmem:[%s1 + $0x5f0] sm:$0xff] %vm3862, %v2707
    %4054 = vst.msk [vmem:[%s1 + $0x5f8] sm:$0xff] %vm3862, %v2709
    %4055 = vst.msk [vmem:[%s1 + $0x600] sm:$0xff] %vm3862, %v2711
    %4056 = vst.msk [vmem:[%s1 + $0x608] sm:$0xff] %vm3862, %v2713
    %4057 = vst.msk [vmem:[%s1 + $0x610] sm:$0xff] %vm3862, %v2715
    %4058 = vst.msk [vmem:[%s1 + $0x618] sm:$0xff] %vm3862, %v2717
    %4059 = vst.msk [vmem:[%s1 + $0x620] sm:$0xff] %vm3862, %v2719
    %4060 = vst.msk [vmem:[%s1 + $0x628] sm:$0xff] %vm3862, %v2721
    %4061 = vst.msk [vmem:[%s1 + $0x630] sm:$0xff] %vm3862, %v2723
    %4062 = vst.msk [vmem:[%s1 + $0x638] sm:$0xff] %vm3862, %v2725
    %4063 = vst.msk [vmem:[%s1 + $0x640] sm:$0xff] %vm3862, %v2727
    %4064 = vst.msk [vmem:[%s1 + $0x648] sm:$0xff] %vm3862, %v2729
    %4065 = vst.msk [vmem:[%s1 + $0x650] sm:$0xff] %vm3862, %v2731
    %4066 = vst.msk [vmem:[%s1 + $0x658] sm:$0xff] %vm3862, %v2733
    %4067 = vst.msk [vmem:[%s1 + $0x660] sm:$0xff] %vm3862, %v2735
    %4068 = vst.msk [vmem:[%s1 + $0x668] sm:$0xff] %vm3862, %v2737
    %4069 = vst.msk [vmem:[%s1 + $0x670] sm:$0xff] %vm3862, %v2739
    %4070 = vst.msk [vmem:[%s1 + $0x678] sm:$0xff] %vm3862, %v2741
    %4071 = vst.msk [vmem:[%s1 + $0x680] sm:$0xff] %vm3862, %v2743
    %4072 = vst.msk [vmem:[%s1 + $0x688] sm:$0xff] %vm3862, %v2745
    %4073 = vst.msk [vmem:[%s1 + $0x690] sm:$0xff] %vm3862, %v2747
    %4074 = vst.msk [vmem:[%s1 + $0x698] sm:$0xff] %vm3862, %v2749
    %4075 = vst.msk [vmem:[%s1 + $0x6a0] sm:$0xff] %vm3862, %v2751
    %4076 = vst.msk [vmem:[%s1 + $0x6a8] sm:$0xff] %vm3862, %v2753
    %4077 = vst.msk [vmem:[%s1 + $0x6b0] sm:$0xff] %vm3862, %v2755
    %4078 = vst.msk [vmem:[%s1 + $0x6b8] sm:$0xff] %vm3862, %v2757
    %4079 = vst.msk [vmem:[%s1 + $0x6c0] sm:$0xff] %vm3862, %v2759
    %4080 = vst.msk [vmem:[%s1 + $0x6c8] sm:$0xff] %vm3862, %v2761
    %4081 = vst.msk [vmem:[%s1 + $0x6d0] sm:$0xff] %vm3862, %v2763
    %4082 = vst.msk [vmem:[%s1 + $0x6d8] sm:$0xff] %vm3862, %v2765
    %4083 = vst.msk [vmem:[%s1 + $0x6e0] sm:$0xff] %vm3862, %v2767
    %4084 = vst.msk [vmem:[%s1 + $0x6e8] sm:$0xff] %vm3862, %v2769
    %4085 = vst.msk [vmem:[%s1 + $0x6f0] sm:$0xff] %vm3862, %v2771
    %4086 = vst.msk [vmem:[%s1 + $0x6f8] sm:$0xff] %vm3862, %v2773
    %4087 = vst.msk [vmem:[%s1 + $0x700] sm:$0xff] %vm3862, %v2775
    %4088 = vst.msk [vmem:[%s1 + $0x708] sm:$0xff] %vm3862, %v2777
    %4089 = vst.msk [vmem:[%s1 + $0x710] sm:$0xff] %vm3862, %v2779
    %4090 = vst.msk [vmem:[%s1 + $0x718] sm:$0xff] %vm3862, %v2781
    %4091 = vst.msk [vmem:[%s1 + $0x720] sm:$0xff] %vm3862, %v2783
    %4092 = vst.msk [vmem:[%s1 + $0x728] sm:$0xff] %vm3862, %v2785
    %4093 = vst.msk [vmem:[%s1 + $0x730] sm:$0xff] %vm3862, %v2787
    %4094 = vst.msk [vmem:[%s1 + $0x738] sm:$0xff] %vm3862, %v2789
    %4095 = vst.msk [vmem:[%s1 + $0x740] sm:$0xff] %vm3862, %v2791
    %4096 = vst.msk [vmem:[%s1 + $0x748] sm:$0xff] %vm3862, %v2793
    %4097 = vst.msk [vmem:[%s1 + $0x750] sm:$0xff] %vm3862, %v2795
    %4098 = vst.msk [vmem:[%s1 + $0x758] sm:$0xff] %vm3862, %v2797
    %4099 = vst.msk [vmem:[%s1 + $0x760] sm:$0xff] %vm3862, %v2799
    %4100 = vst.msk [vmem:[%s1 + $0x768] sm:$0xff] %vm3862, %v2801
    %4101 = vst.msk [vmem:[%s1 + $0x770] sm:$0xff] %vm3862, %v2803
    %4102 = vst.msk [vmem:[%s1 + $0x778] sm:$0xff] %vm3862, %v2805
    %4103 = vst.msk [vmem:[%s1 + $0x780] sm:$0xff] %vm3862, %v2807
    %4104 = vst.msk [vmem:[%s1 + $0x788] sm:$0xff] %vm3862, %v2809
    %4105 = vst.msk [vmem:[%s1 + $0x790] sm:$0xff] %vm3862, %v2811
    %4106 = vst.msk [vmem:[%s1 + $0x798] sm:$0xff] %vm3862, %v2813
    %4107 = vst.msk [vmem:[%s1 + $0x7a0] sm:$0xff] %vm3862, %v2815
    %4108 = vst.msk [vmem:[%s1 + $0x7a8] sm:$0xff] %vm3862, %v2817
    %4109 = vst.msk [vmem:[%s1 + $0x7b0] sm:$0xff] %vm3862, %v2819
    %4110 = vst.msk [vmem:[%s1 + $0x7b8] sm:$0xff] %vm3862, %v2821
    %4111 = vst.msk [vmem:[%s1 + $0x7c0] sm:$0xff] %vm3862, %v2823
    %4112 = vst.msk [vmem:[%s1 + $0x7c8] sm:$0xff] %vm3862, %v2825
    %4113 = vst.msk [vmem:[%s1 + $0x7d0] sm:$0xff] %vm3862, %v2827
    %4114 = vst.msk [vmem:[%s1 + $0x7d8] sm:$0xff] %vm3862, %v2829
    %4115 = vst.msk [vmem:[%s1 + $0x7e0] sm:$0xff] %vm3862, %v2831
    %4116 = vst.msk [vmem:[%s1 + $0x7e8] sm:$0xff] %vm3862, %v2833
    %4117 = vst.msk [vmem:[%s1 + $0x7f0] sm:$0xff] %vm3862, %v2835
    %4118 = vst.msk [vmem:[%s1 + $0x7f8] sm:$0xff] %vm3862, %v2837
    %4119 = vst.msk [vmem:[%s1 + $0x800] sm:$0xff] %vm3862, %v2839
    %4120 = vst.msk [vmem:[%s1 + $0x808] sm:$0xff] %vm3862, %v2841
    %4121 = vst.msk [vmem:[%s1 + $0x810] sm:$0xff] %vm3862, %v2843
    %4122 = vst.msk [vmem:[%s1 + $0x818] sm:$0xff] %vm3862, %v2845
    %4123 = vst.msk [vmem:[%s1 + $0x820] sm:$0xff] %vm3862, %v2847
    %4124 = vst.msk [vmem:[%s1 + $0x828] sm:$0xff] %vm3862, %v2849
    %4125 = vst.msk [vmem:[%s1 + $0x830] sm:$0xff] %vm3862, %v2851
    %4126 = vst.msk [vmem:[%s1 + $0x838] sm:$0xff] %vm3862, %v2853
    %4127 = vst.msk [vmem:[%s1 + $0x840] sm:$0xff] %vm3862, %v2855
    %4128 = vst.msk [vmem:[%s1 + $0x848] sm:$0xff] %vm3862, %v2857
    %4129 = vst.msk [vmem:[%s1 + $0x850] sm:$0xff] %vm3862, %v2859
    %4130 = vst.msk [vmem:[%s1 + $0x858] sm:$0xff] %vm3862, %v2861
    %4131 = vst.msk [vmem:[%s1 + $0x860] sm:$0xff] %vm3862, %v2863
    %4132 = vst.msk [vmem:[%s1 + $0x868] sm:$0xff] %vm3862, %v2865
    %4133 = vst.msk [vmem:[%s1 + $0x870] sm:$0xff] %vm3862, %v2867
    %4134 = vst.msk [vmem:[%s1 + $0x878] sm:$0xff] %vm3862, %v2869
    %4135 = vst.msk [vmem:[%s1 + $0x880] sm:$0xff] %vm3862, %v2871
    %4136 = vst.msk [vmem:[%s1 + $0x888] sm:$0xff] %vm3862, %v2873
    %4137 = vst.msk [vmem:[%s1 + $0x890] sm:$0xff] %vm3862, %v2875
    %4138 = vst.msk [vmem:[%s1 + $0x898] sm:$0xff] %vm3862, %v2877
    %4139 = vst.msk [vmem:[%s1 + $0x8a0] sm:$0xff] %vm3862, %v2879
    %4140 = vst.msk [vmem:[%s1 + $0x8a8] sm:$0xff] %vm3862, %v2881
    %4141 = vst.msk [vmem:[%s1 + $0x8b0] sm:$0xff] %vm3862, %v2883
    %4142 = vst.msk [vmem:[%s1 + $0x8b8] sm:$0xff] %vm3862, %v2885
    %4143 = vst.msk [vmem:[%s1 + $0x8c0] sm:$0xff] %vm3862, %v2887
    %4144 = vst.msk [vmem:[%s1 + $0x8c8] sm:$0xff] %vm3862, %v2889
    %4145 = vst.msk [vmem:[%s1 + $0x8d0] sm:$0xff] %vm3862, %v2891
    %4146 = vst.msk [vmem:[%s1 + $0x8d8] sm:$0xff] %vm3862, %v2893
    %4147 = vst.msk [vmem:[%s1 + $0x8e0] sm:$0xff] %vm3862, %v2895
    %4148 = vst.msk [vmem:[%s1 + $0x8e8] sm:$0xff] %vm3862, %v2897
    %4149 = vst.msk [vmem:[%s1 + $0x8f0] sm:$0xff] %vm3862, %v2899
    %4150 = vst.msk [vmem:[%s1 + $0x8f8] sm:$0xff] %vm3862, %v2901
    %4151 = vst.msk [vmem:[%s1 + $0x900] sm:$0xff] %vm3862, %v2903
    %4152 = vst.msk [vmem:[%s1 + $0x908] sm:$0xff] %vm3862, %v2905
    %4153 = vst.msk [vmem:[%s1 + $0x910] sm:$0xff] %vm3862, %v2907
    %4154 = vst.msk [vmem:[%s1 + $0x918] sm:$0xff] %vm3862, %v2909
    %4155 = vst.msk [vmem:[%s1 + $0x920] sm:$0xff] %vm3862, %v2911
    %4156 = vst.msk [vmem:[%s1 + $0x928] sm:$0xff] %vm3862, %v2913
    %4157 = vst.msk [vmem:[%s1 + $0x930] sm:$0xff] %vm3862, %v2915
    %4158 = vst.msk [vmem:[%s1 + $0x938] sm:$0xff] %vm3862, %v2917
    %4159 = vst.msk [vmem:[%s1 + $0x940] sm:$0xff] %vm3862, %v2919
    %4160 = vst.msk [vmem:[%s1 + $0x948] sm:$0xff] %vm3862, %v2921
    %4161 = vst.msk [vmem:[%s1 + $0x950] sm:$0xff] %vm3862, %v2923
    %4162 = vst.msk [vmem:[%s1 + $0x958] sm:$0xff] %vm3862, %v2925
    %4163 = vst.msk [vmem:[%s1 + $0x960] sm:$0xff] %vm3862, %v2927
    %4164 = vst.msk [vmem:[%s1 + $0x968] sm:$0xff] %vm3862, %v2929
    %4165 = vst.msk [vmem:[%s1 + $0x970] sm:$0xff] %vm3862, %v2931
    %4166 = vst.msk [vmem:[%s1 + $0x978] sm:$0xff] %vm3862, %v2933
    %4167 = vst.msk [vmem:[%s1 + $0x980] sm:$0xff] %vm3862, %v2935
    %4168 = vst.msk [vmem:[%s1 + $0x988] sm:$0xff] %vm3862, %v2937
    %4169 = vst.msk [vmem:[%s1 + $0x990] sm:$0xff] %vm3862, %v2939
    %4170 = vst.msk [vmem:[%s1 + $0x998] sm:$0xff] %vm3862, %v2941
    %4171 = vst.msk [vmem:[%s1 + $0x9a0] sm:$0xff] %vm3862, %v2943
    %4172 = vst.msk [vmem:[%s1 + $0x9a8] sm:$0xff] %vm3862, %v2945
    %4173 = vst.msk [vmem:[%s1 + $0x9b0] sm:$0xff] %vm3862, %v2947
    %4174 = vst.msk [vmem:[%s1 + $0x9b8] sm:$0xff] %vm3862, %v2949
    %4175 = vst.msk [vmem:[%s1 + $0x9c0] sm:$0xff] %vm3862, %v2951
    %4176 = vst.msk [vmem:[%s1 + $0x9c8] sm:$0xff] %vm3862, %v2953
    %4177 = vst.msk [vmem:[%s1 + $0x9d0] sm:$0xff] %vm3862, %v2955
    %4178 = vst.msk [vmem:[%s1 + $0x9d8] sm:$0xff] %vm3862, %v2957
    %4179 = vst.msk [vmem:[%s1 + $0x9e0] sm:$0xff] %vm3862, %v2959
    %4180 = vst.msk [vmem:[%s1 + $0x9e8] sm:$0xff] %vm3862, %v2961
    %4181 = vst.msk [vmem:[%s1 + $0x9f0] sm:$0xff] %vm3862, %v2963
    %4182 = vst.msk [vmem:[%s1 + $0x9f8] sm:$0xff] %vm3862, %v2965
    %4183 = vst.msk [vmem:[%s1 + $0xa00] sm:$0xff] %vm3862, %v2967
    %4184 = vst.msk [vmem:[%s1 + $0xa08] sm:$0xff] %vm3862, %v2969
    %4185 = vst.msk [vmem:[%s1 + $0xa10] sm:$0xff] %vm3862, %v2971
    %4186 = vst.msk [vmem:[%s1 + $0xa18] sm:$0xff] %vm3862, %v2973
    %4187 = vst.msk [vmem:[%s1 + $0xa20] sm:$0xff] %vm3862, %v2975
    %4188 = vst.msk [vmem:[%s1 + $0xa28] sm:$0xff] %vm3862, %v2977
    %4189 = vst.msk [vmem:[%s1 + $0xa30] sm:$0xff] %vm3862, %v2979
    %4190 = vst.msk [vmem:[%s1 + $0xa38] sm:$0xff] %vm3862, %v2981
    %4191 = vst.msk [vmem:[%s1 + $0xa40] sm:$0xff] %vm3862, %v2983
    %4192 = vst.msk [vmem:[%s1 + $0xa48] sm:$0xff] %vm3862, %v2985
    %4193 = vst.msk [vmem:[%s1 + $0xa50] sm:$0xff] %vm3862, %v2987
    %4194 = vst.msk [vmem:[%s1 + $0xa58] sm:$0xff] %vm3862, %v2989
    %4195 = vst.msk [vmem:[%s1 + $0xa60] sm:$0xff] %vm3862, %v2991
    %4196 = vst.msk [vmem:[%s1 + $0xa68] sm:$0xff] %vm3862, %v2993
    %4197 = vst.msk [vmem:[%s1 + $0xa70] sm:$0xff] %vm3862, %v2995
    %4198 = vst.msk [vmem:[%s1 + $0xa78] sm:$0xff] %vm3862, %v2997
    %4199 = vst.msk [vmem:[%s1 + $0xa80] sm:$0xff] %vm3862, %v2999
    %4200 = vst.msk [vmem:[%s1 + $0xa88] sm:$0xff] %vm3862, %v3001
    %4201 = vst.msk [vmem:[%s1 + $0xa90] sm:$0xff] %vm3862, %v3003
    %4202 = vst.msk [vmem:[%s1 + $0xa98] sm:$0xff] %vm3862, %v3005
    %4203 = vst.msk [vmem:[%s1 + $0xaa0] sm:$0xff] %vm3862, %v3007
    %4204 = vst.msk [vmem:[%s1 + $0xaa8] sm:$0xff] %vm3862, %v3009
    %4205 = vst.msk [vmem:[%s1 + $0xab0] sm:$0xff] %vm3862, %v3011
    %4206 = vst.msk [vmem:[%s1 + $0xab8] sm:$0xff] %vm3862, %v3013
    %4207 = vst.msk [vmem:[%s1 + $0xac0] sm:$0xff] %vm3862, %v3015
    %4208 = vst.msk [vmem:[%s1 + $0xac8] sm:$0xff] %vm3862, %v3017
    %4209 = vst.msk [vmem:[%s1 + $0xad0] sm:$0xff] %vm3862, %v3019
    %4210 = vst.msk [vmem:[%s1 + $0xad8] sm:$0xff] %vm3862, %v3021
    %4211 = vst.msk [vmem:[%s1 + $0xae0] sm:$0xff] %vm3862, %v3023
    %4212 = vst.msk [vmem:[%s1 + $0xae8] sm:$0xff] %vm3862, %v3025
    %4213 = vst.msk [vmem:[%s1 + $0xaf0] sm:$0xff] %vm3862, %v3027
    %4214 = vst.msk [vmem:[%s1 + $0xaf8] sm:$0xff] %vm3862, %v3029
    %4215 = vst.msk [vmem:[%s1 + $0xb00] sm:$0xff] %vm3862, %v3031
    %4216 = vst.msk [vmem:[%s1 + $0xb08] sm:$0xff] %vm3862, %v3033
    %4217 = vst.msk [vmem:[%s1 + $0xb10] sm:$0xff] %vm3862, %v3035
    %4218 = vst.msk [vmem:[%s1 + $0xb18] sm:$0xff] %vm3862, %v3037
    %4219 = vst.msk [vmem:[%s1 + $0xb20] sm:$0xff] %vm3862, %v3039
    %4220 = vst.msk [vmem:[%s1 + $0xb28] sm:$0xff] %vm3862, %v3041
    %4221 = vst.msk [vmem:[%s1 + $0xb30] sm:$0xff] %vm3862, %v3043
    %4222 = vst.msk [vmem:[%s1 + $0xb38] sm:$0xff] %vm3862, %v3045
    %4223 = vst.msk [vmem:[%s1 + $0xb40] sm:$0xff] %vm3862, %v3047
    %4224 = vst.msk [vmem:[%s1 + $0xb48] sm:$0xff] %vm3862, %v3049
    %4225 = vst.msk [vmem:[%s1 + $0xb50] sm:$0xff] %vm3862, %v3051
    %4226 = vst.msk [vmem:[%s1 + $0xb58] sm:$0xff] %vm3862, %v3053
    %4227 = vst.msk [vmem:[%s1 + $0xb60] sm:$0xff] %vm3862, %v3055
    %4228 = vst.msk [vmem:[%s1 + $0xb68] sm:$0xff] %vm3862, %v3057
    %4229 = vst.msk [vmem:[%s1 + $0xb70] sm:$0xff] %vm3862, %v3059
    %4230 = vst.msk [vmem:[%s1 + $0xb78] sm:$0xff] %vm3862, %v3061
    %4231 = vst.msk [vmem:[%s1 + $0xb80] sm:$0xff] %vm3862, %v3063
    %4232 = vst.msk [vmem:[%s1 + $0xb88] sm:$0xff] %vm3862, %v3065
    %4233 = vst.msk [vmem:[%s1 + $0xb90] sm:$0xff] %vm3862, %v3067
    %4234 = vst.msk [vmem:[%s1 + $0xb98] sm:$0xff] %vm3862, %v3069
    %4235 = vst.msk [vmem:[%s1 + $0xba0] sm:$0xff] %vm3862, %v3071
    %4236 = vst.msk [vmem:[%s1 + $0xba8] sm:$0xff] %vm3862, %v3073
    %4237 = vst.msk [vmem:[%s1 + $0xbb0] sm:$0xff] %vm3862, %v3075
    %4238 = vst.msk [vmem:[%s1 + $0xbb8] sm:$0xff] %vm3862, %v3077
    %4239 = vst.msk [vmem:[%s1 + $0xbc0] sm:$0xff] %vm3862, %v3079
    %4240 = vst.msk [vmem:[%s1 + $0xbc8] sm:$0xff] %vm3862, %v3081
    %4241 = vst.msk [vmem:[%s1 + $0xbd0] sm:$0xff] %vm3862, %v3083
    %4242 = vst.msk [vmem:[%s1 + $0xbd8] sm:$0xff] %vm3862, %v3085
    %4243 = vst.msk [vmem:[%s1 + $0xbe0] sm:$0xff] %vm3862, %v3087
    %4244 = vst.msk [vmem:[%s1 + $0xbe8] sm:$0xff] %vm3862, %v3089
    %4245 = vst.msk [vmem:[%s1 + $0xbf0] sm:$0xff] %vm3862, %v3091
    %4246 = vst.msk [vmem:[%s1 + $0xbf8] sm:$0xff] %vm3862, %v3093
    %4247 = vst.msk [vmem:[%s1 + $0xc00] sm:$0xff] %vm3862, %v3095
    %4248 = vst.msk [vmem:[%s1 + $0xc08] sm:$0xff] %vm3862, %v3097
    %4249 = vst.msk [vmem:[%s1 + $0xc10] sm:$0xff] %vm3862, %v3099
    %4250 = vst.msk [vmem:[%s1 + $0xc18] sm:$0xff] %vm3862, %v3101
    %4251 = vst.msk [vmem:[%s1 + $0xc20] sm:$0xff] %vm3862, %v3103
    %4252 = vst.msk [vmem:[%s1 + $0xc28] sm:$0xff] %vm3862, %v3105
    %4253 = vst.msk [vmem:[%s1 + $0xc30] sm:$0xff] %vm3862, %v3107
    %4254 = vst.msk [vmem:[%s1 + $0xc38] sm:$0xff] %vm3862, %v3109
    %4255 = vst.msk [vmem:[%s1 + $0xc40] sm:$0xff] %vm3862, %v3111
    %4256 = vst.msk [vmem:[%s1 + $0xc48] sm:$0xff] %vm3862, %v3113
    %4257 = vst.msk [vmem:[%s1 + $0xc50] sm:$0xff] %vm3862, %v3115
    %4258 = vst.msk [vmem:[%s1 + $0xc58] sm:$0xff] %vm3862, %v3117
    %4259 = vst.msk [vmem:[%s1 + $0xc60] sm:$0xff] %vm3862, %v3119
    %4260 = vst.msk [vmem:[%s1 + $0xc68] sm:$0xff] %vm3862, %v3121
    %4261 = vst.msk [vmem:[%s1 + $0xc70] sm:$0xff] %vm3862, %v3123
    %4262 = vst.msk [vmem:[%s1 + $0xc78] sm:$0xff] %vm3862, %v3125
    %4263 = vst.msk [vmem:[%s1 + $0xc80] sm:$0xff] %vm3862, %v3127
    %4264 = vst.msk [vmem:[%s1 + $0xc88] sm:$0xff] %vm3862, %v3129
    %4265 = vst.msk [vmem:[%s1 + $0xc90] sm:$0xff] %vm3862, %v3131
    %4266 = vst.msk [vmem:[%s1 + $0xc98] sm:$0xff] %vm3862, %v3133
    %4267 = vst.msk [vmem:[%s1 + $0xca0] sm:$0xff] %vm3862, %v3135
    %4268 = vst.msk [vmem:[%s1 + $0xca8] sm:$0xff] %vm3862, %v3137
    %4269 = vst.msk [vmem:[%s1 + $0xcb0] sm:$0xff] %vm3862, %v3139
    %4270 = vst.msk [vmem:[%s1 + $0xcb8] sm:$0xff] %vm3862, %v3141
    %4271 = vst.msk [vmem:[%s1 + $0xcc0] sm:$0xff] %vm3862, %v3143
    %4272 = vst.msk [vmem:[%s1 + $0xcc8] sm:$0xff] %vm3862, %v3145
    %4273 = vst.msk [vmem:[%s1 + $0xcd0] sm:$0xff] %vm3862, %v3147
    %4274 = vst.msk [vmem:[%s1 + $0xcd8] sm:$0xff] %vm3862, %v3149
    %4275 = vst.msk [vmem:[%s1 + $0xce0] sm:$0xff] %vm3862, %v3151
    %4276 = vst.msk [vmem:[%s1 + $0xce8] sm:$0xff] %vm3862, %v3153
    %4277 = vst.msk [vmem:[%s1 + $0xcf0] sm:$0xff] %vm3862, %v3155
    %4278 = vst.msk [vmem:[%s1 + $0xcf8] sm:$0xff] %vm3862, %v3157
    %4279 = vst.msk [vmem:[%s1 + $0xd00] sm:$0xff] %vm3862, %v3159
    %4280 = vst.msk [vmem:[%s1 + $0xd08] sm:$0xff] %vm3862, %v3161
    %4281 = vst.msk [vmem:[%s1 + $0xd10] sm:$0xff] %vm3862, %v3163
    %4282 = vst.msk [vmem:[%s1 + $0xd18] sm:$0xff] %vm3862, %v3165
    %4283 = vst.msk [vmem:[%s1 + $0xd20] sm:$0xff] %vm3862, %v3167
    %4284 = vst.msk [vmem:[%s1 + $0xd28] sm:$0xff] %vm3862, %v3169
    %4285 = vst.msk [vmem:[%s1 + $0xd30] sm:$0xff] %vm3862, %v3171
    %4286 = vst.msk [vmem:[%s1 + $0xd38] sm:$0xff] %vm3862, %v3173
    %4287 = vst.msk [vmem:[%s1 + $0xd40] sm:$0xff] %vm3862, %v3175
    %4288 = vst.msk [vmem:[%s1 + $0xd48] sm:$0xff] %vm3862, %v3177
    %4289 = vst.msk [vmem:[%s1 + $0xd50] sm:$0xff] %vm3862, %v3179
    %4290 = vst.msk [vmem:[%s1 + $0xd58] sm:$0xff] %vm3862, %v3181
    %4291 = vst.msk [vmem:[%s1 + $0xd60] sm:$0xff] %vm3862, %v3183
    %4292 = vst.msk [vmem:[%s1 + $0xd68] sm:$0xff] %vm3862, %v3185
    %4293 = vst.msk [vmem:[%s1 + $0xd70] sm:$0xff] %vm3862, %v3187
    %4294 = vst.msk [vmem:[%s1 + $0xd78] sm:$0xff] %vm3862, %v3189
    %4295 = vst.msk [vmem:[%s1 + $0xd80] sm:$0xff] %vm3862, %v3191
    %4296 = vst.msk [vmem:[%s1 + $0xd88] sm:$0xff] %vm3862, %v3193
    %4297 = vst.msk [vmem:[%s1 + $0xd90] sm:$0xff] %vm3862, %v3195
    %4298 = vst.msk [vmem:[%s1 + $0xd98] sm:$0xff] %vm3862, %v3197
    %4299 = vst.msk [vmem:[%s1 + $0xda0] sm:$0xff] %vm3862, %v3199
    %4300 = vst.msk [vmem:[%s1 + $0xda8] sm:$0xff] %vm3862, %v3201
    %4301 = vst.msk [vmem:[%s1 + $0xdb0] sm:$0xff] %vm3862, %v3203
    %4302 = vst.msk [vmem:[%s1 + $0xdb8] sm:$0xff] %vm3862, %v3205
    %4303 = vst.msk [vmem:[%s1 + $0xdc0] sm:$0xff] %vm3862, %v3207
    %4304 = vst.msk [vmem:[%s1 + $0xdc8] sm:$0xff] %vm3862, %v3209
    %4305 = vst.msk [vmem:[%s1 + $0xdd0] sm:$0xff] %vm3862, %v3211
    %4306 = vst.msk [vmem:[%s1 + $0xdd8] sm:$0xff] %vm3862, %v3213
    %4307 = vst.msk [vmem:[%s1 + $0xde0] sm:$0xff] %vm3862, %v3215
    %4308 = vst.msk [vmem:[%s1 + $0xde8] sm:$0xff] %vm3862, %v3217
    %4309 = vst.msk [vmem:[%s1 + $0xdf0] sm:$0xff] %vm3862, %v3219
    %4310 = vst.msk [vmem:[%s1 + $0xdf8] sm:$0xff] %vm3862, %v3221
    %4311 = vst.msk [vmem:[%s1 + $0xe00] sm:$0xff] %vm3862, %v3223
    %4312 = vst.msk [vmem:[%s1 + $0xe08] sm:$0xff] %vm3862, %v3225
    %4313 = vst.msk [vmem:[%s1 + $0xe10] sm:$0xff] %vm3862, %v3227
    %4314 = vst.msk [vmem:[%s1 + $0xe18] sm:$0xff] %vm3862, %v3229
    %4315 = vst.msk [vmem:[%s1 + $0xe20] sm:$0xff] %vm3862, %v3231
    %4316 = vst.msk [vmem:[%s1 + $0xe28] sm:$0xff] %vm3862, %v3233
    %4317 = vst.msk [vmem:[%s1 + $0xe30] sm:$0xff] %vm3862, %v3235
    %4318 = vst.msk [vmem:[%s1 + $0xe38] sm:$0xff] %vm3862, %v3237
    %4319 = vst.msk [vmem:[%s1 + $0xe40] sm:$0xff] %vm3862, %v3239
    %4320 = vst.msk [vmem:[%s1 + $0xe48] sm:$0xff] %vm3862, %v3241
    %4321 = vst.msk [vmem:[%s1 + $0xe50] sm:$0xff] %vm3862, %v3243
    %4322 = vst.msk [vmem:[%s1 + $0xe58] sm:$0xff] %vm3862, %v3245
    %4323 = vst.msk [vmem:[%s1 + $0xe60] sm:$0xff] %vm3862, %v3247
    %4324 = vst.msk [vmem:[%s1 + $0xe68] sm:$0xff] %vm3862, %v3249
    %4325 = vst.msk [vmem:[%s1 + $0xe70] sm:$0xff] %vm3862, %v3251
    %4326 = vst.msk [vmem:[%s1 + $0xe78] sm:$0xff] %vm3862, %v3253
    %4327 = vst.msk [vmem:[%s1 + $0xe80] sm:$0xff] %vm3862, %v3255
    %4328 = vst.msk [vmem:[%s1 + $0xe88] sm:$0xff] %vm3862, %v3257
    %4329 = vst.msk [vmem:[%s1 + $0xe90] sm:$0xff] %vm3862, %v3259
    %4330 = vst.msk [vmem:[%s1 + $0xe98] sm:$0xff] %vm3862, %v3261
    %4331 = vst.msk [vmem:[%s1 + $0xea0] sm:$0xff] %vm3862, %v3263
    %4332 = vst.msk [vmem:[%s1 + $0xea8] sm:$0xff] %vm3862, %v3265
    %4333 = vst.msk [vmem:[%s1 + $0xeb0] sm:$0xff] %vm3862, %v3267
    %4334 = vst.msk [vmem:[%s1 + $0xeb8] sm:$0xff] %vm3862, %v3269
    %4335 = vst.msk [vmem:[%s1 + $0xec0] sm:$0xff] %vm3862, %v3271
    %4336 = vst.msk [vmem:[%s1 + $0xec8] sm:$0xff] %vm3862, %v3273
    %4337 = vst.msk [vmem:[%s1 + $0xed0] sm:$0xff] %vm3862, %v3275
    %4338 = vst.msk [vmem:[%s1 + $0xed8] sm:$0xff] %vm3862, %v3277
    %4339 = vst.msk [vmem:[%s1 + $0xee0] sm:$0xff] %vm3862, %v3279
    %4340 = vst.msk [vmem:[%s1 + $0xee8] sm:$0xff] %vm3862, %v3281
    %4341 = vst.msk [vmem:[%s1 + $0xef0] sm:$0xff] %vm3862, %v3283
    %4342 = vst.msk [vmem:[%s1 + $0xef8] sm:$0xff] %vm3862, %v3285
    %4343 = vst.msk [vmem:[%s1 + $0xf00] sm:$0xff] %vm3862, %v3287
    %4344 = vst.msk [vmem:[%s1 + $0xf08] sm:$0xff] %vm3862, %v3289
    %4345 = vst.msk [vmem:[%s1 + $0xf10] sm:$0xff] %vm3862, %v3291
    %4346 = vst.msk [vmem:[%s1 + $0xf18] sm:$0xff] %vm3862, %v3293
    %4347 = vst.msk [vmem:[%s1 + $0xf20] sm:$0xff] %vm3862, %v3295
    %4348 = vst.msk [vmem:[%s1 + $0xf28] sm:$0xff] %vm3862, %v3297
    %4349 = vst.msk [vmem:[%s1 + $0xf30] sm:$0xff] %vm3862, %v3299
    %4350 = vst.msk [vmem:[%s1 + $0xf38] sm:$0xff] %vm3862, %v3301
    %4351 = vst.msk [vmem:[%s1 + $0xf40] sm:$0xff] %vm3862, %v3303
    %4352 = vst.msk [vmem:[%s1 + $0xf48] sm:$0xff] %vm3862, %v3305
    %4353 = vst.msk [vmem:[%s1 + $0xf50] sm:$0xff] %vm3862, %v3307
    %4354 = vst.msk [vmem:[%s1 + $0xf58] sm:$0xff] %vm3862, %v3309
    %4355 = vst.msk [vmem:[%s1 + $0xf60] sm:$0xff] %vm3862, %v3311
    %4356 = vst.msk [vmem:[%s1 + $0xf68] sm:$0xff] %vm3862, %v3313
    %4357 = vst.msk [vmem:[%s1 + $0xf70] sm:$0xff] %vm3862, %v3315
    %4358 = vst.msk [vmem:[%s1 + $0xf78] sm:$0xff] %vm3862, %v3317
    %4359 = vst.msk [vmem:[%s1 + $0xf80] sm:$0xff] %vm3862, %v3319
    %4360 = vst.msk [vmem:[%s1 + $0xf88] sm:$0xff] %vm3862, %v3321
    %4361 = vst.msk [vmem:[%s1 + $0xf90] sm:$0xff] %vm3862, %v3323
    %4362 = vst.msk [vmem:[%s1 + $0xf98] sm:$0xff] %vm3862, %v3325
    %4363 = vst.msk [vmem:[%s1 + $0xfa0] sm:$0xff] %vm3862, %v3327
    %4364 = vst.msk [vmem:[%s1 + $0xfa8] sm:$0xff] %vm3862, %v3329
    %4365 = vst.msk [vmem:[%s1 + $0xfb0] sm:$0xff] %vm3862, %v3331
    %4366 = vst.msk [vmem:[%s1 + $0xfb8] sm:$0xff] %vm3862, %v3333
    %4367 = vst.msk [vmem:[%s1 + $0xfc0] sm:$0xff] %vm3862, %v3335
    %4368 = vst.msk [vmem:[%s1 + $0xfc8] sm:$0xff] %vm3862, %v3337
    %4369 = vst.msk [vmem:[%s1 + $0xfd0] sm:$0xff] %vm3862, %v3339
    %4370 = vst.msk [vmem:[%s1 + $0xfd8] sm:$0xff] %vm3862, %v3341
    %4371 = vst.msk [vmem:[%s1 + $0xfe0] sm:$0xff] %vm3862, %v3343
    %4372 = vst.msk [vmem:[%s1 + $0xfe8] sm:$0xff] %vm3862, %v3345
    %4373 = vst.msk [vmem:[%s1 + $0xff0] sm:$0xff] %vm3862, %v3347
    %4374 = vst.msk [vmem:[%s1 + $0xff8] sm:$0xff] %vm3862, %v3349
    %4375 = vst.msk [vmem:[%s1 + $0x1000] sm:$0xff] %vm3862, %v3351
    %4376 = vst.msk [vmem:[%s1 + $0x1008] sm:$0xff] %vm3862, %v3353
    %4377 = vst.msk [vmem:[%s1 + $0x1010] sm:$0xff] %vm3862, %v3355
    %4378 = vst.msk [vmem:[%s1 + $0x1018] sm:$0xff] %vm3862, %v3357
    %4379 = vst.msk [vmem:[%s1 + $0x1020] sm:$0xff] %vm3862, %v3359
    %4380 = vst.msk [vmem:[%s1 + $0x1028] sm:$0xff] %vm3862, %v3361
    %4381 = vst.msk [vmem:[%s1 + $0x1030] sm:$0xff] %vm3862, %v3363
    %4382 = vst.msk [vmem:[%s1 + $0x1038] sm:$0xff] %vm3862, %v3365
    %4383 = vst.msk [vmem:[%s1 + $0x1040] sm:$0xff] %vm3862, %v3367
    %4384 = vst.msk [vmem:[%s1 + $0x1048] sm:$0xff] %vm3862, %v3369
    %4385 = vst.msk [vmem:[%s1 + $0x1050] sm:$0xff] %vm3862, %v3371
    %4386 = vst.msk [vmem:[%s1 + $0x1058] sm:$0xff] %vm3862, %v3373
    %4387 = vst.msk [vmem:[%s1 + $0x1060] sm:$0xff] %vm3862, %v3375
    %4388 = vst.msk [vmem:[%s1 + $0x1068] sm:$0xff] %vm3862, %v3377
    %4389 = vst.msk [vmem:[%s1 + $0x1070] sm:$0xff] %vm3862, %v3379
    %4390 = vst.msk [vmem:[%s1 + $0x1078] sm:$0xff] %vm3862, %v3381
    %4391 = vst.msk [vmem:[%s1 + $0x1080] sm:$0xff] %vm3862, %v3383
    %4392 = vst.msk [vmem:[%s1 + $0x1088] sm:$0xff] %vm3862, %v3385
    %4393 = vst.msk [vmem:[%s1 + $0x1090] sm:$0xff] %vm3862, %v3387
    %4394 = vst.msk [vmem:[%s1 + $0x1098] sm:$0xff] %vm3862, %v3389
    %4395 = vst.msk [vmem:[%s1 + $0x10a0] sm:$0xff] %vm3862, %v3391
    %4396 = vst.msk [vmem:[%s1 + $0x10a8] sm:$0xff] %vm3862, %v3393
    %4397 = vst.msk [vmem:[%s1 + $0x10b0] sm:$0xff] %vm3862, %v3395
    %4398 = vst.msk [vmem:[%s1 + $0x10b8] sm:$0xff] %vm3862, %v3397
    %4399 = vst.msk [vmem:[%s1 + $0x10c0] sm:$0xff] %vm3862, %v3399
    %4400 = vst.msk [vmem:[%s1 + $0x10c8] sm:$0xff] %vm3862, %v3401
    %4401 = vst.msk [vmem:[%s1 + $0x10d0] sm:$0xff] %vm3862, %v3403
    %4402 = vst.msk [vmem:[%s1 + $0x10d8] sm:$0xff] %vm3862, %v3405
    %4403 = vst.msk [vmem:[%s1 + $0x10e0] sm:$0xff] %vm3862, %v3407
    %4404 = vst.msk [vmem:[%s1 + $0x10e8] sm:$0xff] %vm3862, %v3409
    %4405 = vst.msk [vmem:[%s1 + $0x10f0] sm:$0xff] %vm3862, %v3411
    %4406 = vst.msk [vmem:[%s1 + $0x10f8] sm:$0xff] %vm3862, %v3413
    %4407 = vst.msk [vmem:[%s1 + $0x1100] sm:$0xff] %vm3862, %v3415
    %4408 = vst.msk [vmem:[%s1 + $0x1108] sm:$0xff] %vm3862, %v3417
    %4409 = vst.msk [vmem:[%s1 + $0x1110] sm:$0xff] %vm3862, %v3419
    %4410 = vst.msk [vmem:[%s1 + $0x1118] sm:$0xff] %vm3862, %v3421
    %4411 = vst.msk [vmem:[%s1 + $0x1120] sm:$0xff] %vm3862, %v3423
    %4412 = vst.msk [vmem:[%s1 + $0x1128] sm:$0xff] %vm3862, %v3425
    %4413 = vst.msk [vmem:[%s1 + $0x1130] sm:$0xff] %vm3862, %v3427
    %4414 = vst.msk [vmem:[%s1 + $0x1138] sm:$0xff] %vm3862, %v3429
    %4415 = vst.msk [vmem:[%s1 + $0x1140] sm:$0xff] %vm3862, %v3431
    %4416 = vst.msk [vmem:[%s1 + $0x1148] sm:$0xff] %vm3862, %v3433
    %4417 = vst.msk [vmem:[%s1 + $0x1150] sm:$0xff] %vm3862, %v3435
    %4418 = vst.msk [vmem:[%s1 + $0x1158] sm:$0xff] %vm3862, %v3437
    %4419 = vst.msk [vmem:[%s1 + $0x1160] sm:$0xff] %vm3862, %v3439
    %4420 = vst.msk [vmem:[%s1 + $0x1168] sm:$0xff] %vm3862, %v3441
    %4421 = vst.msk [vmem:[%s1 + $0x1170] sm:$0xff] %vm3862, %v3443
    %4422 = vst.msk [vmem:[%s1 + $0x1178] sm:$0xff] %vm3862, %v3445
    %4423 = vst.msk [vmem:[%s1 + $0x1180] sm:$0xff] %vm3862, %v3447
    %4424 = vst.msk [vmem:[%s1 + $0x1188] sm:$0xff] %vm3862, %v3449
    %4425 = vst.msk [vmem:[%s1 + $0x1190] sm:$0xff] %vm3862, %v3451
    %4426 = vst.msk [vmem:[%s1 + $0x1198] sm:$0xff] %vm3862, %v3453
    %4427 = vst.msk [vmem:[%s1 + $0x11a0] sm:$0xff] %vm3862, %v3455
    %4428 = vst.msk [vmem:[%s1 + $0x11a8] sm:$0xff] %vm3862, %v3457
    %4429 = vst.msk [vmem:[%s1 + $0x11b0] sm:$0xff] %vm3862, %v3459
    %4430 = vst.msk [vmem:[%s1 + $0x11b8] sm:$0xff] %vm3862, %v3461
    %4431 = vst.msk [vmem:[%s1 + $0x11c0] sm:$0xff] %vm3862, %v3463
    %4432 = vst.msk [vmem:[%s1 + $0x11c8] sm:$0xff] %vm3862, %v3465
    %4433 = vst.msk [vmem:[%s1 + $0x11d0] sm:$0xff] %vm3862, %v3467
    %4434 = vst.msk [vmem:[%s1 + $0x11d8] sm:$0xff] %vm3862, %v3469
    %4435 = vst.msk [vmem:[%s1 + $0x11e0] sm:$0xff] %vm3862, %v3471
    %4436 = vst.msk [vmem:[%s1 + $0x11e8] sm:$0xff] %vm3862, %v3473
    %4437 = vst.msk [vmem:[%s1 + $0x11f0] sm:$0xff] %vm3862, %v3475
    %4438 = vst.msk [vmem:[%s1 + $0x11f8] sm:$0xff] %vm3862, %v3477
    %4439 = vst.msk [vmem:[%s1 + $0x1200] sm:$0xff] %vm3862, %v3479
    %4440 = vst.msk [vmem:[%s1 + $0x1208] sm:$0xff] %vm3862, %v3481
    %4441 = vst.msk [vmem:[%s1 + $0x1210] sm:$0xff] %vm3862, %v3483
    %4442 = vst.msk [vmem:[%s1 + $0x1218] sm:$0xff] %vm3862, %v3485
    %4443 = vst.msk [vmem:[%s1 + $0x1220] sm:$0xff] %vm3862, %v3487
    %4444 = vst.msk [vmem:[%s1 + $0x1228] sm:$0xff] %vm3862, %v3489
    %4445 = vst.msk [vmem:[%s1 + $0x1230] sm:$0xff] %vm3862, %v3491
    %4446 = vst.msk [vmem:[%s1 + $0x1238] sm:$0xff] %vm3862, %v3493
    %4447 = vst.msk [vmem:[%s1 + $0x1240] sm:$0xff] %vm3862, %v3495
    %4448 = vst.msk [vmem:[%s1 + $0x1248] sm:$0xff] %vm3862, %v3497
    %4449 = vst.msk [vmem:[%s1 + $0x1250] sm:$0xff] %vm3862, %v3499
    %4450 = vst.msk [vmem:[%s1 + $0x1258] sm:$0xff] %vm3862, %v3501
    %4451 = vst.msk [vmem:[%s1 + $0x1260] sm:$0xff] %vm3862, %v3503
    %4452 = vst.msk [vmem:[%s1 + $0x1268] sm:$0xff] %vm3862, %v3505
    %4453 = vst.msk [vmem:[%s1 + $0x1270] sm:$0xff] %vm3862, %v3507
    %4454 = vst.msk [vmem:[%s1 + $0x1278] sm:$0xff] %vm3862, %v3509
    %4455 = vst.msk [vmem:[%s1 + $0x1280] sm:$0xff] %vm3862, %v3511
    %4456 = vst.msk [vmem:[%s1 + $0x1288] sm:$0xff] %vm3862, %v3513
    %4457 = vst.msk [vmem:[%s1 + $0x1290] sm:$0xff] %vm3862, %v3515
    %4458 = vst.msk [vmem:[%s1 + $0x1298] sm:$0xff] %vm3862, %v3517
    %4459 = vst.msk [vmem:[%s1 + $0x12a0] sm:$0xff] %vm3862, %v3519
    %4460 = vst.msk [vmem:[%s1 + $0x12a8] sm:$0xff] %vm3862, %v3521
    %4461 = vst.msk [vmem:[%s1 + $0x12b0] sm:$0xff] %vm3862, %v3523
    %4462 = vst.msk [vmem:[%s1 + $0x12b8] sm:$0xff] %vm3862, %v3525
    %4463 = vst.msk [vmem:[%s1 + $0x12c0] sm:$0xff] %vm3862, %v3527
    %4464 = vst.msk [vmem:[%s1 + $0x12c8] sm:$0xff] %vm3862, %v3529
    %4465 = vst.msk [vmem:[%s1 + $0x12d0] sm:$0xff] %vm3862, %v3531
    %4466 = vst.msk [vmem:[%s1 + $0x12d8] sm:$0xff] %vm3862, %v3533
    %4467 = vst.msk [vmem:[%s1 + $0x12e0] sm:$0xff] %vm3862, %v3535
    %4468 = vst.msk [vmem:[%s1 + $0x12e8] sm:$0xff] %vm3862, %v3537
    %4469 = vst.msk [vmem:[%s1 + $0x12f0] sm:$0xff] %vm3862, %v3539
    %4470 = vst.msk [vmem:[%s1 + $0x12f8] sm:$0xff] %vm3862, %v3541
    %4471 = vst.msk [vmem:[%s1 + $0x1300] sm:$0xff] %vm3862, %v3543
    %4472 = vst.msk [vmem:[%s1 + $0x1308] sm:$0xff] %vm3862, %v3545
    %4473 = vst.msk [vmem:[%s1 + $0x1310] sm:$0xff] %vm3862, %v3547
    %4474 = vst.msk [vmem:[%s1 + $0x1318] sm:$0xff] %vm3862, %v3549
    %4475 = vst.msk [vmem:[%s1 + $0x1320] sm:$0xff] %vm3862, %v3551
    %4476 = vst.msk [vmem:[%s1 + $0x1328] sm:$0xff] %vm3862, %v3553
    %4477 = vst.msk [vmem:[%s1 + $0x1330] sm:$0xff] %vm3862, %v3555
    %4478 = vst.msk [vmem:[%s1 + $0x1338] sm:$0xff] %vm3862, %v3557
    %4479 = vst.msk [vmem:[%s1 + $0x1340] sm:$0xff] %vm3862, %v3559
    %4480 = vst.msk [vmem:[%s1 + $0x1348] sm:$0xff] %vm3862, %v3561
    %4481 = vst.msk [vmem:[%s1 + $0x1350] sm:$0xff] %vm3862, %v3563
    %4482 = vst.msk [vmem:[%s1 + $0x1358] sm:$0xff] %vm3862, %v3565
    %4483 = vst.msk [vmem:[%s1 + $0x1360] sm:$0xff] %vm3862, %v3567
    %4484 = vst.msk [vmem:[%s1 + $0x1368] sm:$0xff] %vm3862, %v3569
    %4485 = vst.msk [vmem:[%s1 + $0x1370] sm:$0xff] %vm3862, %v3571
    %4486 = vst.msk [vmem:[%s1 + $0x1378] sm:$0xff] %vm3862, %v3573
    %4487 = vst.msk [vmem:[%s1 + $0x1380] sm:$0xff] %vm3862, %v3575
    %4488 = vst.msk [vmem:[%s1 + $0x1388] sm:$0xff] %vm3862, %v3577
    %4489 = vst.msk [vmem:[%s1 + $0x1390] sm:$0xff] %vm3862, %v3579
    %4490 = vst.msk [vmem:[%s1 + $0x1398] sm:$0xff] %vm3862, %v3581
    %4491 = vst.msk [vmem:[%s1 + $0x13a0] sm:$0xff] %vm3862, %v3583
    %4492 = vst.msk [vmem:[%s1 + $0x13a8] sm:$0xff] %vm3862, %v3585
    %4493 = vst.msk [vmem:[%s1 + $0x13b0] sm:$0xff] %vm3862, %v3587
    %4494 = vst.msk [vmem:[%s1 + $0x13b8] sm:$0xff] %vm3862, %v3589
    %4495 = vst.msk [vmem:[%s1 + $0x13c0] sm:$0xff] %vm3862, %v3591
    %4496 = vst.msk [vmem:[%s1 + $0x13c8] sm:$0xff] %vm3862, %v3593
    %4497 = vst.msk [vmem:[%s1 + $0x13d0] sm:$0xff] %vm3862, %v3595
    %4498 = vst.msk [vmem:[%s1 + $0x13d8] sm:$0xff] %vm3862, %v3597
    %4499 = vst.msk [vmem:[%s1 + $0x13e0] sm:$0xff] %vm3862, %v3599
    %4500 = vst.msk [vmem:[%s1 + $0x13e8] sm:$0xff] %vm3862, %v3601
    %4501 = vst.msk [vmem:[%s1 + $0x13f0] sm:$0xff] %vm3862, %v3603
    %4502 = vst.msk [vmem:[%s1 + $0x13f8] sm:$0xff] %vm3862, %v3605
    %4503 = vst.msk [vmem:[%s1 + $0x1400] sm:$0xff] %vm3862, %v3607
    %4504 = vst.msk [vmem:[%s1 + $0x1408] sm:$0xff] %vm3862, %v3609
    %4505 = vst.msk [vmem:[%s1 + $0x1410] sm:$0xff] %vm3862, %v3611
    %4506 = vst.msk [vmem:[%s1 + $0x1418] sm:$0xff] %vm3862, %v3613
    %4507 = vst.msk [vmem:[%s1 + $0x1420] sm:$0xff] %vm3862, %v3615
    %4508 = vst.msk [vmem:[%s1 + $0x1428] sm:$0xff] %vm3862, %v3617
    %4509 = vst.msk [vmem:[%s1 + $0x1430] sm:$0xff] %vm3862, %v3619
    %4510 = vst.msk [vmem:[%s1 + $0x1438] sm:$0xff] %vm3862, %v3621
    %4511 = vst.msk [vmem:[%s1 + $0x1440] sm:$0xff] %vm3862, %v3623
    %4512 = vst.msk [vmem:[%s1 + $0x1448] sm:$0xff] %vm3862, %v3625
    %4513 = vst.msk [vmem:[%s1 + $0x1450] sm:$0xff] %vm3862, %v3627
    %4514 = vst.msk [vmem:[%s1 + $0x1458] sm:$0xff] %vm3862, %v3629
    %4515 = vst.msk [vmem:[%s1 + $0x1460] sm:$0xff] %vm3862, %v3631
    %4516 = vst.msk [vmem:[%s1 + $0x1468] sm:$0xff] %vm3862, %v3633
    %4517 = vst.msk [vmem:[%s1 + $0x1470] sm:$0xff] %vm3862, %v3635
    %4518 = vst.msk [vmem:[%s1 + $0x1478] sm:$0xff] %vm3862, %v3637
    %4519 = vst.msk [vmem:[%s1 + $0x1480] sm:$0xff] %vm3862, %v3639
    %4520 = vst.msk [vmem:[%s1 + $0x1488] sm:$0xff] %vm3862, %v3641
    %4521 = vst.msk [vmem:[%s1 + $0x1490] sm:$0xff] %vm3862, %v3643
    %4522 = vst.msk [vmem:[%s1 + $0x1498] sm:$0xff] %vm3862, %v3645
    %4523 = vst.msk [vmem:[%s1 + $0x14a0] sm:$0xff] %vm3862, %v3647
    %4524 = vst.msk [vmem:[%s1 + $0x14a8] sm:$0xff] %vm3862, %v3649
    %4525 = vst.msk [vmem:[%s1 + $0x14b0] sm:$0xff] %vm3862, %v3651
    %4526 = vst.msk [vmem:[%s1 + $0x14b8] sm:$0xff] %vm3862, %v3653
    %4527 = vst.msk [vmem:[%s1 + $0x14c0] sm:$0xff] %vm3862, %v3655
    %4528 = vst.msk [vmem:[%s1 + $0x14c8] sm:$0xff] %vm3862, %v3657
    %4529 = vst.msk [vmem:[%s1 + $0x14d0] sm:$0xff] %vm3862, %v3659
    %4530 = vst.msk [vmem:[%s1 + $0x14d8] sm:$0xff] %vm3862, %v3661
    %4531 = vst.msk [vmem:[%s1 + $0x14e0] sm:$0xff] %vm3862, %v3663
    %4532 = vst.msk [vmem:[%s1 + $0x14e8] sm:$0xff] %vm3862, %v3665
    %4533 = vst.msk [vmem:[%s1 + $0x14f0] sm:$0xff] %vm3862, %v3667
    %4534 = vst.msk [vmem:[%s1 + $0x14f8] sm:$0xff] %vm3862, %v3669
    %4535 = vst.msk [vmem:[%s1 + $0x1500] sm:$0xff] %vm3862, %v3671
    %4536 = vst.msk [vmem:[%s1 + $0x1508] sm:$0xff] %vm3862, %v3673
    %4537 = vst.msk [vmem:[%s1 + $0x1510] sm:$0xff] %vm3862, %v3675
    %4538 = vst.msk [vmem:[%s1 + $0x1518] sm:$0xff] %vm3862, %v3677
    %4539 = vst.msk [vmem:[%s1 + $0x1520] sm:$0xff] %vm3862, %v3679
    %4540 = vst.msk [vmem:[%s1 + $0x1528] sm:$0xff] %vm3862, %v3681
    %4541 = vst.msk [vmem:[%s1 + $0x1530] sm:$0xff] %vm3862, %v3683
    %4542 = vst.msk [vmem:[%s1 + $0x1538] sm:$0xff] %vm3862, %v3685
    %4543 = vst.msk [vmem:[%s1 + $0x1540] sm:$0xff] %vm3862, %v3687
    %4544 = vst.msk [vmem:[%s1 + $0x1548] sm:$0xff] %vm3862, %v3689
    %4545 = vst.msk [vmem:[%s1 + $0x1550] sm:$0xff] %vm3862, %v3691
    %4546 = vst.msk [vmem:[%s1 + $0x1558] sm:$0xff] %vm3862, %v3693
    %4547 = vst.msk [vmem:[%s1 + $0x1560] sm:$0xff] %vm3862, %v3695
    %4548 = vst.msk [vmem:[%s1 + $0x1568] sm:$0xff] %vm3862, %v3697
    %4549 = vst.msk [vmem:[%s1 + $0x1570] sm:$0xff] %vm3862, %v3699
    %4550 = vst.msk [vmem:[%s1 + $0x1578] sm:$0xff] %vm3862, %v3701
    %4551 = vst.msk [vmem:[%s1 + $0x1580] sm:$0xff] %vm3862, %v3703
    %4552 = vst.msk [vmem:[%s1 + $0x1588] sm:$0xff] %vm3862, %v3705
    %4553 = vst.msk [vmem:[%s1 + $0x1590] sm:$0xff] %vm3862, %v3707
    %4554 = vst.msk [vmem:[%s1 + $0x1598] sm:$0xff] %vm3862, %v3709
    %4555 = vst.msk [vmem:[%s1 + $0x15a0] sm:$0xff] %vm3862, %v3711
    %4556 = vst.msk [vmem:[%s1 + $0x15a8] sm:$0xff] %vm3862, %v3713
    %4557 = vst.msk [vmem:[%s1 + $0x15b0] sm:$0xff] %vm3862, %v3715
    %4558 = vst.msk [vmem:[%s1 + $0x15b8] sm:$0xff] %vm3862, %v3717
    %4559 = vst.msk [vmem:[%s1 + $0x15c0] sm:$0xff] %vm3862, %v3719
    %4560 = vst.msk [vmem:[%s1 + $0x15c8] sm:$0xff] %vm3862, %v3721
    %4561 = vst.msk [vmem:[%s1 + $0x15d0] sm:$0xff] %vm3862, %v3723
    %4562 = vst.msk [vmem:[%s1 + $0x15d8] sm:$0xff] %vm3862, %v3725
    %4563 = vst.msk [vmem:[%s1 + $0x15e0] sm:$0xff] %vm3862, %v3727
    %4564 = vst.msk [vmem:[%s1 + $0x15e8] sm:$0xff] %vm3862, %v3729
    %4565 = vst.msk [vmem:[%s1 + $0x15f0] sm:$0xff] %vm3862, %v3731
    %4566 = vst.msk [vmem:[%s1 + $0x15f8] sm:$0xff] %vm3862, %v3733
    %4567 = vst.msk [vmem:[%s1 + $0x1600] sm:$0xff] %vm3862, %v3735
    %4568 = vst.msk [vmem:[%s1 + $0x1608] sm:$0xff] %vm3862, %v3737
    %4569 = vst.msk [vmem:[%s1 + $0x1610] sm:$0xff] %vm3862, %v3739
    %4570 = vst.msk [vmem:[%s1 + $0x1618] sm:$0xff] %vm3862, %v3741
    %4571 = vst.msk [vmem:[%s1 + $0x1620] sm:$0xff] %vm3862, %v3743
    %4572 = vst.msk [vmem:[%s1 + $0x1628] sm:$0xff] %vm3862, %v3745
    %4573 = vst.msk [vmem:[%s1 + $0x1630] sm:$0xff] %vm3862, %v3747
    %4574 = vst.msk [vmem:[%s1 + $0x1638] sm:$0xff] %vm3862, %v3749
    %4575 = vst.msk [vmem:[%s1 + $0x1640] sm:$0xff] %vm3862, %v3751
    %4576 = vst.msk [vmem:[%s1 + $0x1648] sm:$0xff] %vm3862, %v3753
    %4577 = vst.msk [vmem:[%s1 + $0x1650] sm:$0xff] %vm3862, %v3755
    %4578 = vst.msk [vmem:[%s1 + $0x1658] sm:$0xff] %vm3862, %v3757
    %4579 = vst.msk [vmem:[%s1 + $0x1660] sm:$0xff] %vm3862, %v3759
    %4580 = vst.msk [vmem:[%s1 + $0x1668] sm:$0xff] %vm3862, %v3761
    %4581 = vst.msk [vmem:[%s1 + $0x1670] sm:$0xff] %vm3862, %v3763
    %4582 = vst.msk [vmem:[%s1 + $0x1678] sm:$0xff] %vm3862, %v3765
    %4583 = vst.msk [vmem:[%s1 + $0x1680] sm:$0xff] %vm3862, %v3767
    %4584 = vst.msk [vmem:[%s1 + $0x1688] sm:$0xff] %vm3862, %v3769
    %4585 = vst.msk [vmem:[%s1 + $0x1690] sm:$0xff] %vm3862, %v3771
    %4586 = vst.msk [vmem:[%s1 + $0x1698] sm:$0xff] %vm3862, %v3773
    %4587 = vst.msk [vmem:[%s1 + $0x16a0] sm:$0xff] %vm3862, %v3775
    %4588 = vst.msk [vmem:[%s1 + $0x16a8] sm:$0xff] %vm3862, %v3777
    %4589 = vst.msk [vmem:[%s1 + $0x16b0] sm:$0xff] %vm3862, %v3779
    %4590 = vst.msk [vmem:[%s1 + $0x16b8] sm:$0xff] %vm3862, %v3781
    %4591 = vst.msk [vmem:[%s1 + $0x16c0] sm:$0xff] %vm3862, %v3783
    %4592 = vst.msk [vmem:[%s1 + $0x16c8] sm:$0xff] %vm3862, %v3785
    %4593 = vst.msk [vmem:[%s1 + $0x16d0] sm:$0xff] %vm3862, %v3787
    %4594 = vst.msk [vmem:[%s1 + $0x16d8] sm:$0xff] %vm3862, %v3789
    %4595 = vst.msk [vmem:[%s1 + $0x16e0] sm:$0xff] %vm3862, %v3791
    %4596 = vst.msk [vmem:[%s1 + $0x16e8] sm:$0xff] %vm3862, %v3793
    %4597 = vst.msk [vmem:[%s1 + $0x16f0] sm:$0xff] %vm3862, %v3795
    %4598 = vst.msk [vmem:[%s1 + $0x16f8] sm:$0xff] %vm3862, %v3797
    %4599 = vst.msk [vmem:[%s1 + $0x1700] sm:$0xff] %vm3862, %v3799
    %4600 = vst.msk [vmem:[%s1 + $0x1708] sm:$0xff] %vm3862, %v3801
    %4601 = vst.msk [vmem:[%s1 + $0x1710] sm:$0xff] %vm3862, %v3803
    %4602 = vst.msk [vmem:[%s1 + $0x1718] sm:$0xff] %vm3862, %v3805
    %4603 = vst.msk [vmem:[%s1 + $0x1720] sm:$0xff] %vm3862, %v3807
    %4604 = vst.msk [vmem:[%s1 + $0x1728] sm:$0xff] %vm3862, %v3809
    %4605 = vst.msk [vmem:[%s1 + $0x1730] sm:$0xff] %vm3862, %v3811
    %4606 = vst.msk [vmem:[%s1 + $0x1738] sm:$0xff] %vm3862, %v3813
    %4607 = vst.msk [vmem:[%s1 + $0x1740] sm:$0xff] %vm3862, %v3815
    %4608 = vst.msk [vmem:[%s1 + $0x1748] sm:$0xff] %vm3862, %v3817
    %4609 = vst.msk [vmem:[%s1 + $0x1750] sm:$0xff] %vm3862, %v3819
    %4610 = vst.msk [vmem:[%s1 + $0x1758] sm:$0xff] %vm3862, %v3821
    %4611 = vst.msk [vmem:[%s1 + $0x1760] sm:$0xff] %vm3862, %v3823
    %4612 = vst.msk [vmem:[%s1 + $0x1768] sm:$0xff] %vm3862, %v3825
    %4613 = vst.msk [vmem:[%s1 + $0x1770] sm:$0xff] %vm3862, %v3827
    %4614 = vst.msk [vmem:[%s1 + $0x1778] sm:$0xff] %vm3862, %v3829
    %4615 = vst.msk [vmem:[%s1 + $0x1780] sm:$0xff] %vm3862, %v3831
    %4616 = vst.msk [vmem:[%s1 + $0x1788] sm:$0xff] %vm3862, %v3833
    %4617 = vst.msk [vmem:[%s1 + $0x1790] sm:$0xff] %vm3862, %v3835
    %4618 = vst.msk [vmem:[%s1 + $0x1798] sm:$0xff] %vm3862, %v3837
    %4619 = vst.msk [vmem:[%s1 + $0x17a0] sm:$0xff] %vm3862, %v3839
    %4620 = vst.msk [vmem:[%s1 + $0x17a8] sm:$0xff] %vm3862, %v3841
    %4621 = vst.msk [vmem:[%s1 + $0x17b0] sm:$0xff] %vm3862, %v3843
    %4622 = vst.msk [vmem:[%s1 + $0x17b8] sm:$0xff] %vm3862, %v3845
    %4623 = vst.msk [vmem:[%s1 + $0x17c0] sm:$0xff] %vm3862, %v3847
    %4624 = vst.msk [vmem:[%s1 + $0x17c8] sm:$0xff] %vm3862, %v3849
    %4625 = vst.msk [vmem:[%s1 + $0x17d0] sm:$0xff] %vm3862, %v3851
    %4626 = vst.msk [vmem:[%s1 + $0x17d8] sm:$0xff] %vm3862, %v3853
    %4627 = vst.msk [vmem:[%s1 + $0x17e0] sm:$0xff] %vm3862, %v3855
    %4628 = vst.msk [vmem:[%s1 + $0x17e8] sm:$0xff] %vm3862, %v3857
    %4629 = vst.msk [vmem:[%s1 + $0x17f0] sm:$0xff] %vm3862, %v3859
    %4630 = vst.msk [vmem:[%s1 + $0x17f8] sm:$0xff] %vm3862, %v3861
    // Predicated region
    $region10: #{tpu_custom_call.1} parent=1 // pred_check
      _
    $region11: #{tpu_custom_call.1} parent=1 // pred_check_branch
      %4632 = sbr.rel (0) target = $region13
    $region12: #{tpu_custom_call.1} parent=1 // pred_region
      _
    $region13: #{tpu_custom_call.1} parent=1 // pred_fallthru
      _
    // Predicated region
    $region14: #{tpu_custom_call.1} parent=1 // pred_check
      _
    $region15: #{tpu_custom_call.1} parent=1 // pred_check_branch
      %4634 = sbr.rel (0) target = $region17
    $region16: #{tpu_custom_call.1} parent=1 // pred_region
      _
    $region17: #{tpu_custom_call.1} parent=1 // pred_fallthru
      _
    %4635 = vsyncpa [#allocation3], 1

</llo_original>
